<compile_context>
chip_gen: v7x
topology: tpu7x:2x2x1
jax: 0.10.0
libtpu: 0.0.40
codegen_flags: <defaults>
</compile_context>

<pallas_src>
import functools

import jax
import jax.numpy as jnp
from jax.experimental import pallas as pl
from jax.experimental.pallas import tpu as pltpu

# ----------------------------- model config ---------------------------------
C_IN = 4          # input channels
L_IN = 32         # input sequence length
DIMS = (32, 64)   # stage widths  (small "convnext_tiny1" stand-in)
DEPTHS = (1, 1)   # blocks per stage
K_DW = 7          # depthwise conv kernel
STEM_K = 4        # stem patch size / stride
EPS = 1e-6        # ConvNeXt LayerNorm eps
LS_INIT = 1e-6    # ConvNeXt layer_scale_init_value


# ------------------------------ in-kernel math --------------------------------
def _ln(x, g, b):
    """LayerNorm over the channel (last) axis, eps=1e-6 (ConvNeXt channels_first LN)."""
    mu = jnp.mean(x, axis=-1, keepdims=True)
    var = jnp.mean((x - mu) * (x - mu), axis=-1, keepdims=True)
    return (x - mu) * jax.lax.rsqrt(var + EPS) * g + b


def _erf(x):
    # Abramowitz & Stegun 7.1.26 rational approximation, |abs err| < 1.5e-7.
    # Uses only abs/exp/mul/add/where so it lowers on all Pallas TPU backends.
    t = 1.0 / (1.0 + 0.3275911 * jnp.abs(x))
    poly = t * (0.254829592 + t * (-0.284496736 + t * (1.421413741
               + t * (-1.453152027 + t * 1.061405429))))
    y = 1.0 - poly * jnp.exp(-x * x)
    return jnp.where(x >= 0.0, y, -y)


def _gelu(x):
    # PyTorch nn.GELU() default is the exact erf form (not the tanh approximation).
    return 0.5 * x * (1.0 + _erf(x * 0.7071067811865476))


def _shift_matrix(R, L, off):
    """(R, R) 0/1 matrix: out_row r <- in_row r+off, restricted to the same length-L
    batch segment (implements the zero-padded depthwise-conv boundary)."""
    assert L & (L - 1) == 0, "per-batch length must be a power of two"
    rr = jax.lax.broadcasted_iota(jnp.int32, (R, R), 0)
    cc = jax.lax.broadcasted_iota(jnp.int32, (R, R), 1)
    lsrc = jnp.bitwise_and(rr, L - 1) + off            # within-batch source position
    sel = (cc == rr + off) & (lsrc >= 0) & (lsrc < L)
    return jnp.where(sel, 1.0, 0.0)


def _stride2_select(R_out, R_in, parity):
    """(R_out, R_in) 0/1 matrix selecting rows 2*r+parity (batch-major layout keeps
    even/odd phases consistent across the folded batch because L is even)."""
    rr = jax.lax.broadcasted_iota(jnp.int32, (R_out, R_in), 0)
    cc = jax.lax.broadcasted_iota(jnp.int32, (R_out, R_in), 1)
    return jnp.where(cc == 2 * rr + parity, 1.0, 0.0)


def _convnext_block(h, R, L, dim, dww, dwb, g, bt, w1, b1, w2, b2, ls):
    """ConvNeXt block on a (R=B*L, dim) slab: dwconv -> LN -> MLP -> scale -> +res."""
    pad = (K_DW - 1) // 2
    acc = jnp.zeros((R, dim), jnp.float32)
    for k in range(K_DW):                               # depthwise conv via shift matmuls
        s = _shift_matrix(R, L, k - pad)
        acc = acc + jnp.dot(s, h, preferred_element_type=jnp.float32) * dww[k:k + 1, :]
    y = _ln(acc + dwb, g, bt)
    u = jnp.dot(y, w1, preferred_element_type=jnp.float32) + b1
    u = _gelu(u)
    v = jnp.dot(u, w2, preferred_element_type=jnp.float32) + b2
    return h + ls * v


# --------------------------------- kernel ------------------------------------
def _hscmae_kernel(*refs, B, L0):
    """Entire forward pass: stem -> stages (+downsample) -> channel mean."""
    o_ref = refs[-1]
    pos = 0

    def nxt():
        nonlocal pos
        r = refs[pos]
        pos += 1
        return r[...]

    # ---- stem: Conv1d(C_IN, dims[0], k=4, s=4) == one matmul on the patchified
    #      (B*L0, STEM_K*C_IN) input, then channels_first LayerNorm.
    xp = nxt()
    sw, sb, sg, sbt = nxt(), nxt(), nxt(), nxt()
    h = _ln(jnp.dot(xp, sw, preferred_element_type=jnp.float32) + sb, sg, sbt)

    R, L = B * L0, L0
    for si, dim in enumerate(DIMS):
        if si > 0:
            # ---- downsample: channels_first LN + Conv1d(k=2, s=2).  The stride-2
            #      phase gather is done with 0/1 selection matmuls so the batch-folded
            #      activation never leaves VMEM and needs no strided slicing.
            dg, dbt = nxt(), nxt()
            w0, w1d, bds = nxt(), nxt(), nxt()
            y = _ln(h, dg, dbt)
            R_new = R // 2
            ye = jnp.dot(_stride2_select(R_new, R, 0), y, preferred_element_type=jnp.float32)
            yo = jnp.dot(_stride2_select(R_new, R, 1), y, preferred_element_type=jnp.float32)
            h = (jnp.dot(ye, w0, preferred_element_type=jnp.float32)
                 + jnp.dot(yo, w1d, preferred_element_type=jnp.float32) + bds)
            R, L = R_new, L // 2
        for _ in range(DEPTHS[si]):
            dww, dwb = nxt(), nxt()
            g, bt = nxt(), nxt()
            w1m, b1 = nxt(), nxt()
            w2m, b2 = nxt(), nxt()
            ls = nxt()
            h = _convnext_block(h, R, L, dim, dww, dwb, g, bt, w1m, b1, w2m, b2, ls)

    # torch.mean(ls[-1], dim=1) on NCW features == mean over channels (last axis here).
    o_ref[...] = jnp.mean(h, axis=-1, keepdims=True)    # (B*L_last, 1)


# ------------------------------- top level -----------------------------------
def _full_spec(shape):
    # Every operand is 2-D and used whole (block == full array dims).
    assert len(shape) == 2
    return pl.BlockSpec(shape, lambda i: (0, 0))


def hscmae_forward(params, x_blc):
    """HSCMAE.forward(x): x is (B, L, C_in); returns torch.mean(ls[-1], dim=1)."""
    # copy_weight(sparse_encoder, denseEnc) is a no-op with a single synthetic
    # weight set (the dense encoder below *is* that weight set).
    B, L, C = x_blc.shape
    assert L % STEM_K == 0 and C == C_IN
    L0 = L // STEM_K
    L_last = L0 // (2 ** (len(DIMS) - 1))

    # Patchify for the stride-4 stem conv: a free row-major reinterpretation.
    xp = x_blc.reshape(B * L0, STEM_K * C)

    inputs = [xp, params['stem_w'], params['stem_b'],
              params['stem_ln_g'], params['stem_ln_b']]
    for si in range(len(DIMS)):
        if si > 0:
            ds = params['down'][si - 1]
            inputs += [ds['ln_g'], ds['ln_b'], ds['w0'], ds['w1'], ds['b']]
        for blk in params['stage'][si]:
            inputs += [blk['dw_w'], blk['dw_b'], blk['ln_g'], blk['ln_b'],
                       blk['w1'], blk['b1'], blk['w2'], blk['b2'], blk['ls']]

    kern = functools.partial(_hscmae_kernel, B=B, L0=L0)
    out = pl.pallas_call(
        kern,
        out_shape=jax.ShapeDtypeStruct((B * L_last, 1), jnp.float32),
        grid=(1,),
        in_specs=[_full_spec(a.shape) for a in inputs],
        out_specs=_full_spec((B * L_last, 1)),
        compiler_params=pltpu.CompilerParams(
            dimension_semantics=("arbitrary",)),
    )(*inputs)
    # Free XLA reshape of the tiny (B*L_last, 1) result back to (B, L_last).
    return out.reshape(B, L_last)


# ------------------------------ parameter init --------------------------------
def init_params(key):
    keys = iter(jax.random.split(key, 128))

    def nrm(shape, std=0.02):
        return (std * jax.random.normal(next(keys), shape)).astype(jnp.float32)

    def xavier(fan_in, fan_out):
        std = (2.0 / (fan_in + fan_out)) ** 0.5
        return nrm((fan_in, fan_out), std)

    p = {}
    # stem: torch Conv1d weight (d0, C_IN, STEM_K) stored as (STEM_K*C_IN, d0)
    # with row index k*C_IN + c  ==  transpose(w, (2, 1, 0)).reshape(-1, d0).
    d0 = DIMS[0]
    p['stem_w'] = nrm((STEM_K * C_IN, d0))
    p['stem_b'] = jnp.zeros((1, d0), jnp.float32)
    p['stem_ln_g'] = jnp.ones((1, d0), jnp.float32)
    p['stem_ln_b'] = jnp.zeros((1, d0), jnp.float32)

    p['stage'] = []
    p['down'] = []
    for si, dim in enumerate(DIMS):
        if si > 0:
            cin = DIMS[si - 1]
            # torch Conv1d(cin, dim, k=2): weight (dim, cin, 2) -> w0=w[:,:,0].T, w1=w[:,:,1].T
            p['down'].append(dict(
                ln_g=jnp.ones((1, cin), jnp.float32),
                ln_b=jnp.zeros((1, cin), jnp.float32),
                w0=nrm((cin, dim)),
                w1=nrm((cin, dim)),
                b=jnp.zeros((1, dim), jnp.float32),
            ))
        stage = []
        for _ in range(DEPTHS[si]):
            stage.append(dict(
                # depthwise torch weight (dim, 1, K) stored as (K, dim): dw_w[k,c]=w[c,0,k]
                dw_w=nrm((K_DW, dim)),
                dw_b=jnp.zeros((1, dim), jnp.float32),
                ln_g=jnp.ones((1, dim), jnp.float32),
                ln_b=jnp.zeros((1, dim), jnp.float32),
                # Linear weights stored transposed (in, out); bias 0.1 per _init_weights
                w1=xavier(dim, 4 * dim),
                b1=jnp.full((1, 4 * dim), 0.1, jnp.float32),
                w2=xavier(4 * dim, dim),
                b2=jnp.full((1, dim), 0.1, jnp.float32),
                ls=jnp.full((1, dim), LS_INIT, jnp.float32),
            ))
        p['stage'].append(stage)
    return p


if __name__ == "__main__":
    key = jax.random.PRNGKey(0)
    pkey, xkey = jax.random.split(key)
    params = init_params(pkey)
    x = jax.random.normal(xkey, (2, L_IN, C_IN), dtype=jnp.float32)  # (B, L, C_in)

    out = jax.jit(hscmae_forward)(params, x)
    out = jax.block_until_ready(out)

    expected_L = L_IN // STEM_K // (2 ** (len(DIMS) - 1))
    assert out.shape == (2, expected_L), out.shape
    assert bool(jnp.all(jnp.isfinite(out)))
    print("KERNEL_OK")
</pallas_src>

<mosaic_0001>
module attributes {stable_mosaic.version = 11 : i64} {
  func.func @_hscmae_kernel(%arg0: i32, %arg1: memref<16x16xf32, #tpu.memory_space<vmem>>, %arg2: memref<16x32xf32, #tpu.memory_space<vmem>>, %arg3: memref<1x32xf32, #tpu.memory_space<vmem>>, %arg4: memref<1x32xf32, #tpu.memory_space<vmem>>, %arg5: memref<1x32xf32, #tpu.memory_space<vmem>>, %arg6: memref<7x32xf32, #tpu.memory_space<vmem>>, %arg7: memref<1x32xf32, #tpu.memory_space<vmem>>, %arg8: memref<1x32xf32, #tpu.memory_space<vmem>>, %arg9: memref<1x32xf32, #tpu.memory_space<vmem>>, %arg10: memref<32x128xf32, #tpu.memory_space<vmem>>, %arg11: memref<1x128xf32, #tpu.memory_space<vmem>>, %arg12: memref<128x32xf32, #tpu.memory_space<vmem>>, %arg13: memref<1x32xf32, #tpu.memory_space<vmem>>, %arg14: memref<1x32xf32, #tpu.memory_space<vmem>>, %arg15: memref<1x32xf32, #tpu.memory_space<vmem>>, %arg16: memref<1x32xf32, #tpu.memory_space<vmem>>, %arg17: memref<32x64xf32, #tpu.memory_space<vmem>>, %arg18: memref<32x64xf32, #tpu.memory_space<vmem>>, %arg19: memref<1x64xf32, #tpu.memory_space<vmem>>, %arg20: memref<7x64xf32, #tpu.memory_space<vmem>>, %arg21: memref<1x64xf32, #tpu.memory_space<vmem>>, %arg22: memref<1x64xf32, #tpu.memory_space<vmem>>, %arg23: memref<1x64xf32, #tpu.memory_space<vmem>>, %arg24: memref<64x256xf32, #tpu.memory_space<vmem>>, %arg25: memref<1x256xf32, #tpu.memory_space<vmem>>, %arg26: memref<256x64xf32, #tpu.memory_space<vmem>>, %arg27: memref<1x64xf32, #tpu.memory_space<vmem>>, %arg28: memref<1x64xf32, #tpu.memory_space<vmem>>, %arg29: memref<8x1xf32, #tpu.memory_space<vmem>>) attributes {dimension_semantics = [#tpu.dimension_semantics<arbitrary>], iteration_bounds = array<i64: 1>, scalar_prefetch = 0 : i64, scratch_operands = 0 : i64, tpu.core_type = #tpu.core_type<tc>, window_params = [{pipeline_mode = #tpu.pipeline_mode<synchronous>, transform_indices = @transform_0, window_bounds = array<i64: 16, 16>}, {pipeline_mode = #tpu.pipeline_mode<synchronous>, transform_indices = @transform_1, window_bounds = array<i64: 16, 32>}, {pipeline_mode = #tpu.pipeline_mode<synchronous>, transform_indices = @transform_2, window_bounds = array<i64: 1, 32>}, {pipeline_mode = #tpu.pipeline_mode<synchronous>, transform_indices = @transform_3, window_bounds = array<i64: 1, 32>}, {pipeline_mode = #tpu.pipeline_mode<synchronous>, transform_indices = @transform_4, window_bounds = array<i64: 1, 32>}, {pipeline_mode = #tpu.pipeline_mode<synchronous>, transform_indices = @transform_5, window_bounds = array<i64: 7, 32>}, {pipeline_mode = #tpu.pipeline_mode<synchronous>, transform_indices = @transform_6, window_bounds = array<i64: 1, 32>}, {pipeline_mode = #tpu.pipeline_mode<synchronous>, transform_indices = @transform_7, window_bounds = array<i64: 1, 32>}, {pipeline_mode = #tpu.pipeline_mode<synchronous>, transform_indices = @transform_8, window_bounds = array<i64: 1, 32>}, {pipeline_mode = #tpu.pipeline_mode<synchronous>, transform_indices = @transform_9, window_bounds = array<i64: 32, 128>}, {pipeline_mode = #tpu.pipeline_mode<synchronous>, transform_indices = @transform_10, window_bounds = array<i64: 1, 128>}, {pipeline_mode = #tpu.pipeline_mode<synchronous>, transform_indices = @transform_11, window_bounds = array<i64: 128, 32>}, {pipeline_mode = #tpu.pipeline_mode<synchronous>, transform_indices = @transform_12, window_bounds = array<i64: 1, 32>}, {pipeline_mode = #tpu.pipeline_mode<synchronous>, transform_indices = @transform_13, window_bounds = array<i64: 1, 32>}, {pipeline_mode = #tpu.pipeline_mode<synchronous>, transform_indices = @transform_14, window_bounds = array<i64: 1, 32>}, {pipeline_mode = #tpu.pipeline_mode<synchronous>, transform_indices = @transform_15, window_bounds = array<i64: 1, 32>}, {pipeline_mode = #tpu.pipeline_mode<synchronous>, transform_indices = @transform_16, window_bounds = array<i64: 32, 64>}, {pipeline_mode = #tpu.pipeline_mode<synchronous>, transform_indices = @transform_17, window_bounds = array<i64: 32, 64>}, {pipeline_mode = #tpu.pipeline_mode<synchronous>, transform_indices = @transform_18, window_bounds = array<i64: 1, 64>}, {pipeline_mode = #tpu.pipeline_mode<synchronous>, transform_indices = @transform_19, window_bounds = array<i64: 7, 64>}, {pipeline_mode = #tpu.pipeline_mode<synchronous>, transform_indices = @transform_20, window_bounds = array<i64: 1, 64>}, {pipeline_mode = #tpu.pipeline_mode<synchronous>, transform_indices = @transform_21, window_bounds = array<i64: 1, 64>}, {pipeline_mode = #tpu.pipeline_mode<synchronous>, transform_indices = @transform_22, window_bounds = array<i64: 1, 64>}, {pipeline_mode = #tpu.pipeline_mode<synchronous>, transform_indices = @transform_23, window_bounds = array<i64: 64, 256>}, {pipeline_mode = #tpu.pipeline_mode<synchronous>, transform_indices = @transform_24, window_bounds = array<i64: 1, 256>}, {pipeline_mode = #tpu.pipeline_mode<synchronous>, transform_indices = @transform_25, window_bounds = array<i64: 256, 64>}, {pipeline_mode = #tpu.pipeline_mode<synchronous>, transform_indices = @transform_26, window_bounds = array<i64: 1, 64>}, {pipeline_mode = #tpu.pipeline_mode<synchronous>, transform_indices = @transform_27, window_bounds = array<i64: 1, 64>}, {pipeline_mode = #tpu.pipeline_mode<synchronous>, transform_indices = @transform_28, window_bounds = array<i64: 8, 1>}]} {
    %c0 = arith.constant 0 : index
    %c0_0 = arith.constant 0 : index
    %0 = vector.load %arg1[%c0, %c0_0] : memref<16x16xf32, #tpu.memory_space<vmem>>, vector<16x16xf32>
    %c0_1 = arith.constant 0 : index
    %c0_2 = arith.constant 0 : index
    %1 = vector.load %arg2[%c0_1, %c0_2] : memref<16x32xf32, #tpu.memory_space<vmem>>, vector<16x32xf32>
    %c0_3 = arith.constant 0 : index
    %c0_4 = arith.constant 0 : index
    %2 = vector.load %arg3[%c0_3, %c0_4] : memref<1x32xf32, #tpu.memory_space<vmem>>, vector<1x32xf32>
    %c0_5 = arith.constant 0 : index
    %c0_6 = arith.constant 0 : index
    %3 = vector.load %arg4[%c0_5, %c0_6] : memref<1x32xf32, #tpu.memory_space<vmem>>, vector<1x32xf32>
    %c0_7 = arith.constant 0 : index
    %c0_8 = arith.constant 0 : index
    %4 = vector.load %arg5[%c0_7, %c0_8] : memref<1x32xf32, #tpu.memory_space<vmem>>, vector<1x32xf32>
    %cst = arith.constant dense<0.000000e+00> : vector<16x32xf32>
    %5 = tpu.matmul %0, %1, %cst {dimension_numbers = #tpu.dot_dimension_numbers<[1], [0], [0], [1], [0, 0, 1, 1], [], []>} : vector<16x16xf32>, vector<16x32xf32>, vector<16x32xf32> -> vector<16x32xf32>
    %6 = vector.broadcast %2 : vector<1x32xf32> to vector<16x32xf32>
    %7 = arith.addf %5, %6 : vector<16x32xf32>
    %cst_9 = arith.constant dense<0.000000e+00> : vector<16xf32>
    %8 = vector.multi_reduction <add>, %7, %cst_9 [1] : vector<16x32xf32> to vector<16xf32>
    %9 = vector.shape_cast %8 : vector<16xf32> to vector<16x1xf32>
    %cst_10 = arith.constant 3.200000e+01 : f32
    %10 = vector.broadcast %cst_10 : f32 to vector<16x1xf32>
    %11 = arith.divf %9, %10 : vector<16x1xf32>
    %12 = vector.broadcast %11 : vector<16x1xf32> to vector<16x32xf32>
    %13 = arith.subf %7, %12 : vector<16x32xf32>
    %14 = vector.broadcast %11 : vector<16x1xf32> to vector<16x32xf32>
    %15 = arith.subf %7, %14 : vector<16x32xf32>
    %16 = arith.mulf %13, %15 : vector<16x32xf32>
    %cst_11 = arith.constant dense<0.000000e+00> : vector<16xf32>
    %17 = vector.multi_reduction <add>, %16, %cst_11 [1] : vector<16x32xf32> to vector<16xf32>
    %18 = vector.shape_cast %17 : vector<16xf32> to vector<16x1xf32>
    %cst_12 = arith.constant 3.200000e+01 : f32
    %19 = vector.broadcast %cst_12 : f32 to vector<16x1xf32>
    %20 = arith.divf %18, %19 : vector<16x1xf32>
    %21 = vector.broadcast %11 : vector<16x1xf32> to vector<16x32xf32>
    %22 = arith.subf %7, %21 : vector<16x32xf32>
    %cst_13 = arith.constant 9.99999997E-7 : f32
    %23 = vector.broadcast %cst_13 : f32 to vector<16x1xf32>
    %24 = arith.addf %20, %23 : vector<16x1xf32>
    %25 = math.rsqrt %24 : vector<16x1xf32>
    %26 = vector.broadcast %25 : vector<16x1xf32> to vector<16x32xf32>
    %27 = arith.mulf %22, %26 : vector<16x32xf32>
    %28 = vector.broadcast %3 : vector<1x32xf32> to vector<16x32xf32>
    %29 = arith.mulf %27, %28 : vector<16x32xf32>
    %30 = vector.broadcast %4 : vector<1x32xf32> to vector<16x32xf32>
    %31 = arith.addf %29, %30 : vector<16x32xf32>
    %c0_14 = arith.constant 0 : index
    %c0_15 = arith.constant 0 : index
    %32 = vector.load %arg6[%c0_14, %c0_15] : memref<7x32xf32, #tpu.memory_space<vmem>>, vector<7x32xf32>
    %c0_16 = arith.constant 0 : index
    %c0_17 = arith.constant 0 : index
    %33 = vector.load %arg7[%c0_16, %c0_17] : memref<1x32xf32, #tpu.memory_space<vmem>>, vector<1x32xf32>
    %c0_18 = arith.constant 0 : index
    %c0_19 = arith.constant 0 : index
    %34 = vector.load %arg8[%c0_18, %c0_19] : memref<1x32xf32, #tpu.memory_space<vmem>>, vector<1x32xf32>
    %c0_20 = arith.constant 0 : index
    %c0_21 = arith.constant 0 : index
    %35 = vector.load %arg9[%c0_20, %c0_21] : memref<1x32xf32, #tpu.memory_space<vmem>>, vector<1x32xf32>
    %c0_22 = arith.constant 0 : index
    %c0_23 = arith.constant 0 : index
    %36 = vector.load %arg10[%c0_22, %c0_23] : memref<32x128xf32, #tpu.memory_space<vmem>>, vector<32x128xf32>
    %c0_24 = arith.constant 0 : index
    %c0_25 = arith.constant 0 : index
    %37 = vector.load %arg11[%c0_24, %c0_25] : memref<1x128xf32, #tpu.memory_space<vmem>>, vector<1x128xf32>
    %c0_26 = arith.constant 0 : index
    %c0_27 = arith.constant 0 : index
    %38 = vector.load %arg12[%c0_26, %c0_27] : memref<128x32xf32, #tpu.memory_space<vmem>>, vector<128x32xf32>
    %c0_28 = arith.constant 0 : index
    %c0_29 = arith.constant 0 : index
    %39 = vector.load %arg13[%c0_28, %c0_29] : memref<1x32xf32, #tpu.memory_space<vmem>>, vector<1x32xf32>
    %c0_30 = arith.constant 0 : index
    %c0_31 = arith.constant 0 : index
    %40 = vector.load %arg14[%c0_30, %c0_31] : memref<1x32xf32, #tpu.memory_space<vmem>>, vector<1x32xf32>
    %cst_32 = arith.constant 0.000000e+00 : f32
    %41 = vector.broadcast %cst_32 : f32 to vector<16x32xf32>
    %42 = tpu.iota {dimensions = array<i32: 0>} : vector<16x16xi32>
    %43 = tpu.iota {dimensions = array<i32: 1>} : vector<16x16xi32>
    %c7_i32 = arith.constant 7 : i32
    %44 = vector.broadcast %c7_i32 : i32 to vector<16x16xi32>
    %45 = arith.andi %42, %44 : vector<16x16xi32>
    %c-3_i32 = arith.constant -3 : i32
    %46 = vector.broadcast %c-3_i32 : i32 to vector<16x16xi32>
    %47 = arith.addi %45, %46 : vector<16x16xi32>
    %c-3_i32_33 = arith.constant -3 : i32
    %48 = vector.broadcast %c-3_i32_33 : i32 to vector<16x16xi32>
    %49 = arith.addi %42, %48 : vector<16x16xi32>
    %50 = arith.cmpi eq, %43, %49 : vector<16x16xi32>
    %c0_i32 = arith.constant 0 : i32
    %51 = vector.broadcast %c0_i32 : i32 to vector<16x16xi32>
    %52 = arith.cmpi sge, %47, %51 : vector<16x16xi32>
    %53 = arith.andi %50, %52 : vector<16x16xi1>
    %c8_i32 = arith.constant 8 : i32
    %54 = vector.broadcast %c8_i32 : i32 to vector<16x16xi32>
    %55 = arith.cmpi slt, %47, %54 : vector<16x16xi32>
    %56 = arith.andi %53, %55 : vector<16x16xi1>
    %cst_34 = arith.constant 1.000000e+00 : f32
    %cst_35 = arith.constant 0.000000e+00 : f32
    %57 = vector.broadcast %cst_34 : f32 to vector<16x16xf32>
    %58 = vector.broadcast %cst_35 : f32 to vector<16x16xf32>
    %59 = arith.select %56, %57, %58 : vector<16x16xi1>, vector<16x16xf32>
    %cst_36 = arith.constant dense<0.000000e+00> : vector<16x32xf32>
    %60 = tpu.matmul %59, %31, %cst_36 {dimension_numbers = #tpu.dot_dimension_numbers<[1], [0], [0], [1], [0, 0, 1, 1], [], []>} : vector<16x16xf32>, vector<16x32xf32>, vector<16x32xf32> -> vector<16x32xf32>
    %61 = vector.extract_strided_slice %32 {offsets = [0, 0], sizes = [1, 32], strides = [1, 1]} : vector<7x32xf32> to vector<1x32xf32>
    %62 = vector.broadcast %61 : vector<1x32xf32> to vector<16x32xf32>
    %63 = arith.mulf %60, %62 : vector<16x32xf32>
    %64 = arith.addf %41, %63 : vector<16x32xf32>
    %65 = tpu.iota {dimensions = array<i32: 0>} : vector<16x16xi32>
    %66 = tpu.iota {dimensions = array<i32: 1>} : vector<16x16xi32>
    %c7_i32_37 = arith.constant 7 : i32
    %67 = vector.broadcast %c7_i32_37 : i32 to vector<16x16xi32>
    %68 = arith.andi %65, %67 : vector<16x16xi32>
    %c-2_i32 = arith.constant -2 : i32
    %69 = vector.broadcast %c-2_i32 : i32 to vector<16x16xi32>
    %70 = arith.addi %68, %69 : vector<16x16xi32>
    %c-2_i32_38 = arith.constant -2 : i32
    %71 = vector.broadcast %c-2_i32_38 : i32 to vector<16x16xi32>
    %72 = arith.addi %65, %71 : vector<16x16xi32>
    %73 = arith.cmpi eq, %66, %72 : vector<16x16xi32>
    %c0_i32_39 = arith.constant 0 : i32
    %74 = vector.broadcast %c0_i32_39 : i32 to vector<16x16xi32>
    %75 = arith.cmpi sge, %70, %74 : vector<16x16xi32>
    %76 = arith.andi %73, %75 : vector<16x16xi1>
    %c8_i32_40 = arith.constant 8 : i32
    %77 = vector.broadcast %c8_i32_40 : i32 to vector<16x16xi32>
    %78 = arith.cmpi slt, %70, %77 : vector<16x16xi32>
    %79 = arith.andi %76, %78 : vector<16x16xi1>
    %cst_41 = arith.constant 1.000000e+00 : f32
    %cst_42 = arith.constant 0.000000e+00 : f32
    %80 = vector.broadcast %cst_41 : f32 to vector<16x16xf32>
    %81 = vector.broadcast %cst_42 : f32 to vector<16x16xf32>
    %82 = arith.select %79, %80, %81 : vector<16x16xi1>, vector<16x16xf32>
    %cst_43 = arith.constant dense<0.000000e+00> : vector<16x32xf32>
    %83 = tpu.matmul %82, %31, %cst_43 {dimension_numbers = #tpu.dot_dimension_numbers<[1], [0], [0], [1], [0, 0, 1, 1], [], []>} : vector<16x16xf32>, vector<16x32xf32>, vector<16x32xf32> -> vector<16x32xf32>
    %84 = vector.extract_strided_slice %32 {offsets = [1, 0], sizes = [1, 32], strides = [1, 1]} : vector<7x32xf32> to vector<1x32xf32>
    %85 = vector.broadcast %84 : vector<1x32xf32> to vector<16x32xf32>
    %86 = arith.mulf %83, %85 : vector<16x32xf32>
    %87 = arith.addf %64, %86 : vector<16x32xf32>
    %88 = tpu.iota {dimensions = array<i32: 0>} : vector<16x16xi32>
    %89 = tpu.iota {dimensions = array<i32: 1>} : vector<16x16xi32>
    %c7_i32_44 = arith.constant 7 : i32
    %90 = vector.broadcast %c7_i32_44 : i32 to vector<16x16xi32>
    %91 = arith.andi %88, %90 : vector<16x16xi32>
    %c-1_i32 = arith.constant -1 : i32
    %92 = vector.broadcast %c-1_i32 : i32 to vector<16x16xi32>
    %93 = arith.addi %91, %92 : vector<16x16xi32>
    %c-1_i32_45 = arith.constant -1 : i32
    %94 = vector.broadcast %c-1_i32_45 : i32 to vector<16x16xi32>
    %95 = arith.addi %88, %94 : vector<16x16xi32>
    %96 = arith.cmpi eq, %89, %95 : vector<16x16xi32>
    %c0_i32_46 = arith.constant 0 : i32
    %97 = vector.broadcast %c0_i32_46 : i32 to vector<16x16xi32>
    %98 = arith.cmpi sge, %93, %97 : vector<16x16xi32>
    %99 = arith.andi %96, %98 : vector<16x16xi1>
    %c8_i32_47 = arith.constant 8 : i32
    %100 = vector.broadcast %c8_i32_47 : i32 to vector<16x16xi32>
    %101 = arith.cmpi slt, %93, %100 : vector<16x16xi32>
    %102 = arith.andi %99, %101 : vector<16x16xi1>
    %cst_48 = arith.constant 1.000000e+00 : f32
    %cst_49 = arith.constant 0.000000e+00 : f32
    %103 = vector.broadcast %cst_48 : f32 to vector<16x16xf32>
    %104 = vector.broadcast %cst_49 : f32 to vector<16x16xf32>
    %105 = arith.select %102, %103, %104 : vector<16x16xi1>, vector<16x16xf32>
    %cst_50 = arith.constant dense<0.000000e+00> : vector<16x32xf32>
    %106 = tpu.matmul %105, %31, %cst_50 {dimension_numbers = #tpu.dot_dimension_numbers<[1], [0], [0], [1], [0, 0, 1, 1], [], []>} : vector<16x16xf32>, vector<16x32xf32>, vector<16x32xf32> -> vector<16x32xf32>
    %107 = vector.extract_strided_slice %32 {offsets = [2, 0], sizes = [1, 32], strides = [1, 1]} : vector<7x32xf32> to vector<1x32xf32>
    %108 = vector.broadcast %107 : vector<1x32xf32> to vector<16x32xf32>
    %109 = arith.mulf %106, %108 : vector<16x32xf32>
    %110 = arith.addf %87, %109 : vector<16x32xf32>
    %111 = tpu.iota {dimensions = array<i32: 0>} : vector<16x16xi32>
    %112 = tpu.iota {dimensions = array<i32: 1>} : vector<16x16xi32>
    %c7_i32_51 = arith.constant 7 : i32
    %113 = vector.broadcast %c7_i32_51 : i32 to vector<16x16xi32>
    %114 = arith.andi %111, %113 : vector<16x16xi32>
    %c0_i32_52 = arith.constant 0 : i32
    %115 = vector.broadcast %c0_i32_52 : i32 to vector<16x16xi32>
    %116 = arith.addi %114, %115 : vector<16x16xi32>
    %c0_i32_53 = arith.constant 0 : i32
    %117 = vector.broadcast %c0_i32_53 : i32 to vector<16x16xi32>
    %118 = arith.addi %111, %117 : vector<16x16xi32>
    %119 = arith.cmpi eq, %112, %118 : vector<16x16xi32>
    %c0_i32_54 = arith.constant 0 : i32
    %120 = vector.broadcast %c0_i32_54 : i32 to vector<16x16xi32>
    %121 = arith.cmpi sge, %116, %120 : vector<16x16xi32>
    %122 = arith.andi %119, %121 : vector<16x16xi1>
    %c8_i32_55 = arith.constant 8 : i32
    %123 = vector.broadcast %c8_i32_55 : i32 to vector<16x16xi32>
    %124 = arith.cmpi slt, %116, %123 : vector<16x16xi32>
    %125 = arith.andi %122, %124 : vector<16x16xi1>
    %cst_56 = arith.constant 1.000000e+00 : f32
    %cst_57 = arith.constant 0.000000e+00 : f32
    %126 = vector.broadcast %cst_56 : f32 to vector<16x16xf32>
    %127 = vector.broadcast %cst_57 : f32 to vector<16x16xf32>
    %128 = arith.select %125, %126, %127 : vector<16x16xi1>, vector<16x16xf32>
    %cst_58 = arith.constant dense<0.000000e+00> : vector<16x32xf32>
    %129 = tpu.matmul %128, %31, %cst_58 {dimension_numbers = #tpu.dot_dimension_numbers<[1], [0], [0], [1], [0, 0, 1, 1], [], []>} : vector<16x16xf32>, vector<16x32xf32>, vector<16x32xf32> -> vector<16x32xf32>
    %130 = vector.extract_strided_slice %32 {offsets = [3, 0], sizes = [1, 32], strides = [1, 1]} : vector<7x32xf32> to vector<1x32xf32>
    %131 = vector.broadcast %130 : vector<1x32xf32> to vector<16x32xf32>
    %132 = arith.mulf %129, %131 : vector<16x32xf32>
    %133 = arith.addf %110, %132 : vector<16x32xf32>
    %134 = tpu.iota {dimensions = array<i32: 0>} : vector<16x16xi32>
    %135 = tpu.iota {dimensions = array<i32: 1>} : vector<16x16xi32>
    %c7_i32_59 = arith.constant 7 : i32
    %136 = vector.broadcast %c7_i32_59 : i32 to vector<16x16xi32>
    %137 = arith.andi %134, %136 : vector<16x16xi32>
    %c1_i32 = arith.constant 1 : i32
    %138 = vector.broadcast %c1_i32 : i32 to vector<16x16xi32>
    %139 = arith.addi %137, %138 : vector<16x16xi32>
    %c1_i32_60 = arith.constant 1 : i32
    %140 = vector.broadcast %c1_i32_60 : i32 to vector<16x16xi32>
    %141 = arith.addi %134, %140 : vector<16x16xi32>
    %142 = arith.cmpi eq, %135, %141 : vector<16x16xi32>
    %c0_i32_61 = arith.constant 0 : i32
    %143 = vector.broadcast %c0_i32_61 : i32 to vector<16x16xi32>
    %144 = arith.cmpi sge, %139, %143 : vector<16x16xi32>
    %145 = arith.andi %142, %144 : vector<16x16xi1>
    %c8_i32_62 = arith.constant 8 : i32
    %146 = vector.broadcast %c8_i32_62 : i32 to vector<16x16xi32>
    %147 = arith.cmpi slt, %139, %146 : vector<16x16xi32>
    %148 = arith.andi %145, %147 : vector<16x16xi1>
    %cst_63 = arith.constant 1.000000e+00 : f32
    %cst_64 = arith.constant 0.000000e+00 : f32
    %149 = vector.broadcast %cst_63 : f32 to vector<16x16xf32>
    %150 = vector.broadcast %cst_64 : f32 to vector<16x16xf32>
    %151 = arith.select %148, %149, %150 : vector<16x16xi1>, vector<16x16xf32>
    %cst_65 = arith.constant dense<0.000000e+00> : vector<16x32xf32>
    %152 = tpu.matmul %151, %31, %cst_65 {dimension_numbers = #tpu.dot_dimension_numbers<[1], [0], [0], [1], [0, 0, 1, 1], [], []>} : vector<16x16xf32>, vector<16x32xf32>, vector<16x32xf32> -> vector<16x32xf32>
    %153 = vector.extract_strided_slice %32 {offsets = [4, 0], sizes = [1, 32], strides = [1, 1]} : vector<7x32xf32> to vector<1x32xf32>
    %154 = vector.broadcast %153 : vector<1x32xf32> to vector<16x32xf32>
    %155 = arith.mulf %152, %154 : vector<16x32xf32>
    %156 = arith.addf %133, %155 : vector<16x32xf32>
    %157 = tpu.iota {dimensions = array<i32: 0>} : vector<16x16xi32>
    %158 = tpu.iota {dimensions = array<i32: 1>} : vector<16x16xi32>
    %c7_i32_66 = arith.constant 7 : i32
    %159 = vector.broadcast %c7_i32_66 : i32 to vector<16x16xi32>
    %160 = arith.andi %157, %159 : vector<16x16xi32>
    %c2_i32 = arith.constant 2 : i32
    %161 = vector.broadcast %c2_i32 : i32 to vector<16x16xi32>
    %162 = arith.addi %160, %161 : vector<16x16xi32>
    %c2_i32_67 = arith.constant 2 : i32
    %163 = vector.broadcast %c2_i32_67 : i32 to vector<16x16xi32>
    %164 = arith.addi %157, %163 : vector<16x16xi32>
    %165 = arith.cmpi eq, %158, %164 : vector<16x16xi32>
    %c0_i32_68 = arith.constant 0 : i32
    %166 = vector.broadcast %c0_i32_68 : i32 to vector<16x16xi32>
    %167 = arith.cmpi sge, %162, %166 : vector<16x16xi32>
    %168 = arith.andi %165, %167 : vector<16x16xi1>
    %c8_i32_69 = arith.constant 8 : i32
    %169 = vector.broadcast %c8_i32_69 : i32 to vector<16x16xi32>
    %170 = arith.cmpi slt, %162, %169 : vector<16x16xi32>
    %171 = arith.andi %168, %170 : vector<16x16xi1>
    %cst_70 = arith.constant 1.000000e+00 : f32
    %cst_71 = arith.constant 0.000000e+00 : f32
    %172 = vector.broadcast %cst_70 : f32 to vector<16x16xf32>
    %173 = vector.broadcast %cst_71 : f32 to vector<16x16xf32>
    %174 = arith.select %171, %172, %173 : vector<16x16xi1>, vector<16x16xf32>
    %cst_72 = arith.constant dense<0.000000e+00> : vector<16x32xf32>
    %175 = tpu.matmul %174, %31, %cst_72 {dimension_numbers = #tpu.dot_dimension_numbers<[1], [0], [0], [1], [0, 0, 1, 1], [], []>} : vector<16x16xf32>, vector<16x32xf32>, vector<16x32xf32> -> vector<16x32xf32>
    %176 = vector.extract_strided_slice %32 {offsets = [5, 0], sizes = [1, 32], strides = [1, 1]} : vector<7x32xf32> to vector<1x32xf32>
    %177 = vector.broadcast %176 : vector<1x32xf32> to vector<16x32xf32>
    %178 = arith.mulf %175, %177 : vector<16x32xf32>
    %179 = arith.addf %156, %178 : vector<16x32xf32>
    %180 = tpu.iota {dimensions = array<i32: 0>} : vector<16x16xi32>
    %181 = tpu.iota {dimensions = array<i32: 1>} : vector<16x16xi32>
    %c7_i32_73 = arith.constant 7 : i32
    %182 = vector.broadcast %c7_i32_73 : i32 to vector<16x16xi32>
    %183 = arith.andi %180, %182 : vector<16x16xi32>
    %c3_i32 = arith.constant 3 : i32
    %184 = vector.broadcast %c3_i32 : i32 to vector<16x16xi32>
    %185 = arith.addi %183, %184 : vector<16x16xi32>
    %c3_i32_74 = arith.constant 3 : i32
    %186 = vector.broadcast %c3_i32_74 : i32 to vector<16x16xi32>
    %187 = arith.addi %180, %186 : vector<16x16xi32>
    %188 = arith.cmpi eq, %181, %187 : vector<16x16xi32>
    %c0_i32_75 = arith.constant 0 : i32
    %189 = vector.broadcast %c0_i32_75 : i32 to vector<16x16xi32>
    %190 = arith.cmpi sge, %185, %189 : vector<16x16xi32>
    %191 = arith.andi %188, %190 : vector<16x16xi1>
    %c8_i32_76 = arith.constant 8 : i32
    %192 = vector.broadcast %c8_i32_76 : i32 to vector<16x16xi32>
    %193 = arith.cmpi slt, %185, %192 : vector<16x16xi32>
    %194 = arith.andi %191, %193 : vector<16x16xi1>
    %cst_77 = arith.constant 1.000000e+00 : f32
    %cst_78 = arith.constant 0.000000e+00 : f32
    %195 = vector.broadcast %cst_77 : f32 to vector<16x16xf32>
    %196 = vector.broadcast %cst_78 : f32 to vector<16x16xf32>
    %197 = arith.select %194, %195, %196 : vector<16x16xi1>, vector<16x16xf32>
    %cst_79 = arith.constant dense<0.000000e+00> : vector<16x32xf32>
    %198 = tpu.matmul %197, %31, %cst_79 {dimension_numbers = #tpu.dot_dimension_numbers<[1], [0], [0], [1], [0, 0, 1, 1], [], []>} : vector<16x16xf32>, vector<16x32xf32>, vector<16x32xf32> -> vector<16x32xf32>
    %199 = vector.extract_strided_slice %32 {offsets = [6, 0], sizes = [1, 32], strides = [1, 1]} : vector<7x32xf32> to vector<1x32xf32>
    %200 = vector.broadcast %199 : vector<1x32xf32> to vector<16x32xf32>
    %201 = arith.mulf %198, %200 : vector<16x32xf32>
    %202 = arith.addf %179, %201 : vector<16x32xf32>
    %203 = vector.broadcast %33 : vector<1x32xf32> to vector<16x32xf32>
    %204 = arith.addf %202, %203 : vector<16x32xf32>
    %cst_80 = arith.constant dense<0.000000e+00> : vector<16xf32>
    %205 = vector.multi_reduction <add>, %204, %cst_80 [1] : vector<16x32xf32> to vector<16xf32>
    %206 = vector.shape_cast %205 : vector<16xf32> to vector<16x1xf32>
    %cst_81 = arith.constant 3.200000e+01 : f32
    %207 = vector.broadcast %cst_81 : f32 to vector<16x1xf32>
    %208 = arith.divf %206, %207 : vector<16x1xf32>
    %209 = vector.broadcast %208 : vector<16x1xf32> to vector<16x32xf32>
    %210 = arith.subf %204, %209 : vector<16x32xf32>
    %211 = vector.broadcast %208 : vector<16x1xf32> to vector<16x32xf32>
    %212 = arith.subf %204, %211 : vector<16x32xf32>
    %213 = arith.mulf %210, %212 : vector<16x32xf32>
    %cst_82 = arith.constant dense<0.000000e+00> : vector<16xf32>
    %214 = vector.multi_reduction <add>, %213, %cst_82 [1] : vector<16x32xf32> to vector<16xf32>
    %215 = vector.shape_cast %214 : vector<16xf32> to vector<16x1xf32>
    %cst_83 = arith.constant 3.200000e+01 : f32
    %216 = vector.broadcast %cst_83 : f32 to vector<16x1xf32>
    %217 = arith.divf %215, %216 : vector<16x1xf32>
    %218 = vector.broadcast %208 : vector<16x1xf32> to vector<16x32xf32>
    %219 = arith.subf %204, %218 : vector<16x32xf32>
    %cst_84 = arith.constant 9.99999997E-7 : f32
    %220 = vector.broadcast %cst_84 : f32 to vector<16x1xf32>
    %221 = arith.addf %217, %220 : vector<16x1xf32>
    %222 = math.rsqrt %221 : vector<16x1xf32>
    %223 = vector.broadcast %222 : vector<16x1xf32> to vector<16x32xf32>
    %224 = arith.mulf %219, %223 : vector<16x32xf32>
    %225 = vector.broadcast %34 : vector<1x32xf32> to vector<16x32xf32>
    %226 = arith.mulf %224, %225 : vector<16x32xf32>
    %227 = vector.broadcast %35 : vector<1x32xf32> to vector<16x32xf32>
    %228 = arith.addf %226, %227 : vector<16x32xf32>
    %cst_85 = arith.constant dense<0.000000e+00> : vector<16x128xf32>
    %229 = tpu.matmul %228, %36, %cst_85 {dimension_numbers = #tpu.dot_dimension_numbers<[1], [0], [0], [1], [0, 0, 1, 1], [], []>} : vector<16x32xf32>, vector<32x128xf32>, vector<16x128xf32> -> vector<16x128xf32>
    %230 = vector.broadcast %37 : vector<1x128xf32> to vector<16x128xf32>
    %231 = arith.addf %229, %230 : vector<16x128xf32>
    %cst_86 = arith.constant 5.000000e-01 : f32
    %232 = vector.broadcast %cst_86 : f32 to vector<16x128xf32>
    %233 = arith.mulf %232, %231 : vector<16x128xf32>
    %cst_87 = arith.constant 0.707106769 : f32
    %234 = vector.broadcast %cst_87 : f32 to vector<16x128xf32>
    %235 = arith.mulf %231, %234 : vector<16x128xf32>
    %236 = math.absf %235 : vector<16x128xf32>
    %cst_88 = arith.constant 0.327591091 : f32
    %237 = vector.broadcast %cst_88 : f32 to vector<16x128xf32>
    %238 = arith.mulf %237, %236 : vector<16x128xf32>
    %cst_89 = arith.constant 1.000000e+00 : f32
    %239 = vector.broadcast %cst_89 : f32 to vector<16x128xf32>
    %240 = arith.addf %239, %238 : vector<16x128xf32>
    %cst_90 = arith.constant 1.000000e+00 : f32
    %241 = vector.broadcast %cst_90 : f32 to vector<16x128xf32>
    %242 = arith.divf %241, %240 : vector<16x128xf32>
    %cst_91 = arith.constant 1.06140542 : f32
    %243 = vector.broadcast %cst_91 : f32 to vector<16x128xf32>
    %244 = arith.mulf %242, %243 : vector<16x128xf32>
    %cst_92 = arith.constant -1.45315206 : f32
    %245 = vector.broadcast %cst_92 : f32 to vector<16x128xf32>
    %246 = arith.addf %245, %244 : vector<16x128xf32>
    %247 = arith.mulf %242, %246 : vector<16x128xf32>
    %cst_93 = arith.constant 1.42141378 : f32
    %248 = vector.broadcast %cst_93 : f32 to vector<16x128xf32>
    %249 = arith.addf %248, %247 : vector<16x128xf32>
    %250 = arith.mulf %242, %249 : vector<16x128xf32>
    %cst_94 = arith.constant -0.284496725 : f32
    %251 = vector.broadcast %cst_94 : f32 to vector<16x128xf32>
    %252 = arith.addf %251, %250 : vector<16x128xf32>
    %253 = arith.mulf %242, %252 : vector<16x128xf32>
    %cst_95 = arith.constant 0.254829586 : f32
    %254 = vector.broadcast %cst_95 : f32 to vector<16x128xf32>
    %255 = arith.addf %254, %253 : vector<16x128xf32>
    %256 = arith.mulf %242, %255 : vector<16x128xf32>
    %cst_96 = arith.constant 0.000000e+00 : f32
    %257 = vector.broadcast %cst_96 : f32 to vector<16x128xf32>
    %258 = arith.subf %257, %235 : vector<16x128xf32>
    %259 = arith.mulf %258, %235 : vector<16x128xf32>
    %260 = math.exp %259 : vector<16x128xf32>
    %261 = arith.mulf %256, %260 : vector<16x128xf32>
    %cst_97 = arith.constant 1.000000e+00 : f32
    %262 = vector.broadcast %cst_97 : f32 to vector<16x128xf32>
    %263 = arith.subf %262, %261 : vector<16x128xf32>
    %cst_98 = arith.constant 0.000000e+00 : f32
    %264 = vector.broadcast %cst_98 : f32 to vector<16x128xf32>
    %265 = arith.cmpf oge, %235, %264 : vector<16x128xf32>
    %cst_99 = arith.constant 0.000000e+00 : f32
    %266 = vector.broadcast %cst_99 : f32 to vector<16x128xf32>
    %267 = arith.subf %266, %263 : vector<16x128xf32>
    %268 = arith.select %265, %263, %267 : vector<16x128xi1>, vector<16x128xf32>
    %cst_100 = arith.constant 1.000000e+00 : f32
    %269 = vector.broadcast %cst_100 : f32 to vector<16x128xf32>
    %270 = arith.addf %269, %268 : vector<16x128xf32>
    %271 = arith.mulf %233, %270 : vector<16x128xf32>
    %cst_101 = arith.constant dense<0.000000e+00> : vector<16x32xf32>
    %272 = tpu.matmul %271, %38, %cst_101 {dimension_numbers = #tpu.dot_dimension_numbers<[1], [0], [0], [1], [0, 0, 1, 1], [], []>} : vector<16x128xf32>, vector<128x32xf32>, vector<16x32xf32> -> vector<16x32xf32>
    %273 = vector.broadcast %39 : vector<1x32xf32> to vector<16x32xf32>
    %274 = arith.addf %272, %273 : vector<16x32xf32>
    %275 = vector.broadcast %40 : vector<1x32xf32> to vector<16x32xf32>
    %276 = arith.mulf %275, %274 : vector<16x32xf32>
    %277 = arith.addf %31, %276 : vector<16x32xf32>
    %c0_102 = arith.constant 0 : index
    %c0_103 = arith.constant 0 : index
    %278 = vector.load %arg15[%c0_102, %c0_103] : memref<1x32xf32, #tpu.memory_space<vmem>>, vector<1x32xf32>
    %c0_104 = arith.constant 0 : index
    %c0_105 = arith.constant 0 : index
    %279 = vector.load %arg16[%c0_104, %c0_105] : memref<1x32xf32, #tpu.memory_space<vmem>>, vector<1x32xf32>
    %c0_106 = arith.constant 0 : index
    %c0_107 = arith.constant 0 : index
    %280 = vector.load %arg17[%c0_106, %c0_107] : memref<32x64xf32, #tpu.memory_space<vmem>>, vector<32x64xf32>
    %c0_108 = arith.constant 0 : index
    %c0_109 = arith.constant 0 : index
    %281 = vector.load %arg18[%c0_108, %c0_109] : memref<32x64xf32, #tpu.memory_space<vmem>>, vector<32x64xf32>
    %c0_110 = arith.constant 0 : index
    %c0_111 = arith.constant 0 : index
    %282 = vector.load %arg19[%c0_110, %c0_111] : memref<1x64xf32, #tpu.memory_space<vmem>>, vector<1x64xf32>
    %cst_112 = arith.constant dense<0.000000e+00> : vector<16xf32>
    %283 = vector.multi_reduction <add>, %277, %cst_112 [1] : vector<16x32xf32> to vector<16xf32>
    %284 = vector.shape_cast %283 : vector<16xf32> to vector<16x1xf32>
    %cst_113 = arith.constant 3.200000e+01 : f32
    %285 = vector.broadcast %cst_113 : f32 to vector<16x1xf32>
    %286 = arith.divf %284, %285 : vector<16x1xf32>
    %287 = vector.broadcast %286 : vector<16x1xf32> to vector<16x32xf32>
    %288 = arith.subf %277, %287 : vector<16x32xf32>
    %289 = vector.broadcast %286 : vector<16x1xf32> to vector<16x32xf32>
    %290 = arith.subf %277, %289 : vector<16x32xf32>
    %291 = arith.mulf %288, %290 : vector<16x32xf32>
    %cst_114 = arith.constant dense<0.000000e+00> : vector<16xf32>
    %292 = vector.multi_reduction <add>, %291, %cst_114 [1] : vector<16x32xf32> to vector<16xf32>
    %293 = vector.shape_cast %292 : vector<16xf32> to vector<16x1xf32>
    %cst_115 = arith.constant 3.200000e+01 : f32
    %294 = vector.broadcast %cst_115 : f32 to vector<16x1xf32>
    %295 = arith.divf %293, %294 : vector<16x1xf32>
    %296 = vector.broadcast %286 : vector<16x1xf32> to vector<16x32xf32>
    %297 = arith.subf %277, %296 : vector<16x32xf32>
    %cst_116 = arith.constant 9.99999997E-7 : f32
    %298 = vector.broadcast %cst_116 : f32 to vector<16x1xf32>
    %299 = arith.addf %295, %298 : vector<16x1xf32>
    %300 = math.rsqrt %299 : vector<16x1xf32>
    %301 = vector.broadcast %300 : vector<16x1xf32> to vector<16x32xf32>
    %302 = arith.mulf %297, %301 : vector<16x32xf32>
    %303 = vector.broadcast %278 : vector<1x32xf32> to vector<16x32xf32>
    %304 = arith.mulf %302, %303 : vector<16x32xf32>
    %305 = vector.broadcast %279 : vector<1x32xf32> to vector<16x32xf32>
    %306 = arith.addf %304, %305 : vector<16x32xf32>
    %307 = tpu.iota {dimensions = array<i32: 0>} : vector<8x16xi32>
    %308 = tpu.iota {dimensions = array<i32: 1>} : vector<8x16xi32>
    %c2_i32_117 = arith.constant 2 : i32
    %309 = vector.broadcast %c2_i32_117 : i32 to vector<8x16xi32>
    %310 = arith.muli %309, %307 : vector<8x16xi32>
    %c0_i32_118 = arith.constant 0 : i32
    %311 = vector.broadcast %c0_i32_118 : i32 to vector<8x16xi32>
    %312 = arith.addi %310, %311 : vector<8x16xi32>
    %313 = arith.cmpi eq, %308, %312 : vector<8x16xi32>
    %cst_119 = arith.constant 1.000000e+00 : f32
    %cst_120 = arith.constant 0.000000e+00 : f32
    %314 = vector.broadcast %cst_119 : f32 to vector<8x16xf32>
    %315 = vector.broadcast %cst_120 : f32 to vector<8x16xf32>
    %316 = arith.select %313, %314, %315 : vector<8x16xi1>, vector<8x16xf32>
    %cst_121 = arith.constant dense<0.000000e+00> : vector<8x32xf32>
    %317 = tpu.matmul %316, %306, %cst_121 {dimension_numbers = #tpu.dot_dimension_numbers<[1], [0], [0], [1], [0, 0, 1, 1], [], []>} : vector<8x16xf32>, vector<16x32xf32>, vector<8x32xf32> -> vector<8x32xf32>
    %318 = tpu.iota {dimensions = array<i32: 0>} : vector<8x16xi32>
    %319 = tpu.iota {dimensions = array<i32: 1>} : vector<8x16xi32>
    %c2_i32_122 = arith.constant 2 : i32
    %320 = vector.broadcast %c2_i32_122 : i32 to vector<8x16xi32>
    %321 = arith.muli %320, %318 : vector<8x16xi32>
    %c1_i32_123 = arith.constant 1 : i32
    %322 = vector.broadcast %c1_i32_123 : i32 to vector<8x16xi32>
    %323 = arith.addi %321, %322 : vector<8x16xi32>
    %324 = arith.cmpi eq, %319, %323 : vector<8x16xi32>
    %cst_124 = arith.constant 1.000000e+00 : f32
    %cst_125 = arith.constant 0.000000e+00 : f32
    %325 = vector.broadcast %cst_124 : f32 to vector<8x16xf32>
    %326 = vector.broadcast %cst_125 : f32 to vector<8x16xf32>
    %327 = arith.select %324, %325, %326 : vector<8x16xi1>, vector<8x16xf32>
    %cst_126 = arith.constant dense<0.000000e+00> : vector<8x32xf32>
    %328 = tpu.matmul %327, %306, %cst_126 {dimension_numbers = #tpu.dot_dimension_numbers<[1], [0], [0], [1], [0, 0, 1, 1], [], []>} : vector<8x16xf32>, vector<16x32xf32>, vector<8x32xf32> -> vector<8x32xf32>
    %cst_127 = arith.constant dense<0.000000e+00> : vector<8x64xf32>
    %329 = tpu.matmul %317, %280, %cst_127 {dimension_numbers = #tpu.dot_dimension_numbers<[1], [0], [0], [1], [0, 0, 1, 1], [], []>} : vector<8x32xf32>, vector<32x64xf32>, vector<8x64xf32> -> vector<8x64xf32>
    %cst_128 = arith.constant dense<0.000000e+00> : vector<8x64xf32>
    %330 = tpu.matmul %328, %281, %cst_128 {dimension_numbers = #tpu.dot_dimension_numbers<[1], [0], [0], [1], [0, 0, 1, 1], [], []>} : vector<8x32xf32>, vector<32x64xf32>, vector<8x64xf32> -> vector<8x64xf32>
    %331 = arith.addf %329, %330 : vector<8x64xf32>
    %332 = vector.broadcast %282 : vector<1x64xf32> to vector<8x64xf32>
    %333 = arith.addf %331, %332 : vector<8x64xf32>
    %c0_129 = arith.constant 0 : index
    %c0_130 = arith.constant 0 : index
    %334 = vector.load %arg20[%c0_129, %c0_130] : memref<7x64xf32, #tpu.memory_space<vmem>>, vector<7x64xf32>
    %c0_131 = arith.constant 0 : index
    %c0_132 = arith.constant 0 : index
    %335 = vector.load %arg21[%c0_131, %c0_132] : memref<1x64xf32, #tpu.memory_space<vmem>>, vector<1x64xf32>
    %c0_133 = arith.constant 0 : index
    %c0_134 = arith.constant 0 : index
    %336 = vector.load %arg22[%c0_133, %c0_134] : memref<1x64xf32, #tpu.memory_space<vmem>>, vector<1x64xf32>
    %c0_135 = arith.constant 0 : index
    %c0_136 = arith.constant 0 : index
    %337 = vector.load %arg23[%c0_135, %c0_136] : memref<1x64xf32, #tpu.memory_space<vmem>>, vector<1x64xf32>
    %c0_137 = arith.constant 0 : index
    %c0_138 = arith.constant 0 : index
    %338 = vector.load %arg24[%c0_137, %c0_138] : memref<64x256xf32, #tpu.memory_space<vmem>>, vector<64x256xf32>
    %c0_139 = arith.constant 0 : index
    %c0_140 = arith.constant 0 : index
    %339 = vector.load %arg25[%c0_139, %c0_140] : memref<1x256xf32, #tpu.memory_space<vmem>>, vector<1x256xf32>
    %c0_141 = arith.constant 0 : index
    %c0_142 = arith.constant 0 : index
    %340 = vector.load %arg26[%c0_141, %c0_142] : memref<256x64xf32, #tpu.memory_space<vmem>>, vector<256x64xf32>
    %c0_143 = arith.constant 0 : index
    %c0_144 = arith.constant 0 : index
    %341 = vector.load %arg27[%c0_143, %c0_144] : memref<1x64xf32, #tpu.memory_space<vmem>>, vector<1x64xf32>
    %c0_145 = arith.constant 0 : index
    %c0_146 = arith.constant 0 : index
    %342 = vector.load %arg28[%c0_145, %c0_146] : memref<1x64xf32, #tpu.memory_space<vmem>>, vector<1x64xf32>
    %cst_147 = arith.constant 0.000000e+00 : f32
    %343 = vector.broadcast %cst_147 : f32 to vector<8x64xf32>
    %344 = tpu.iota {dimensions = array<i32: 0>} : vector<8x8xi32>
    %345 = tpu.iota {dimensions = array<i32: 1>} : vector<8x8xi32>
    %c3_i32_148 = arith.constant 3 : i32
    %346 = vector.broadcast %c3_i32_148 : i32 to vector<8x8xi32>
    %347 = arith.andi %344, %346 : vector<8x8xi32>
    %c-3_i32_149 = arith.constant -3 : i32
    %348 = vector.broadcast %c-3_i32_149 : i32 to vector<8x8xi32>
    %349 = arith.addi %347, %348 : vector<8x8xi32>
    %c-3_i32_150 = arith.constant -3 : i32
    %350 = vector.broadcast %c-3_i32_150 : i32 to vector<8x8xi32>
    %351 = arith.addi %344, %350 : vector<8x8xi32>
    %352 = arith.cmpi eq, %345, %351 : vector<8x8xi32>
    %c0_i32_151 = arith.constant 0 : i32
    %353 = vector.broadcast %c0_i32_151 : i32 to vector<8x8xi32>
    %354 = arith.cmpi sge, %349, %353 : vector<8x8xi32>
    %355 = arith.andi %352, %354 : vector<8x8xi1>
    %c4_i32 = arith.constant 4 : i32
    %356 = vector.broadcast %c4_i32 : i32 to vector<8x8xi32>
    %357 = arith.cmpi slt, %349, %356 : vector<8x8xi32>
    %358 = arith.andi %355, %357 : vector<8x8xi1>
    %cst_152 = arith.constant 1.000000e+00 : f32
    %cst_153 = arith.constant 0.000000e+00 : f32
    %359 = vector.broadcast %cst_152 : f32 to vector<8x8xf32>
    %360 = vector.broadcast %cst_153 : f32 to vector<8x8xf32>
    %361 = arith.select %358, %359, %360 : vector<8x8xi1>, vector<8x8xf32>
    %cst_154 = arith.constant dense<0.000000e+00> : vector<8x64xf32>
    %362 = tpu.matmul %361, %333, %cst_154 {dimension_numbers = #tpu.dot_dimension_numbers<[1], [0], [0], [1], [0, 0, 1, 1], [], []>} : vector<8x8xf32>, vector<8x64xf32>, vector<8x64xf32> -> vector<8x64xf32>
    %363 = vector.extract_strided_slice %334 {offsets = [0, 0], sizes = [1, 64], strides = [1, 1]} : vector<7x64xf32> to vector<1x64xf32>
    %364 = vector.broadcast %363 : vector<1x64xf32> to vector<8x64xf32>
    %365 = arith.mulf %362, %364 : vector<8x64xf32>
    %366 = arith.addf %343, %365 : vector<8x64xf32>
    %367 = tpu.iota {dimensions = array<i32: 0>} : vector<8x8xi32>
    %368 = tpu.iota {dimensions = array<i32: 1>} : vector<8x8xi32>
    %c3_i32_155 = arith.constant 3 : i32
    %369 = vector.broadcast %c3_i32_155 : i32 to vector<8x8xi32>
    %370 = arith.andi %367, %369 : vector<8x8xi32>
    %c-2_i32_156 = arith.constant -2 : i32
    %371 = vector.broadcast %c-2_i32_156 : i32 to vector<8x8xi32>
    %372 = arith.addi %370, %371 : vector<8x8xi32>
    %c-2_i32_157 = arith.constant -2 : i32
    %373 = vector.broadcast %c-2_i32_157 : i32 to vector<8x8xi32>
    %374 = arith.addi %367, %373 : vector<8x8xi32>
    %375 = arith.cmpi eq, %368, %374 : vector<8x8xi32>
    %c0_i32_158 = arith.constant 0 : i32
    %376 = vector.broadcast %c0_i32_158 : i32 to vector<8x8xi32>
    %377 = arith.cmpi sge, %372, %376 : vector<8x8xi32>
    %378 = arith.andi %375, %377 : vector<8x8xi1>
    %c4_i32_159 = arith.constant 4 : i32
    %379 = vector.broadcast %c4_i32_159 : i32 to vector<8x8xi32>
    %380 = arith.cmpi slt, %372, %379 : vector<8x8xi32>
    %381 = arith.andi %378, %380 : vector<8x8xi1>
    %cst_160 = arith.constant 1.000000e+00 : f32
    %cst_161 = arith.constant 0.000000e+00 : f32
    %382 = vector.broadcast %cst_160 : f32 to vector<8x8xf32>
    %383 = vector.broadcast %cst_161 : f32 to vector<8x8xf32>
    %384 = arith.select %381, %382, %383 : vector<8x8xi1>, vector<8x8xf32>
    %cst_162 = arith.constant dense<0.000000e+00> : vector<8x64xf32>
    %385 = tpu.matmul %384, %333, %cst_162 {dimension_numbers = #tpu.dot_dimension_numbers<[1], [0], [0], [1], [0, 0, 1, 1], [], []>} : vector<8x8xf32>, vector<8x64xf32>, vector<8x64xf32> -> vector<8x64xf32>
    %386 = vector.extract_strided_slice %334 {offsets = [1, 0], sizes = [1, 64], strides = [1, 1]} : vector<7x64xf32> to vector<1x64xf32>
    %387 = vector.broadcast %386 : vector<1x64xf32> to vector<8x64xf32>
    %388 = arith.mulf %385, %387 : vector<8x64xf32>
    %389 = arith.addf %366, %388 : vector<8x64xf32>
    %390 = tpu.iota {dimensions = array<i32: 0>} : vector<8x8xi32>
    %391 = tpu.iota {dimensions = array<i32: 1>} : vector<8x8xi32>
    %c3_i32_163 = arith.constant 3 : i32
    %392 = vector.broadcast %c3_i32_163 : i32 to vector<8x8xi32>
    %393 = arith.andi %390, %392 : vector<8x8xi32>
    %c-1_i32_164 = arith.constant -1 : i32
    %394 = vector.broadcast %c-1_i32_164 : i32 to vector<8x8xi32>
    %395 = arith.addi %393, %394 : vector<8x8xi32>
    %c-1_i32_165 = arith.constant -1 : i32
    %396 = vector.broadcast %c-1_i32_165 : i32 to vector<8x8xi32>
    %397 = arith.addi %390, %396 : vector<8x8xi32>
    %398 = arith.cmpi eq, %391, %397 : vector<8x8xi32>
    %c0_i32_166 = arith.constant 0 : i32
    %399 = vector.broadcast %c0_i32_166 : i32 to vector<8x8xi32>
    %400 = arith.cmpi sge, %395, %399 : vector<8x8xi32>
    %401 = arith.andi %398, %400 : vector<8x8xi1>
    %c4_i32_167 = arith.constant 4 : i32
    %402 = vector.broadcast %c4_i32_167 : i32 to vector<8x8xi32>
    %403 = arith.cmpi slt, %395, %402 : vector<8x8xi32>
    %404 = arith.andi %401, %403 : vector<8x8xi1>
    %cst_168 = arith.constant 1.000000e+00 : f32
    %cst_169 = arith.constant 0.000000e+00 : f32
    %405 = vector.broadcast %cst_168 : f32 to vector<8x8xf32>
    %406 = vector.broadcast %cst_169 : f32 to vector<8x8xf32>
    %407 = arith.select %404, %405, %406 : vector<8x8xi1>, vector<8x8xf32>
    %cst_170 = arith.constant dense<0.000000e+00> : vector<8x64xf32>
    %408 = tpu.matmul %407, %333, %cst_170 {dimension_numbers = #tpu.dot_dimension_numbers<[1], [0], [0], [1], [0, 0, 1, 1], [], []>} : vector<8x8xf32>, vector<8x64xf32>, vector<8x64xf32> -> vector<8x64xf32>
    %409 = vector.extract_strided_slice %334 {offsets = [2, 0], sizes = [1, 64], strides = [1, 1]} : vector<7x64xf32> to vector<1x64xf32>
    %410 = vector.broadcast %409 : vector<1x64xf32> to vector<8x64xf32>
    %411 = arith.mulf %408, %410 : vector<8x64xf32>
    %412 = arith.addf %389, %411 : vector<8x64xf32>
    %413 = tpu.iota {dimensions = array<i32: 0>} : vector<8x8xi32>
    %414 = tpu.iota {dimensions = array<i32: 1>} : vector<8x8xi32>
    %c3_i32_171 = arith.constant 3 : i32
    %415 = vector.broadcast %c3_i32_171 : i32 to vector<8x8xi32>
    %416 = arith.andi %413, %415 : vector<8x8xi32>
    %c0_i32_172 = arith.constant 0 : i32
    %417 = vector.broadcast %c0_i32_172 : i32 to vector<8x8xi32>
    %418 = arith.addi %416, %417 : vector<8x8xi32>
    %c0_i32_173 = arith.constant 0 : i32
    %419 = vector.broadcast %c0_i32_173 : i32 to vector<8x8xi32>
    %420 = arith.addi %413, %419 : vector<8x8xi32>
    %421 = arith.cmpi eq, %414, %420 : vector<8x8xi32>
    %c0_i32_174 = arith.constant 0 : i32
    %422 = vector.broadcast %c0_i32_174 : i32 to vector<8x8xi32>
    %423 = arith.cmpi sge, %418, %422 : vector<8x8xi32>
    %424 = arith.andi %421, %423 : vector<8x8xi1>
    %c4_i32_175 = arith.constant 4 : i32
    %425 = vector.broadcast %c4_i32_175 : i32 to vector<8x8xi32>
    %426 = arith.cmpi slt, %418, %425 : vector<8x8xi32>
    %427 = arith.andi %424, %426 : vector<8x8xi1>
    %cst_176 = arith.constant 1.000000e+00 : f32
    %cst_177 = arith.constant 0.000000e+00 : f32
    %428 = vector.broadcast %cst_176 : f32 to vector<8x8xf32>
    %429 = vector.broadcast %cst_177 : f32 to vector<8x8xf32>
    %430 = arith.select %427, %428, %429 : vector<8x8xi1>, vector<8x8xf32>
    %cst_178 = arith.constant dense<0.000000e+00> : vector<8x64xf32>
    %431 = tpu.matmul %430, %333, %cst_178 {dimension_numbers = #tpu.dot_dimension_numbers<[1], [0], [0], [1], [0, 0, 1, 1], [], []>} : vector<8x8xf32>, vector<8x64xf32>, vector<8x64xf32> -> vector<8x64xf32>
    %432 = vector.extract_strided_slice %334 {offsets = [3, 0], sizes = [1, 64], strides = [1, 1]} : vector<7x64xf32> to vector<1x64xf32>
    %433 = vector.broadcast %432 : vector<1x64xf32> to vector<8x64xf32>
    %434 = arith.mulf %431, %433 : vector<8x64xf32>
    %435 = arith.addf %412, %434 : vector<8x64xf32>
    %436 = tpu.iota {dimensions = array<i32: 0>} : vector<8x8xi32>
    %437 = tpu.iota {dimensions = array<i32: 1>} : vector<8x8xi32>
    %c3_i32_179 = arith.constant 3 : i32
    %438 = vector.broadcast %c3_i32_179 : i32 to vector<8x8xi32>
    %439 = arith.andi %436, %438 : vector<8x8xi32>
    %c1_i32_180 = arith.constant 1 : i32
    %440 = vector.broadcast %c1_i32_180 : i32 to vector<8x8xi32>
    %441 = arith.addi %439, %440 : vector<8x8xi32>
    %c1_i32_181 = arith.constant 1 : i32
    %442 = vector.broadcast %c1_i32_181 : i32 to vector<8x8xi32>
    %443 = arith.addi %436, %442 : vector<8x8xi32>
    %444 = arith.cmpi eq, %437, %443 : vector<8x8xi32>
    %c0_i32_182 = arith.constant 0 : i32
    %445 = vector.broadcast %c0_i32_182 : i32 to vector<8x8xi32>
    %446 = arith.cmpi sge, %441, %445 : vector<8x8xi32>
    %447 = arith.andi %444, %446 : vector<8x8xi1>
    %c4_i32_183 = arith.constant 4 : i32
    %448 = vector.broadcast %c4_i32_183 : i32 to vector<8x8xi32>
    %449 = arith.cmpi slt, %441, %448 : vector<8x8xi32>
    %450 = arith.andi %447, %449 : vector<8x8xi1>
    %cst_184 = arith.constant 1.000000e+00 : f32
    %cst_185 = arith.constant 0.000000e+00 : f32
    %451 = vector.broadcast %cst_184 : f32 to vector<8x8xf32>
    %452 = vector.broadcast %cst_185 : f32 to vector<8x8xf32>
    %453 = arith.select %450, %451, %452 : vector<8x8xi1>, vector<8x8xf32>
    %cst_186 = arith.constant dense<0.000000e+00> : vector<8x64xf32>
    %454 = tpu.matmul %453, %333, %cst_186 {dimension_numbers = #tpu.dot_dimension_numbers<[1], [0], [0], [1], [0, 0, 1, 1], [], []>} : vector<8x8xf32>, vector<8x64xf32>, vector<8x64xf32> -> vector<8x64xf32>
    %455 = vector.extract_strided_slice %334 {offsets = [4, 0], sizes = [1, 64], strides = [1, 1]} : vector<7x64xf32> to vector<1x64xf32>
    %456 = vector.broadcast %455 : vector<1x64xf32> to vector<8x64xf32>
    %457 = arith.mulf %454, %456 : vector<8x64xf32>
    %458 = arith.addf %435, %457 : vector<8x64xf32>
    %459 = tpu.iota {dimensions = array<i32: 0>} : vector<8x8xi32>
    %460 = tpu.iota {dimensions = array<i32: 1>} : vector<8x8xi32>
    %c3_i32_187 = arith.constant 3 : i32
    %461 = vector.broadcast %c3_i32_187 : i32 to vector<8x8xi32>
    %462 = arith.andi %459, %461 : vector<8x8xi32>
    %c2_i32_188 = arith.constant 2 : i32
    %463 = vector.broadcast %c2_i32_188 : i32 to vector<8x8xi32>
    %464 = arith.addi %462, %463 : vector<8x8xi32>
    %c2_i32_189 = arith.constant 2 : i32
    %465 = vector.broadcast %c2_i32_189 : i32 to vector<8x8xi32>
    %466 = arith.addi %459, %465 : vector<8x8xi32>
    %467 = arith.cmpi eq, %460, %466 : vector<8x8xi32>
    %c0_i32_190 = arith.constant 0 : i32
    %468 = vector.broadcast %c0_i32_190 : i32 to vector<8x8xi32>
    %469 = arith.cmpi sge, %464, %468 : vector<8x8xi32>
    %470 = arith.andi %467, %469 : vector<8x8xi1>
    %c4_i32_191 = arith.constant 4 : i32
    %471 = vector.broadcast %c4_i32_191 : i32 to vector<8x8xi32>
    %472 = arith.cmpi slt, %464, %471 : vector<8x8xi32>
    %473 = arith.andi %470, %472 : vector<8x8xi1>
    %cst_192 = arith.constant 1.000000e+00 : f32
    %cst_193 = arith.constant 0.000000e+00 : f32
    %474 = vector.broadcast %cst_192 : f32 to vector<8x8xf32>
    %475 = vector.broadcast %cst_193 : f32 to vector<8x8xf32>
    %476 = arith.select %473, %474, %475 : vector<8x8xi1>, vector<8x8xf32>
    %cst_194 = arith.constant dense<0.000000e+00> : vector<8x64xf32>
    %477 = tpu.matmul %476, %333, %cst_194 {dimension_numbers = #tpu.dot_dimension_numbers<[1], [0], [0], [1], [0, 0, 1, 1], [], []>} : vector<8x8xf32>, vector<8x64xf32>, vector<8x64xf32> -> vector<8x64xf32>
    %478 = vector.extract_strided_slice %334 {offsets = [5, 0], sizes = [1, 64], strides = [1, 1]} : vector<7x64xf32> to vector<1x64xf32>
    %479 = vector.broadcast %478 : vector<1x64xf32> to vector<8x64xf32>
    %480 = arith.mulf %477, %479 : vector<8x64xf32>
    %481 = arith.addf %458, %480 : vector<8x64xf32>
    %482 = tpu.iota {dimensions = array<i32: 0>} : vector<8x8xi32>
    %483 = tpu.iota {dimensions = array<i32: 1>} : vector<8x8xi32>
    %c3_i32_195 = arith.constant 3 : i32
    %484 = vector.broadcast %c3_i32_195 : i32 to vector<8x8xi32>
    %485 = arith.andi %482, %484 : vector<8x8xi32>
    %c3_i32_196 = arith.constant 3 : i32
    %486 = vector.broadcast %c3_i32_196 : i32 to vector<8x8xi32>
    %487 = arith.addi %485, %486 : vector<8x8xi32>
    %c3_i32_197 = arith.constant 3 : i32
    %488 = vector.broadcast %c3_i32_197 : i32 to vector<8x8xi32>
    %489 = arith.addi %482, %488 : vector<8x8xi32>
    %490 = arith.cmpi eq, %483, %489 : vector<8x8xi32>
    %c0_i32_198 = arith.constant 0 : i32
    %491 = vector.broadcast %c0_i32_198 : i32 to vector<8x8xi32>
    %492 = arith.cmpi sge, %487, %491 : vector<8x8xi32>
    %493 = arith.andi %490, %492 : vector<8x8xi1>
    %c4_i32_199 = arith.constant 4 : i32
    %494 = vector.broadcast %c4_i32_199 : i32 to vector<8x8xi32>
    %495 = arith.cmpi slt, %487, %494 : vector<8x8xi32>
    %496 = arith.andi %493, %495 : vector<8x8xi1>
    %cst_200 = arith.constant 1.000000e+00 : f32
    %cst_201 = arith.constant 0.000000e+00 : f32
    %497 = vector.broadcast %cst_200 : f32 to vector<8x8xf32>
    %498 = vector.broadcast %cst_201 : f32 to vector<8x8xf32>
    %499 = arith.select %496, %497, %498 : vector<8x8xi1>, vector<8x8xf32>
    %cst_202 = arith.constant dense<0.000000e+00> : vector<8x64xf32>
    %500 = tpu.matmul %499, %333, %cst_202 {dimension_numbers = #tpu.dot_dimension_numbers<[1], [0], [0], [1], [0, 0, 1, 1], [], []>} : vector<8x8xf32>, vector<8x64xf32>, vector<8x64xf32> -> vector<8x64xf32>
    %501 = vector.extract_strided_slice %334 {offsets = [6, 0], sizes = [1, 64], strides = [1, 1]} : vector<7x64xf32> to vector<1x64xf32>
    %502 = vector.broadcast %501 : vector<1x64xf32> to vector<8x64xf32>
    %503 = arith.mulf %500, %502 : vector<8x64xf32>
    %504 = arith.addf %481, %503 : vector<8x64xf32>
    %505 = vector.broadcast %335 : vector<1x64xf32> to vector<8x64xf32>
    %506 = arith.addf %504, %505 : vector<8x64xf32>
    %cst_203 = arith.constant dense<0.000000e+00> : vector<8xf32>
    %507 = vector.multi_reduction <add>, %506, %cst_203 [1] : vector<8x64xf32> to vector<8xf32>
    %508 = vector.shape_cast %507 : vector<8xf32> to vector<8x1xf32>
    %cst_204 = arith.constant 6.400000e+01 : f32
    %509 = vector.broadcast %cst_204 : f32 to vector<8x1xf32>
    %510 = arith.divf %508, %509 : vector<8x1xf32>
    %511 = vector.broadcast %510 : vector<8x1xf32> to vector<8x64xf32>
    %512 = arith.subf %506, %511 : vector<8x64xf32>
    %513 = vector.broadcast %510 : vector<8x1xf32> to vector<8x64xf32>
    %514 = arith.subf %506, %513 : vector<8x64xf32>
    %515 = arith.mulf %512, %514 : vector<8x64xf32>
    %cst_205 = arith.constant dense<0.000000e+00> : vector<8xf32>
    %516 = vector.multi_reduction <add>, %515, %cst_205 [1] : vector<8x64xf32> to vector<8xf32>
    %517 = vector.shape_cast %516 : vector<8xf32> to vector<8x1xf32>
    %cst_206 = arith.constant 6.400000e+01 : f32
    %518 = vector.broadcast %cst_206 : f32 to vector<8x1xf32>
    %519 = arith.divf %517, %518 : vector<8x1xf32>
    %520 = vector.broadcast %510 : vector<8x1xf32> to vector<8x64xf32>
    %521 = arith.subf %506, %520 : vector<8x64xf32>
    %cst_207 = arith.constant 9.99999997E-7 : f32
    %522 = vector.broadcast %cst_207 : f32 to vector<8x1xf32>
    %523 = arith.addf %519, %522 : vector<8x1xf32>
    %524 = math.rsqrt %523 : vector<8x1xf32>
    %525 = vector.broadcast %524 : vector<8x1xf32> to vector<8x64xf32>
    %526 = arith.mulf %521, %525 : vector<8x64xf32>
    %527 = vector.broadcast %336 : vector<1x64xf32> to vector<8x64xf32>
    %528 = arith.mulf %526, %527 : vector<8x64xf32>
    %529 = vector.broadcast %337 : vector<1x64xf32> to vector<8x64xf32>
    %530 = arith.addf %528, %529 : vector<8x64xf32>
    %cst_208 = arith.constant dense<0.000000e+00> : vector<8x256xf32>
    %531 = tpu.matmul %530, %338, %cst_208 {dimension_numbers = #tpu.dot_dimension_numbers<[1], [0], [0], [1], [0, 0, 1, 1], [], []>} : vector<8x64xf32>, vector<64x256xf32>, vector<8x256xf32> -> vector<8x256xf32>
    %532 = vector.broadcast %339 : vector<1x256xf32> to vector<8x256xf32>
    %533 = arith.addf %531, %532 : vector<8x256xf32>
    %cst_209 = arith.constant 5.000000e-01 : f32
    %534 = vector.broadcast %cst_209 : f32 to vector<8x256xf32>
    %535 = arith.mulf %534, %533 : vector<8x256xf32>
    %cst_210 = arith.constant 0.707106769 : f32
    %536 = vector.broadcast %cst_210 : f32 to vector<8x256xf32>
    %537 = arith.mulf %533, %536 : vector<8x256xf32>
    %538 = math.absf %537 : vector<8x256xf32>
    %cst_211 = arith.constant 0.327591091 : f32
    %539 = vector.broadcast %cst_211 : f32 to vector<8x256xf32>
    %540 = arith.mulf %539, %538 : vector<8x256xf32>
    %cst_212 = arith.constant 1.000000e+00 : f32
    %541 = vector.broadcast %cst_212 : f32 to vector<8x256xf32>
    %542 = arith.addf %541, %540 : vector<8x256xf32>
    %cst_213 = arith.constant 1.000000e+00 : f32
    %543 = vector.broadcast %cst_213 : f32 to vector<8x256xf32>
    %544 = arith.divf %543, %542 : vector<8x256xf32>
    %cst_214 = arith.constant 1.06140542 : f32
    %545 = vector.broadcast %cst_214 : f32 to vector<8x256xf32>
    %546 = arith.mulf %544, %545 : vector<8x256xf32>
    %cst_215 = arith.constant -1.45315206 : f32
    %547 = vector.broadcast %cst_215 : f32 to vector<8x256xf32>
    %548 = arith.addf %547, %546 : vector<8x256xf32>
    %549 = arith.mulf %544, %548 : vector<8x256xf32>
    %cst_216 = arith.constant 1.42141378 : f32
    %550 = vector.broadcast %cst_216 : f32 to vector<8x256xf32>
    %551 = arith.addf %550, %549 : vector<8x256xf32>
    %552 = arith.mulf %544, %551 : vector<8x256xf32>
    %cst_217 = arith.constant -0.284496725 : f32
    %553 = vector.broadcast %cst_217 : f32 to vector<8x256xf32>
    %554 = arith.addf %553, %552 : vector<8x256xf32>
    %555 = arith.mulf %544, %554 : vector<8x256xf32>
    %cst_218 = arith.constant 0.254829586 : f32
    %556 = vector.broadcast %cst_218 : f32 to vector<8x256xf32>
    %557 = arith.addf %556, %555 : vector<8x256xf32>
    %558 = arith.mulf %544, %557 : vector<8x256xf32>
    %cst_219 = arith.constant 0.000000e+00 : f32
    %559 = vector.broadcast %cst_219 : f32 to vector<8x256xf32>
    %560 = arith.subf %559, %537 : vector<8x256xf32>
    %561 = arith.mulf %560, %537 : vector<8x256xf32>
    %562 = math.exp %561 : vector<8x256xf32>
    %563 = arith.mulf %558, %562 : vector<8x256xf32>
    %cst_220 = arith.constant 1.000000e+00 : f32
    %564 = vector.broadcast %cst_220 : f32 to vector<8x256xf32>
    %565 = arith.subf %564, %563 : vector<8x256xf32>
    %cst_221 = arith.constant 0.000000e+00 : f32
    %566 = vector.broadcast %cst_221 : f32 to vector<8x256xf32>
    %567 = arith.cmpf oge, %537, %566 : vector<8x256xf32>
    %cst_222 = arith.constant 0.000000e+00 : f32
    %568 = vector.broadcast %cst_222 : f32 to vector<8x256xf32>
    %569 = arith.subf %568, %565 : vector<8x256xf32>
    %570 = arith.select %567, %565, %569 : vector<8x256xi1>, vector<8x256xf32>
    %cst_223 = arith.constant 1.000000e+00 : f32
    %571 = vector.broadcast %cst_223 : f32 to vector<8x256xf32>
    %572 = arith.addf %571, %570 : vector<8x256xf32>
    %573 = arith.mulf %535, %572 : vector<8x256xf32>
    %cst_224 = arith.constant dense<0.000000e+00> : vector<8x64xf32>
    %574 = tpu.matmul %573, %340, %cst_224 {dimension_numbers = #tpu.dot_dimension_numbers<[1], [0], [0], [1], [0, 0, 1, 1], [], []>} : vector<8x256xf32>, vector<256x64xf32>, vector<8x64xf32> -> vector<8x64xf32>
    %575 = vector.broadcast %341 : vector<1x64xf32> to vector<8x64xf32>
    %576 = arith.addf %574, %575 : vector<8x64xf32>
    %577 = vector.broadcast %342 : vector<1x64xf32> to vector<8x64xf32>
    %578 = arith.mulf %577, %576 : vector<8x64xf32>
    %579 = arith.addf %333, %578 : vector<8x64xf32>
    %cst_225 = arith.constant dense<0.000000e+00> : vector<8xf32>
    %580 = vector.multi_reduction <add>, %579, %cst_225 [1] : vector<8x64xf32> to vector<8xf32>
    %581 = vector.shape_cast %580 : vector<8xf32> to vector<8x1xf32>
    %cst_226 = arith.constant 6.400000e+01 : f32
    %582 = vector.broadcast %cst_226 : f32 to vector<8x1xf32>
    %583 = arith.divf %581, %582 : vector<8x1xf32>
    %c0_227 = arith.constant 0 : index
    %c0_228 = arith.constant 0 : index
    %584 = vector.load %arg29[%c0_227, %c0_228] : memref<8x1xf32, #tpu.memory_space<vmem>>, vector<8x1xf32>
    tpu.vector_store %arg29[%c0_227, %c0_228], %583 {strides = array<i32>} : memref<8x1xf32, #tpu.memory_space<vmem>>, vector<8x1xf32>,
    return
  }
  func.func @transform_0(%arg0: i32) -> (i32, i32) {
    %c0_i32 = arith.constant 0 : i32
    %c0_i32_0 = arith.constant 0 : i32
    %c0_i32_1 = arith.constant 0 : i32
    return %c0_i32, %c0_i32_0 : i32, i32
  }
  func.func @transform_1(%arg0: i32) -> (i32, i32) {
    %c0_i32 = arith.constant 0 : i32
    %c0_i32_0 = arith.constant 0 : i32
    %c0_i32_1 = arith.constant 0 : i32
    return %c0_i32, %c0_i32_0 : i32, i32
  }
  func.func @transform_2(%arg0: i32) -> (i32, i32) {
    %c0_i32 = arith.constant 0 : i32
    %c0_i32_0 = arith.constant 0 : i32
    %c0_i32_1 = arith.constant 0 : i32
    return %c0_i32, %c0_i32_0 : i32, i32
  }
  func.func @transform_3(%arg0: i32) -> (i32, i32) {
    %c0_i32 = arith.constant 0 : i32
    %c0_i32_0 = arith.constant 0 : i32
    %c0_i32_1 = arith.constant 0 : i32
    return %c0_i32, %c0_i32_0 : i32, i32
  }
  func.func @transform_4(%arg0: i32) -> (i32, i32) {
    %c0_i32 = arith.constant 0 : i32
    %c0_i32_0 = arith.constant 0 : i32
    %c0_i32_1 = arith.constant 0 : i32
    return %c0_i32, %c0_i32_0 : i32, i32
  }
  func.func @transform_5(%arg0: i32) -> (i32, i32) {
    %c0_i32 = arith.constant 0 : i32
    %c0_i32_0 = arith.constant 0 : i32
    %c0_i32_1 = arith.constant 0 : i32
    return %c0_i32, %c0_i32_0 : i32, i32
  }
  func.func @transform_6(%arg0: i32) -> (i32, i32) {
    %c0_i32 = arith.constant 0 : i32
    %c0_i32_0 = arith.constant 0 : i32
    %c0_i32_1 = arith.constant 0 : i32
    return %c0_i32, %c0_i32_0 : i32, i32
  }
  func.func @transform_7(%arg0: i32) -> (i32, i32) {
    %c0_i32 = arith.constant 0 : i32
    %c0_i32_0 = arith.constant 0 : i32
    %c0_i32_1 = arith.constant 0 : i32
    return %c0_i32, %c0_i32_0 : i32, i32
  }
  func.func @transform_8(%arg0: i32) -> (i32, i32) {
    %c0_i32 = arith.constant 0 : i32
    %c0_i32_0 = arith.constant 0 : i32
    %c0_i32_1 = arith.constant 0 : i32
    return %c0_i32, %c0_i32_0 : i32, i32
  }
  func.func @transform_9(%arg0: i32) -> (i32, i32) {
    %c0_i32 = arith.constant 0 : i32
    %c0_i32_0 = arith.constant 0 : i32
    %c0_i32_1 = arith.constant 0 : i32
    return %c0_i32, %c0_i32_0 : i32, i32
  }
  func.func @transform_10(%arg0: i32) -> (i32, i32) {
    %c0_i32 = arith.constant 0 : i32
    %c0_i32_0 = arith.constant 0 : i32
    %c0_i32_1 = arith.constant 0 : i32
    return %c0_i32, %c0_i32_0 : i32, i32
  }
  func.func @transform_11(%arg0: i32) -> (i32, i32) {
    %c0_i32 = arith.constant 0 : i32
    %c0_i32_0 = arith.constant 0 : i32
    %c0_i32_1 = arith.constant 0 : i32
    return %c0_i32, %c0_i32_0 : i32, i32
  }
  func.func @transform_12(%arg0: i32) -> (i32, i32) {
    %c0_i32 = arith.constant 0 : i32
    %c0_i32_0 = arith.constant 0 : i32
    %c0_i32_1 = arith.constant 0 : i32
    return %c0_i32, %c0_i32_0 : i32, i32
  }
  func.func @transform_13(%arg0: i32) -> (i32, i32) {
    %c0_i32 = arith.constant 0 : i32
    %c0_i32_0 = arith.constant 0 : i32
    %c0_i32_1 = arith.constant 0 : i32
    return %c0_i32, %c0_i32_0 : i32, i32
  }
  func.func @transform_14(%arg0: i32) -> (i32, i32) {
    %c0_i32 = arith.constant 0 : i32
    %c0_i32_0 = arith.constant 0 : i32
    %c0_i32_1 = arith.constant 0 : i32
    return %c0_i32, %c0_i32_0 : i32, i32
  }
  func.func @transform_15(%arg0: i32) -> (i32, i32) {
    %c0_i32 = arith.constant 0 : i32
    %c0_i32_0 = arith.constant 0 : i32
    %c0_i32_1 = arith.constant 0 : i32
    return %c0_i32, %c0_i32_0 : i32, i32
  }
  func.func @transform_16(%arg0: i32) -> (i32, i32) {
    %c0_i32 = arith.constant 0 : i32
    %c0_i32_0 = arith.constant 0 : i32
    %c0_i32_1 = arith.constant 0 : i32
    return %c0_i32, %c0_i32_0 : i32, i32
  }
  func.func @transform_17(%arg0: i32) -> (i32, i32) {
    %c0_i32 = arith.constant 0 : i32
    %c0_i32_0 = arith.constant 0 : i32
    %c0_i32_1 = arith.constant 0 : i32
    return %c0_i32, %c0_i32_0 : i32, i32
  }
  func.func @transform_18(%arg0: i32) -> (i32, i32) {
    %c0_i32 = arith.constant 0 : i32
    %c0_i32_0 = arith.constant 0 : i32
    %c0_i32_1 = arith.constant 0 : i32
    return %c0_i32, %c0_i32_0 : i32, i32
  }
  func.func @transform_19(%arg0: i32) -> (i32, i32) {
    %c0_i32 = arith.constant 0 : i32
    %c0_i32_0 = arith.constant 0 : i32
    %c0_i32_1 = arith.constant 0 : i32
    return %c0_i32, %c0_i32_0 : i32, i32
  }
  func.func @transform_20(%arg0: i32) -> (i32, i32) {
    %c0_i32 = arith.constant 0 : i32
    %c0_i32_0 = arith.constant 0 : i32
    %c0_i32_1 = arith.constant 0 : i32
    return %c0_i32, %c0_i32_0 : i32, i32
  }
  func.func @transform_21(%arg0: i32) -> (i32, i32) {
    %c0_i32 = arith.constant 0 : i32
    %c0_i32_0 = arith.constant 0 : i32
    %c0_i32_1 = arith.constant 0 : i32
    return %c0_i32, %c0_i32_0 : i32, i32
  }
  func.func @transform_22(%arg0: i32) -> (i32, i32) {
    %c0_i32 = arith.constant 0 : i32
    %c0_i32_0 = arith.constant 0 : i32
    %c0_i32_1 = arith.constant 0 : i32
    return %c0_i32, %c0_i32_0 : i32, i32
  }
  func.func @transform_23(%arg0: i32) -> (i32, i32) {
    %c0_i32 = arith.constant 0 : i32
    %c0_i32_0 = arith.constant 0 : i32
    %c0_i32_1 = arith.constant 0 : i32
    return %c0_i32, %c0_i32_0 : i32, i32
  }
  func.func @transform_24(%arg0: i32) -> (i32, i32) {
    %c0_i32 = arith.constant 0 : i32
    %c0_i32_0 = arith.constant 0 : i32
    %c0_i32_1 = arith.constant 0 : i32
    return %c0_i32, %c0_i32_0 : i32, i32
  }
  func.func @transform_25(%arg0: i32) -> (i32, i32) {
    %c0_i32 = arith.constant 0 : i32
    %c0_i32_0 = arith.constant 0 : i32
    %c0_i32_1 = arith.constant 0 : i32
    return %c0_i32, %c0_i32_0 : i32, i32
  }
  func.func @transform_26(%arg0: i32) -> (i32, i32) {
    %c0_i32 = arith.constant 0 : i32
    %c0_i32_0 = arith.constant 0 : i32
    %c0_i32_1 = arith.constant 0 : i32
    return %c0_i32, %c0_i32_0 : i32, i32
  }
  func.func @transform_27(%arg0: i32) -> (i32, i32) {
    %c0_i32 = arith.constant 0 : i32
    %c0_i32_0 = arith.constant 0 : i32
    %c0_i32_1 = arith.constant 0 : i32
    return %c0_i32, %c0_i32_0 : i32, i32
  }
  func.func @transform_28(%arg0: i32) -> (i32, i32) {
    %c0_i32 = arith.constant 0 : i32
    %c0_i32_0 = arith.constant 0 : i32
    %c0_i32_1 = arith.constant 0 : i32
    return %c0_i32, %c0_i32_0 : i32, i32
  }
}

</mosaic_0001>

<llo_original>
// kernel: hscmae_forward.1
$region0: #{hscmae_forward.1}
  #allocation0 [shape = 'u32[]', space=smem, size = 0x4, offset = 0x4, fixed_abs, tag = 'smem constant byte address 0x4 - core index']
  #allocation1 [shape = 'u32[144,128]{1,0:T(1,128)}', space=vmem, size = 0x12000, scoped, tag = 'internal scratch']
  %s0 = inlined_call_operand.vmem [shape: f32[16,16], index: 0, kind: input, shape index: {}]
  %s1 = inlined_call_operand.vmem [shape: f32[16,32], index: 1, kind: input, shape index: {}]
  %s2 = inlined_call_operand.vmem [shape: f32[1,32], index: 2, kind: input, shape index: {}]
  %s3 = inlined_call_operand.vmem [shape: f32[1,32], index: 3, kind: input, shape index: {}]
  %s4 = inlined_call_operand.vmem [shape: f32[1,32], index: 4, kind: input, shape index: {}]
  %s5 = inlined_call_operand.vmem [shape: f32[7,32], index: 5, kind: input, shape index: {}]
  %s6 = inlined_call_operand.vmem [shape: f32[1,32], index: 6, kind: input, shape index: {}]
  %s7 = inlined_call_operand.vmem [shape: f32[1,32], index: 7, kind: input, shape index: {}]
  %s8 = inlined_call_operand.vmem [shape: f32[1,32], index: 8, kind: input, shape index: {}]
  %s9 = inlined_call_operand.vmem [shape: f32[32,128], index: 9, kind: input, shape index: {}]
  %s10 = inlined_call_operand.vmem [shape: f32[1,128], index: 10, kind: input, shape index: {}]
  %s11 = inlined_call_operand.vmem [shape: f32[128,32], index: 11, kind: input, shape index: {}]
  %s12 = inlined_call_operand.vmem [shape: f32[1,32], index: 12, kind: input, shape index: {}]
  %s13 = inlined_call_operand.vmem [shape: f32[1,32], index: 13, kind: input, shape index: {}]
  %s14 = inlined_call_operand.vmem [shape: f32[1,32], index: 14, kind: input, shape index: {}]
  %s15 = inlined_call_operand.vmem [shape: f32[1,32], index: 15, kind: input, shape index: {}]
  %s16 = inlined_call_operand.vmem [shape: f32[32,64], index: 16, kind: input, shape index: {}]
  %s17 = inlined_call_operand.vmem [shape: f32[32,64], index: 17, kind: input, shape index: {}]
  %s18 = inlined_call_operand.vmem [shape: f32[1,64], index: 18, kind: input, shape index: {}]
  %s19 = inlined_call_operand.vmem [shape: f32[7,64], index: 19, kind: input, shape index: {}]
  %s20 = inlined_call_operand.vmem [shape: f32[1,64], index: 20, kind: input, shape index: {}]
  %s21 = inlined_call_operand.vmem [shape: f32[1,64], index: 21, kind: input, shape index: {}]
  %s22 = inlined_call_operand.vmem [shape: f32[1,64], index: 22, kind: input, shape index: {}]
  %s23 = inlined_call_operand.vmem [shape: f32[64,256], index: 23, kind: input, shape index: {}]
  %s24 = inlined_call_operand.vmem [shape: f32[1,256], index: 24, kind: input, shape index: {}]
  %s25 = inlined_call_operand.vmem [shape: f32[256,64], index: 25, kind: input, shape index: {}]
  %s26 = inlined_call_operand.vmem [shape: f32[1,64], index: 26, kind: input, shape index: {}]
  %s27 = inlined_call_operand.vmem [shape: f32[1,64], index: 27, kind: input, shape index: {}]
  %s28 = inlined_call_operand.vmem [shape: f32[8,1], index: 28, kind: output, shape index: {}]
  %s29 = sld [smem:[#allocation0]]
  $region122: #{hscmae_forward.1} parent=0
    _
  %s31 = ssub.s32 1, %s29
  %s32 = scalar_select 0, %s31, %s29
  // Predicated region
  $region2: #{hscmae_forward.1} parent=0 // pred_check
    _
  $region3: #{hscmae_forward.1} parent=0 // pred_check_branch
    %34 = sbr.rel (0) target = $region5
  $region4: #{hscmae_forward.1} parent=0 // pred_region
    _
  $region5: #{hscmae_forward.1} parent=0 // pred_fallthru
    _
  // Predicated region
  $region6: #{hscmae_forward.1} parent=0 // pred_check
    _
  $region7: #{hscmae_forward.1} parent=0 // pred_check_branch
    %36 = sbr.rel (0) target = $region9
  $region8: #{hscmae_forward.1} parent=0 // pred_region
    _
  $region9: #{hscmae_forward.1} parent=0 // pred_fallthru
    _
  // Predicated region
  $region10: #{hscmae_forward.1} parent=0 // pred_check
    _
  $region11: #{hscmae_forward.1} parent=0 // pred_check_branch
    %38 = sbr.rel (0) target = $region13
  $region12: #{hscmae_forward.1} parent=0 // pred_region
    _
  $region13: #{hscmae_forward.1} parent=0 // pred_fallthru
    _
  // Predicated region
  $region14: #{hscmae_forward.1} parent=0 // pred_check
    _
  $region15: #{hscmae_forward.1} parent=0 // pred_check_branch
    %40 = sbr.rel (0) target = $region17
  $region16: #{hscmae_forward.1} parent=0 // pred_region
    _
  $region17: #{hscmae_forward.1} parent=0 // pred_fallthru
    _
  // Predicated region
  $region18: #{hscmae_forward.1} parent=0 // pred_check
    _
  $region19: #{hscmae_forward.1} parent=0 // pred_check_branch
    %42 = sbr.rel (0) target = $region21
  $region20: #{hscmae_forward.1} parent=0 // pred_region
    _
  $region21: #{hscmae_forward.1} parent=0 // pred_fallthru
    _
  // Predicated region
  $region22: #{hscmae_forward.1} parent=0 // pred_check
    _
  $region23: #{hscmae_forward.1} parent=0 // pred_check_branch
    %44 = sbr.rel (0) target = $region25
  $region24: #{hscmae_forward.1} parent=0 // pred_region
    _
  $region25: #{hscmae_forward.1} parent=0 // pred_fallthru
    _
  // Predicated region
  $region26: #{hscmae_forward.1} parent=0 // pred_check
    _
  $region27: #{hscmae_forward.1} parent=0 // pred_check_branch
    %46 = sbr.rel (0) target = $region29
  $region28: #{hscmae_forward.1} parent=0 // pred_region
    _
  $region29: #{hscmae_forward.1} parent=0 // pred_fallthru
    _
  // Predicated region
  $region30: #{hscmae_forward.1} parent=0 // pred_check
    _
  $region31: #{hscmae_forward.1} parent=0 // pred_check_branch
    %48 = sbr.rel (0) target = $region33
  $region32: #{hscmae_forward.1} parent=0 // pred_region
    _
  $region33: #{hscmae_forward.1} parent=0 // pred_fallthru
    _
  // Predicated region
  $region34: #{hscmae_forward.1} parent=0 // pred_check
    _
  $region35: #{hscmae_forward.1} parent=0 // pred_check_branch
    %50 = sbr.rel (0) target = $region37
  $region36: #{hscmae_forward.1} parent=0 // pred_region
    _
  $region37: #{hscmae_forward.1} parent=0 // pred_fallthru
    _
  // Predicated region
  $region38: #{hscmae_forward.1} parent=0 // pred_check
    _
  $region39: #{hscmae_forward.1} parent=0 // pred_check_branch
    %52 = sbr.rel (0) target = $region41
  $region40: #{hscmae_forward.1} parent=0 // pred_region
    _
  $region41: #{hscmae_forward.1} parent=0 // pred_fallthru
    _
  // Predicated region
  $region42: #{hscmae_forward.1} parent=0 // pred_check
    _
  $region43: #{hscmae_forward.1} parent=0 // pred_check_branch
    %54 = sbr.rel (0) target = $region45
  $region44: #{hscmae_forward.1} parent=0 // pred_region
    _
  $region45: #{hscmae_forward.1} parent=0 // pred_fallthru
    _
  // Predicated region
  $region46: #{hscmae_forward.1} parent=0 // pred_check
    _
  $region47: #{hscmae_forward.1} parent=0 // pred_check_branch
    %56 = sbr.rel (0) target = $region49
  $region48: #{hscmae_forward.1} parent=0 // pred_region
    _
  $region49: #{hscmae_forward.1} parent=0 // pred_fallthru
    _
  // Predicated region
  $region50: #{hscmae_forward.1} parent=0 // pred_check
    _
  $region51: #{hscmae_forward.1} parent=0 // pred_check_branch
    %58 = sbr.rel (0) target = $region53
  $region52: #{hscmae_forward.1} parent=0 // pred_region
    _
  $region53: #{hscmae_forward.1} parent=0 // pred_fallthru
    _
  // Predicated region
  $region54: #{hscmae_forward.1} parent=0 // pred_check
    _
  $region55: #{hscmae_forward.1} parent=0 // pred_check_branch
    %60 = sbr.rel (0) target = $region57
  $region56: #{hscmae_forward.1} parent=0 // pred_region
    _
  $region57: #{hscmae_forward.1} parent=0 // pred_fallthru
    _
  // Predicated region
  $region58: #{hscmae_forward.1} parent=0 // pred_check
    _
  $region59: #{hscmae_forward.1} parent=0 // pred_check_branch
    %62 = sbr.rel (0) target = $region61
  $region60: #{hscmae_forward.1} parent=0 // pred_region
    _
  $region61: #{hscmae_forward.1} parent=0 // pred_fallthru
    _
  // Predicated region
  $region62: #{hscmae_forward.1} parent=0 // pred_check
    _
  $region63: #{hscmae_forward.1} parent=0 // pred_check_branch
    %64 = sbr.rel (0) target = $region65
  $region64: #{hscmae_forward.1} parent=0 // pred_region
    _
  $region65: #{hscmae_forward.1} parent=0 // pred_fallthru
    _
  // Predicated region
  $region66: #{hscmae_forward.1} parent=0 // pred_check
    _
  $region67: #{hscmae_forward.1} parent=0 // pred_check_branch
    %66 = sbr.rel (0) target = $region69
  $region68: #{hscmae_forward.1} parent=0 // pred_region
    _
  $region69: #{hscmae_forward.1} parent=0 // pred_fallthru
    _
  // Predicated region
  $region70: #{hscmae_forward.1} parent=0 // pred_check
    _
  $region71: #{hscmae_forward.1} parent=0 // pred_check_branch
    %68 = sbr.rel (0) target = $region73
  $region72: #{hscmae_forward.1} parent=0 // pred_region
    _
  $region73: #{hscmae_forward.1} parent=0 // pred_fallthru
    _
  // Predicated region
  $region74: #{hscmae_forward.1} parent=0 // pred_check
    _
  $region75: #{hscmae_forward.1} parent=0 // pred_check_branch
    %70 = sbr.rel (0) target = $region77
  $region76: #{hscmae_forward.1} parent=0 // pred_region
    _
  $region77: #{hscmae_forward.1} parent=0 // pred_fallthru
    _
  // Predicated region
  $region78: #{hscmae_forward.1} parent=0 // pred_check
    _
  $region79: #{hscmae_forward.1} parent=0 // pred_check_branch
    %72 = sbr.rel (0) target = $region81
  $region80: #{hscmae_forward.1} parent=0 // pred_region
    _
  $region81: #{hscmae_forward.1} parent=0 // pred_fallthru
    _
  // Predicated region
  $region82: #{hscmae_forward.1} parent=0 // pred_check
    _
  $region83: #{hscmae_forward.1} parent=0 // pred_check_branch
    %74 = sbr.rel (0) target = $region85
  $region84: #{hscmae_forward.1} parent=0 // pred_region
    _
  $region85: #{hscmae_forward.1} parent=0 // pred_fallthru
    _
  // Predicated region
  $region86: #{hscmae_forward.1} parent=0 // pred_check
    _
  $region87: #{hscmae_forward.1} parent=0 // pred_check_branch
    %76 = sbr.rel (0) target = $region89
  $region88: #{hscmae_forward.1} parent=0 // pred_region
    _
  $region89: #{hscmae_forward.1} parent=0 // pred_fallthru
    _
  // Predicated region
  $region90: #{hscmae_forward.1} parent=0 // pred_check
    _
  $region91: #{hscmae_forward.1} parent=0 // pred_check_branch
    %78 = sbr.rel (0) target = $region93
  $region92: #{hscmae_forward.1} parent=0 // pred_region
    _
  $region93: #{hscmae_forward.1} parent=0 // pred_fallthru
    _
  // Predicated region
  $region94: #{hscmae_forward.1} parent=0 // pred_check
    _
  $region95: #{hscmae_forward.1} parent=0 // pred_check_branch
    %80 = sbr.rel (0) target = $region97
  $region96: #{hscmae_forward.1} parent=0 // pred_region
    _
  $region97: #{hscmae_forward.1} parent=0 // pred_fallthru
    _
  // Predicated region
  $region98: #{hscmae_forward.1} parent=0 // pred_check
    _
  $region99: #{hscmae_forward.1} parent=0 // pred_check_branch
    %82 = sbr.rel (0) target = $region101
  $region100: #{hscmae_forward.1} parent=0 // pred_region
    _
  $region101: #{hscmae_forward.1} parent=0 // pred_fallthru
    _
  // Predicated region
  $region102: #{hscmae_forward.1} parent=0 // pred_check
    _
  $region103: #{hscmae_forward.1} parent=0 // pred_check_branch
    %84 = sbr.rel (0) target = $region105
  $region104: #{hscmae_forward.1} parent=0 // pred_region
    _
  $region105: #{hscmae_forward.1} parent=0 // pred_fallthru
    _
  // Predicated region
  $region106: #{hscmae_forward.1} parent=0 // pred_check
    _
  $region107: #{hscmae_forward.1} parent=0 // pred_check_branch
    %86 = sbr.rel (0) target = $region109
  $region108: #{hscmae_forward.1} parent=0 // pred_region
    _
  $region109: #{hscmae_forward.1} parent=0 // pred_fallthru
    _
  // Predicated region
  $region110: #{hscmae_forward.1} parent=0 // pred_check
    _
  $region111: #{hscmae_forward.1} parent=0 // pred_check_branch
    %88 = sbr.rel (0) target = $region113
  $region112: #{hscmae_forward.1} parent=0 // pred_region
    _
  $region113: #{hscmae_forward.1} parent=0 // pred_fallthru
    _
  %v89 = vld [vmem:[%s0] sm:$0xff]
  %v90 = vld [vmem:[%s0 + $0x8] sm:$0xff]
  %v91 = vld [vmem:[%s1] sm:$0xff]
  %v92 = vld [vmem:[%s1 + $0x8] sm:$0xff]
  %v93 = vld [vmem:[%s2] sm:$0x1]
  %v94 = vld [vmem:[%s3] sm:$0x1]
  %v95 = vld [vmem:[%s4] sm:$0x1]
  %v97 = vlaneseq
  %v98 = vshrl.u32 %v97, 7
  %v99 = vsub.s32 0, %v98
  %v100 = vrot.slane %v93, %v99
  %vm102 = vcmask 130048
  %v104 = vsel %vm102, %v89, 0
  %v107 = vsel %vm102, %v90, 0
  %109 = vmatprep.subr.mxu0 0.0
  %110 = vmatpush1.msra.mxu0 %v91
  %111 = vmatprep.subr.mxu0 0.0
  %112 = vmatpush1.msra.mxu0 %v92
  %113 = vmatprep.subr.mxu0 0.0
  %114 = vmatpush1.msra.mxu0 0.0
  %115 = vmatprep.subr.mxu0 0.0
  %116 = vmatpush1.msra.mxu0 0.0
  %117 = vmatprep.subr.mxu0 0.0
  %118 = vmatpush1.msra.mxu0 0.0
  %119 = vmatprep.subr.mxu0 0.0
  %120 = vmatpush1.msra.mxu0 0.0
  %121 = vmatprep.subr.mxu0 0.0
  %122 = vmatpush1.msra.mxu0 0.0
  %123 = vmatprep.subr.mxu0 0.0
  %124 = vmatpush1.msra.mxu0 0.0
  %125 = vmatprep.subr.mxu0 0.0
  %126 = vmatpush1.msra.mxu0 0.0
  %127 = vmatprep.subr.mxu0 0.0
  %128 = vmatpush1.msra.mxu0 0.0
  %129 = vmatprep.subr.mxu0 0.0
  %130 = vmatpush1.msra.mxu0 0.0
  %131 = vmatprep.subr.mxu0 0.0
  %132 = vmatpush1.msra.mxu0 0.0
  %133 = vmatprep.subr.mxu0 0.0
  %134 = vmatpush1.msra.mxu0 0.0
  %135 = vmatprep.subr.mxu0 0.0
  %136 = vmatpush1.msra.mxu0 0.0
  %137 = vmatprep.subr.mxu0 0.0
  %138 = vmatpush1.msra.mxu0 0.0
  %139 = vmatprep.subr.mxu0 0.0
  %140 = vmatpush1.msra.mxu0 0.0
  %141 = vmatprep.subr.mxu0 0.0
  %142 = vmatpush1.msra.mxu0 0.0
  %143 = vmatprep.subr.mxu0 0.0
  %144 = vmatpush1.msra.mxu0 0.0
  %145 = vmatprep.subr.mxu0 0.0
  %146 = vmatpush1.msra.mxu0 0.0
  %147 = vmatprep.subr.mxu0 0.0
  %148 = vmatpush1.msra.mxu0 0.0
  %149 = vmatprep.subr.mxu0 0.0
  %150 = vmatpush1.msra.mxu0 0.0
  %151 = vmatprep.subr.mxu0 0.0
  %152 = vmatpush1.msra.mxu0 0.0
  %153 = vmatprep.subr.mxu0 0.0
  %154 = vmatpush1.msra.mxu0 0.0
  %155 = vmatprep.subr.mxu0 0.0
  %156 = vmatpush1.msra.mxu0 0.0
  %157 = vmatprep.subr.mxu0 0.0
  %158 = vmatpush1.msra.mxu0 0.0
  %159 = vmatprep.subr.mxu0 0.0
  %160 = vmatpush1.msra.mxu0 0.0
  %161 = vmatprep.subr.mxu0 0.0
  %162 = vmatpush1.msra.mxu0 0.0
  %163 = vmatprep.subr.mxu0 0.0
  %164 = vmatpush1.msra.mxu0 0.0
  %165 = vmatprep.subr.mxu0 0.0
  %166 = vmatpush1.msra.mxu0 0.0
  %167 = vmatprep.subr.mxu0 0.0
  %168 = vmatpush1.msra.mxu0 0.0
  %169 = vmatprep.subr.mxu0 0.0
  %170 = vmatpush1.msra.mxu0 0.0
  %171 = vmatprep.subr.mxu0 0.0
  %172 = vmatpush1.msra.mxu0 0.0
  %173 = vmatprep.mubr.f32.mxu0 0.0
  %174 = vmatmul.mubr.f32.gmra.mrb[0].mxu0 %v104
  %v175 = vpop.f32.mrb[0].mxu0
  %v176 = vadd.f32 %v100, %v175
  %v177 = vpop.f32.mrb[0].mxu0
  %178 = vmatprep.mubr.f32.mxu0 0.0
  %179 = vmatmul.mubr.f32.gmra.mrb[0].mxu0 %v107
  %v180 = vpop.f32.mrb[0].mxu0
  %v181 = vadd.f32 %v100, %v180
  %v182 = vpop.f32.mrb[0].mxu0
  %183 = vdwg.mxu0
  %vm184 = vcmask 261120
  %v185 = vsel %vm184, %v176, 0.0
  %186 = vadd.xlane.f32.xlu0 %v185
  %v187 = vpop.xlane.xlu0 %186
  %v188 = vsel %vm184, %v181, 0.0
  %189 = vadd.xlane.f32.xlu0 %v188
  %v190 = vpop.xlane.xlu0 %189
  %v191 = vrcp.pop 32.0
  %v192 = vmul.f32 %v187, %v191
  %v193 = vmul.f32 %v190, %v191
  %v194 = vsub.f32 %v176, %v192
  %v195 = vsub.f32 %v181, %v193
  %v196 = vmul.f32 %v194, %v194
  %v197 = vmul.f32 %v195, %v195
  %v198 = vsel %vm184, %v196, 0.0
  %199 = vadd.xlane.f32.xlu0 %v198
  %v200 = vpop.xlane.xlu0 %199
  %v201 = vsel %vm184, %v197, 0.0
  %202 = vadd.xlane.f32.xlu0 %v201
  %v203 = vpop.xlane.xlu0 %202
  %v204 = vmul.f32 %v200, %v191
  %v205 = vmul.f32 %v203, %v191
  %v206 = vadd.f32 %v204, 1e-06
  %v207 = vadd.f32 %v205, 1e-06
  %v208 = vrsqrt.pop %v206
  %v209 = vrsqrt.pop %v207
  %v210 = vmul.f32 %v194, %v208
  %v211 = vmul.f32 %v195, %v209
  %v213 = vlaneseq
  %v214 = vshrl.u32 %v213, 7
  %v215 = vsub.s32 0, %v214
  %v216 = vrot.slane %v94, %v215
  %v218 = vmul.f32 %v210, %v216
  %v219 = vmul.f32 %v211, %v216
  %v221 = vlaneseq
  %v222 = vshrl.u32 %v221, 7
  %v223 = vsub.s32 0, %v222
  %v224 = vrot.slane %v95, %v223
  %v226 = vadd.f32 %v218, %v224
  %v227 = vadd.f32 %v219, %v224
  %v228 = vld [vmem:[%s5] sm:$0x7f]
  %v229 = vld [vmem:[%s6] sm:$0x1]
  %v230 = vld [vmem:[%s7] sm:$0x1]
  %v231 = vld [vmem:[%s8] sm:$0x1]
  %v232 = vld [vmem:[%s9] sm:$0xff]
  %v233 = vld [vmem:[%s9 + $0x8] sm:$0xff]
  %v234 = vld [vmem:[%s9 + $0x10] sm:$0xff]
  %v235 = vld [vmem:[%s9 + $0x18] sm:$0xff]
  %v236 = vld [vmem:[%s10] sm:$0x1]
  %v237 = vld [vmem:[%s11] sm:$0xff]
  %v238 = vld [vmem:[%s11 + $0x8] sm:$0xff]
  %v239 = vld [vmem:[%s11 + $0x10] sm:$0xff]
  %v240 = vld [vmem:[%s11 + $0x18] sm:$0xff]
  %v241 = vld [vmem:[%s11 + $0x20] sm:$0xff]
  %v242 = vld [vmem:[%s11 + $0x28] sm:$0xff]
  %v243 = vld [vmem:[%s11 + $0x30] sm:$0xff]
  %v244 = vld [vmem:[%s11 + $0x38] sm:$0xff]
  %v245 = vld [vmem:[%s11 + $0x40] sm:$0xff]
  %v246 = vld [vmem:[%s11 + $0x48] sm:$0xff]
  %v247 = vld [vmem:[%s11 + $0x50] sm:$0xff]
  %v248 = vld [vmem:[%s11 + $0x58] sm:$0xff]
  %v249 = vld [vmem:[%s11 + $0x60] sm:$0xff]
  %v250 = vld [vmem:[%s11 + $0x68] sm:$0xff]
  %v251 = vld [vmem:[%s11 + $0x70] sm:$0xff]
  %v252 = vld [vmem:[%s11 + $0x78] sm:$0xff]
  %v253 = vld [vmem:[%s12] sm:$0x1]
  %v254 = vld [vmem:[%s13] sm:$0x1]
  %v255 = vlaneseq
  %v256 = vshrl.u32 %v255, 7
  %v257 = vadd.s32 %v256, 8
  %v258 = vlaneseq
  %v259 = vand.u32 %v258, 127
  %v260 = vand.u32 %v256, 7
  %v261 = vand.u32 %v257, 7
  %v262 = vadd.s32 %v260, 4294967293
  %v263 = vadd.s32 %v261, 4294967293
  %v264 = vadd.s32 %v256, 4294967293
  %v265 = vadd.s32 %v257, 4294967293
  %vm266 = vcmp.eq.s32.totalorder %v259, %v264
  %vm267 = vcmp.eq.s32.totalorder %v259, %v265
  %vm268 = vcmp.ge.s32.totalorder %v262, 0
  %vm269 = vcmp.ge.s32.totalorder %v263, 0
  %vm270 = vmand %vm266, %vm268
  %vm271 = vmand %vm267, %vm269
  %vm272 = vcmp.lt.s32.totalorder %v262, 8
  %vm273 = vcmp.lt.s32.totalorder %v263, 8
  %vm274 = vmand %vm270, %vm272
  %vm275 = vmand %vm271, %vm273
  %v276 = vsel %vm274, 1.0, 0.0
  %v277 = vsel %vm275, 1.0, 0.0
  %v279 = vsel %vm102, %v276, 0
  %v282 = vsel %vm102, %v277, 0
  %284 = vmatprep.subr.mxu0 0.0
  %285 = vmatpush1.msra.mxu0 %v226
  %286 = vmatprep.subr.mxu0 0.0
  %287 = vmatpush1.msra.mxu0 %v227
  %288 = vmatprep.subr.mxu0 0.0
  %289 = vmatpush1.msra.mxu0 0.0
  %290 = vmatprep.subr.mxu0 0.0
  %291 = vmatpush1.msra.mxu0 0.0
  %292 = vmatprep.subr.mxu0 0.0
  %293 = vmatpush1.msra.mxu0 0.0
  %294 = vmatprep.subr.mxu0 0.0
  %295 = vmatpush1.msra.mxu0 0.0
  %296 = vmatprep.subr.mxu0 0.0
  %297 = vmatpush1.msra.mxu0 0.0
  %298 = vmatprep.subr.mxu0 0.0
  %299 = vmatpush1.msra.mxu0 0.0
  %300 = vmatprep.subr.mxu0 0.0
  %301 = vmatpush1.msra.mxu0 0.0
  %302 = vmatprep.subr.mxu0 0.0
  %303 = vmatpush1.msra.mxu0 0.0
  %304 = vmatprep.subr.mxu0 0.0
  %305 = vmatpush1.msra.mxu0 0.0
  %306 = vmatprep.subr.mxu0 0.0
  %307 = vmatpush1.msra.mxu0 0.0
  %308 = vmatprep.subr.mxu0 0.0
  %309 = vmatpush1.msra.mxu0 0.0
  %310 = vmatprep.subr.mxu0 0.0
  %311 = vmatpush1.msra.mxu0 0.0
  %312 = vmatprep.subr.mxu0 0.0
  %313 = vmatpush1.msra.mxu0 0.0
  %314 = vmatprep.subr.mxu0 0.0
  %315 = vmatpush1.msra.mxu0 0.0
  %316 = vmatprep.subr.mxu0 0.0
  %317 = vmatpush1.msra.mxu0 0.0
  %318 = vmatprep.subr.mxu0 0.0
  %319 = vmatpush1.msra.mxu0 0.0
  %320 = vmatprep.subr.mxu0 0.0
  %321 = vmatpush1.msra.mxu0 0.0
  %322 = vmatprep.subr.mxu0 0.0
  %323 = vmatpush1.msra.mxu0 0.0
  %324 = vmatprep.subr.mxu0 0.0
  %325 = vmatpush1.msra.mxu0 0.0
  %326 = vmatprep.subr.mxu0 0.0
  %327 = vmatpush1.msra.mxu0 0.0
  %328 = vmatprep.subr.mxu0 0.0
  %329 = vmatpush1.msra.mxu0 0.0
  %330 = vmatprep.subr.mxu0 0.0
  %331 = vmatpush1.msra.mxu0 0.0
  %332 = vmatprep.subr.mxu0 0.0
  %333 = vmatpush1.msra.mxu0 0.0
  %334 = vmatprep.subr.mxu0 0.0
  %335 = vmatpush1.msra.mxu0 0.0
  %336 = vmatprep.subr.mxu0 0.0
  %337 = vmatpush1.msra.mxu0 0.0
  %338 = vmatprep.subr.mxu0 0.0
  %339 = vmatpush1.msra.mxu0 0.0
  %340 = vmatprep.subr.mxu0 0.0
  %341 = vmatpush1.msra.mxu0 0.0
  %342 = vmatprep.subr.mxu0 0.0
  %343 = vmatpush1.msra.mxu0 0.0
  %344 = vmatprep.subr.mxu0 0.0
  %345 = vmatpush1.msra.mxu0 0.0
  %346 = vmatprep.subr.mxu0 0.0
  %347 = vmatpush1.msra.mxu0 0.0
  %348 = vmatprep.mubr.f32.mxu0 0.0
  %349 = vmatmul.mubr.f32.gmra.mrb[0].mxu0 %v279
  %v350 = vpop.f32.mrb[0].mxu0
  %v351 = vadd.f32 0.0, %v350
  %v352 = vpop.f32.mrb[0].mxu0
  %353 = vmatprep.mubr.f32.mxu0 0.0
  %354 = vmatmul.mubr.f32.gmra.mrb[0].mxu0 %v282
  %v355 = vpop.f32.mrb[0].mxu0
  %v356 = vadd.f32 0.0, %v355
  %v357 = vpop.f32.mrb[0].mxu0
  %358 = vdwg.mxu0
  %v359 = vlaneseq
  %v360 = vshrl.u32 %v359, 7
  %v361 = vsub.s32 0, %v360
  %v362 = vrot.slane %v228, %v361
  %v363 = vmul.f32 %v351, %v362
  %v364 = vmul.f32 %v356, %v362
  %v365 = vadd.f32 %v363, 0.0
  %v366 = vadd.f32 %v364, 0.0
  %v367 = vadd.s32 %v260, 4294967294
  %v368 = vadd.s32 %v261, 4294967294
  %v369 = vadd.s32 %v256, 4294967294
  %v370 = vadd.s32 %v257, 4294967294
  %vm371 = vcmp.eq.s32.totalorder %v259, %v369
  %vm372 = vcmp.eq.s32.totalorder %v259, %v370
  %vm373 = vcmp.ge.s32.totalorder %v367, 0
  %vm374 = vcmp.ge.s32.totalorder %v368, 0
  %vm375 = vmand %vm371, %vm373
  %vm376 = vmand %vm372, %vm374
  %vm377 = vcmp.lt.s32.totalorder %v367, 8
  %vm378 = vcmp.lt.s32.totalorder %v368, 8
  %vm379 = vmand %vm375, %vm377
  %vm380 = vmand %vm376, %vm378
  %v381 = vsel %vm379, 1.0, 0.0
  %v382 = vsel %vm380, 1.0, 0.0
  %v384 = vsel %vm102, %v381, 0
  %v387 = vsel %vm102, %v382, 0
  %389 = vmatprep.subr.mxu0 0.0
  %390 = vmatpush1.msra.mxu0 %v226
  %391 = vmatprep.subr.mxu0 0.0
  %392 = vmatpush1.msra.mxu0 %v227
  %393 = vmatprep.subr.mxu0 0.0
  %394 = vmatpush1.msra.mxu0 0.0
  %395 = vmatprep.subr.mxu0 0.0
  %396 = vmatpush1.msra.mxu0 0.0
  %397 = vmatprep.subr.mxu0 0.0
  %398 = vmatpush1.msra.mxu0 0.0
  %399 = vmatprep.subr.mxu0 0.0
  %400 = vmatpush1.msra.mxu0 0.0
  %401 = vmatprep.subr.mxu0 0.0
  %402 = vmatpush1.msra.mxu0 0.0
  %403 = vmatprep.subr.mxu0 0.0
  %404 = vmatpush1.msra.mxu0 0.0
  %405 = vmatprep.subr.mxu0 0.0
  %406 = vmatpush1.msra.mxu0 0.0
  %407 = vmatprep.subr.mxu0 0.0
  %408 = vmatpush1.msra.mxu0 0.0
  %409 = vmatprep.subr.mxu0 0.0
  %410 = vmatpush1.msra.mxu0 0.0
  %411 = vmatprep.subr.mxu0 0.0
  %412 = vmatpush1.msra.mxu0 0.0
  %413 = vmatprep.subr.mxu0 0.0
  %414 = vmatpush1.msra.mxu0 0.0
  %415 = vmatprep.subr.mxu0 0.0
  %416 = vmatpush1.msra.mxu0 0.0
  %417 = vmatprep.subr.mxu0 0.0
  %418 = vmatpush1.msra.mxu0 0.0
  %419 = vmatprep.subr.mxu0 0.0
  %420 = vmatpush1.msra.mxu0 0.0
  %421 = vmatprep.subr.mxu0 0.0
  %422 = vmatpush1.msra.mxu0 0.0
  %423 = vmatprep.subr.mxu0 0.0
  %424 = vmatpush1.msra.mxu0 0.0
  %425 = vmatprep.subr.mxu0 0.0
  %426 = vmatpush1.msra.mxu0 0.0
  %427 = vmatprep.subr.mxu0 0.0
  %428 = vmatpush1.msra.mxu0 0.0
  %429 = vmatprep.subr.mxu0 0.0
  %430 = vmatpush1.msra.mxu0 0.0
  %431 = vmatprep.subr.mxu0 0.0
  %432 = vmatpush1.msra.mxu0 0.0
  %433 = vmatprep.subr.mxu0 0.0
  %434 = vmatpush1.msra.mxu0 0.0
  %435 = vmatprep.subr.mxu0 0.0
  %436 = vmatpush1.msra.mxu0 0.0
  %437 = vmatprep.subr.mxu0 0.0
  %438 = vmatpush1.msra.mxu0 0.0
  %439 = vmatprep.subr.mxu0 0.0
  %440 = vmatpush1.msra.mxu0 0.0
  %441 = vmatprep.subr.mxu0 0.0
  %442 = vmatpush1.msra.mxu0 0.0
  %443 = vmatprep.subr.mxu0 0.0
  %444 = vmatpush1.msra.mxu0 0.0
  %445 = vmatprep.subr.mxu0 0.0
  %446 = vmatpush1.msra.mxu0 0.0
  %447 = vmatprep.subr.mxu0 0.0
  %448 = vmatpush1.msra.mxu0 0.0
  %449 = vmatprep.subr.mxu0 0.0
  %450 = vmatpush1.msra.mxu0 0.0
  %451 = vmatprep.subr.mxu0 0.0
  %452 = vmatpush1.msra.mxu0 0.0
  %453 = vmatprep.mubr.f32.mxu0 0.0
  %454 = vmatmul.mubr.f32.gmra.mrb[0].mxu0 %v384
  %v455 = vpop.f32.mrb[0].mxu0
  %v456 = vadd.f32 0.0, %v455
  %v457 = vpop.f32.mrb[0].mxu0
  %458 = vmatprep.mubr.f32.mxu0 0.0
  %459 = vmatmul.mubr.f32.gmra.mrb[0].mxu0 %v387
  %v460 = vpop.f32.mrb[0].mxu0
  %v461 = vadd.f32 0.0, %v460
  %v462 = vpop.f32.mrb[0].mxu0
  %463 = vdwg.mxu0
  %v464 = vlaneseq
  %v465 = vshrl.u32 %v464, 7
  %v466 = vsub.s32 1, %v465
  %v467 = vrot.slane %v228, %v466
  %v468 = vmul.f32 %v456, %v467
  %v469 = vmul.f32 %v461, %v467
  %v470 = vadd.f32 %v365, %v468
  %v471 = vadd.f32 %v366, %v469
  %v472 = vadd.s32 %v260, 4294967295
  %v473 = vadd.s32 %v261, 4294967295
  %v474 = vadd.s32 %v256, 4294967295
  %v475 = vadd.s32 %v257, 4294967295
  %vm476 = vcmp.eq.s32.totalorder %v259, %v474
  %vm477 = vcmp.eq.s32.totalorder %v259, %v475
  %vm478 = vcmp.ge.s32.totalorder %v472, 0
  %vm479 = vcmp.ge.s32.totalorder %v473, 0
  %vm480 = vmand %vm476, %vm478
  %vm481 = vmand %vm477, %vm479
  %vm482 = vcmp.lt.s32.totalorder %v472, 8
  %vm483 = vcmp.lt.s32.totalorder %v473, 8
  %vm484 = vmand %vm480, %vm482
  %vm485 = vmand %vm481, %vm483
  %v486 = vsel %vm484, 1.0, 0.0
  %v487 = vsel %vm485, 1.0, 0.0
  %v489 = vsel %vm102, %v486, 0
  %v492 = vsel %vm102, %v487, 0
  %494 = vmatprep.subr.mxu0 0.0
  %495 = vmatpush1.msra.mxu0 %v226
  %496 = vmatprep.subr.mxu0 0.0
  %497 = vmatpush1.msra.mxu0 %v227
  %498 = vmatprep.subr.mxu0 0.0
  %499 = vmatpush1.msra.mxu0 0.0
  %500 = vmatprep.subr.mxu0 0.0
  %501 = vmatpush1.msra.mxu0 0.0
  %502 = vmatprep.subr.mxu0 0.0
  %503 = vmatpush1.msra.mxu0 0.0
  %504 = vmatprep.subr.mxu0 0.0
  %505 = vmatpush1.msra.mxu0 0.0
  %506 = vmatprep.subr.mxu0 0.0
  %507 = vmatpush1.msra.mxu0 0.0
  %508 = vmatprep.subr.mxu0 0.0
  %509 = vmatpush1.msra.mxu0 0.0
  %510 = vmatprep.subr.mxu0 0.0
  %511 = vmatpush1.msra.mxu0 0.0
  %512 = vmatprep.subr.mxu0 0.0
  %513 = vmatpush1.msra.mxu0 0.0
  %514 = vmatprep.subr.mxu0 0.0
  %515 = vmatpush1.msra.mxu0 0.0
  %516 = vmatprep.subr.mxu0 0.0
  %517 = vmatpush1.msra.mxu0 0.0
  %518 = vmatprep.subr.mxu0 0.0
  %519 = vmatpush1.msra.mxu0 0.0
  %520 = vmatprep.subr.mxu0 0.0
  %521 = vmatpush1.msra.mxu0 0.0
  %522 = vmatprep.subr.mxu0 0.0
  %523 = vmatpush1.msra.mxu0 0.0
  %524 = vmatprep.subr.mxu0 0.0
  %525 = vmatpush1.msra.mxu0 0.0
  %526 = vmatprep.subr.mxu0 0.0
  %527 = vmatpush1.msra.mxu0 0.0
  %528 = vmatprep.subr.mxu0 0.0
  %529 = vmatpush1.msra.mxu0 0.0
  %530 = vmatprep.subr.mxu0 0.0
  %531 = vmatpush1.msra.mxu0 0.0
  %532 = vmatprep.subr.mxu0 0.0
  %533 = vmatpush1.msra.mxu0 0.0
  %534 = vmatprep.subr.mxu0 0.0
  %535 = vmatpush1.msra.mxu0 0.0
  %536 = vmatprep.subr.mxu0 0.0
  %537 = vmatpush1.msra.mxu0 0.0
  %538 = vmatprep.subr.mxu0 0.0
  %539 = vmatpush1.msra.mxu0 0.0
  %540 = vmatprep.subr.mxu0 0.0
  %541 = vmatpush1.msra.mxu0 0.0
  %542 = vmatprep.subr.mxu0 0.0
  %543 = vmatpush1.msra.mxu0 0.0
  %544 = vmatprep.subr.mxu0 0.0
  %545 = vmatpush1.msra.mxu0 0.0
  %546 = vmatprep.subr.mxu0 0.0
  %547 = vmatpush1.msra.mxu0 0.0
  %548 = vmatprep.subr.mxu0 0.0
  %549 = vmatpush1.msra.mxu0 0.0
  %550 = vmatprep.subr.mxu0 0.0
  %551 = vmatpush1.msra.mxu0 0.0
  %552 = vmatprep.subr.mxu0 0.0
  %553 = vmatpush1.msra.mxu0 0.0
  %554 = vmatprep.subr.mxu0 0.0
  %555 = vmatpush1.msra.mxu0 0.0
  %556 = vmatprep.subr.mxu0 0.0
  %557 = vmatpush1.msra.mxu0 0.0
  %558 = vmatprep.mubr.f32.mxu0 0.0
  %559 = vmatmul.mubr.f32.gmra.mrb[0].mxu0 %v489
  %v560 = vpop.f32.mrb[0].mxu0
  %v561 = vadd.f32 0.0, %v560
  %v562 = vpop.f32.mrb[0].mxu0
  %563 = vmatprep.mubr.f32.mxu0 0.0
  %564 = vmatmul.mubr.f32.gmra.mrb[0].mxu0 %v492
  %v565 = vpop.f32.mrb[0].mxu0
  %v566 = vadd.f32 0.0, %v565
  %v567 = vpop.f32.mrb[0].mxu0
  %568 = vdwg.mxu0
  %v569 = vlaneseq
  %v570 = vshrl.u32 %v569, 7
  %v571 = vsub.s32 2, %v570
  %v572 = vrot.slane %v228, %v571
  %v573 = vmul.f32 %v561, %v572
  %v574 = vmul.f32 %v566, %v572
  %v575 = vadd.f32 %v470, %v573
  %v576 = vadd.f32 %v471, %v574
  %vm577 = vcmp.eq.s32.totalorder %v259, %v256
  %vm578 = vcmp.eq.s32.totalorder %v259, %v257
  %vm579 = vcmp.ge.s32.totalorder %v260, 0
  %vm580 = vcmp.ge.s32.totalorder %v261, 0
  %vm581 = vmand %vm577, %vm579
  %vm582 = vmand %vm578, %vm580
  %vm583 = vcmp.lt.s32.totalorder %v260, 8
  %vm584 = vcmp.lt.s32.totalorder %v261, 8
  %vm585 = vmand %vm581, %vm583
  %vm586 = vmand %vm582, %vm584
  %v587 = vsel %vm585, 1.0, 0.0
  %v588 = vsel %vm586, 1.0, 0.0
  %v590 = vsel %vm102, %v587, 0
  %v593 = vsel %vm102, %v588, 0
  %595 = vmatprep.subr.mxu0 0.0
  %596 = vmatpush1.msra.mxu0 %v226
  %597 = vmatprep.subr.mxu0 0.0
  %598 = vmatpush1.msra.mxu0 %v227
  %599 = vmatprep.subr.mxu0 0.0
  %600 = vmatpush1.msra.mxu0 0.0
  %601 = vmatprep.subr.mxu0 0.0
  %602 = vmatpush1.msra.mxu0 0.0
  %603 = vmatprep.subr.mxu0 0.0
  %604 = vmatpush1.msra.mxu0 0.0
  %605 = vmatprep.subr.mxu0 0.0
  %606 = vmatpush1.msra.mxu0 0.0
  %607 = vmatprep.subr.mxu0 0.0
  %608 = vmatpush1.msra.mxu0 0.0
  %609 = vmatprep.subr.mxu0 0.0
  %610 = vmatpush1.msra.mxu0 0.0
  %611 = vmatprep.subr.mxu0 0.0
  %612 = vmatpush1.msra.mxu0 0.0
  %613 = vmatprep.subr.mxu0 0.0
  %614 = vmatpush1.msra.mxu0 0.0
  %615 = vmatprep.subr.mxu0 0.0
  %616 = vmatpush1.msra.mxu0 0.0
  %617 = vmatprep.subr.mxu0 0.0
  %618 = vmatpush1.msra.mxu0 0.0
  %619 = vmatprep.subr.mxu0 0.0
  %620 = vmatpush1.msra.mxu0 0.0
  %621 = vmatprep.subr.mxu0 0.0
  %622 = vmatpush1.msra.mxu0 0.0
  %623 = vmatprep.subr.mxu0 0.0
  %624 = vmatpush1.msra.mxu0 0.0
  %625 = vmatprep.subr.mxu0 0.0
  %626 = vmatpush1.msra.mxu0 0.0
  %627 = vmatprep.subr.mxu0 0.0
  %628 = vmatpush1.msra.mxu0 0.0
  %629 = vmatprep.subr.mxu0 0.0
  %630 = vmatpush1.msra.mxu0 0.0
  %631 = vmatprep.subr.mxu0 0.0
  %632 = vmatpush1.msra.mxu0 0.0
  %633 = vmatprep.subr.mxu0 0.0
  %634 = vmatpush1.msra.mxu0 0.0
  %635 = vmatprep.subr.mxu0 0.0
  %636 = vmatpush1.msra.mxu0 0.0
  %637 = vmatprep.subr.mxu0 0.0
  %638 = vmatpush1.msra.mxu0 0.0
  %639 = vmatprep.subr.mxu0 0.0
  %640 = vmatpush1.msra.mxu0 0.0
  %641 = vmatprep.subr.mxu0 0.0
  %642 = vmatpush1.msra.mxu0 0.0
  %643 = vmatprep.subr.mxu0 0.0
  %644 = vmatpush1.msra.mxu0 0.0
  %645 = vmatprep.subr.mxu0 0.0
  %646 = vmatpush1.msra.mxu0 0.0
  %647 = vmatprep.subr.mxu0 0.0
  %648 = vmatpush1.msra.mxu0 0.0
  %649 = vmatprep.subr.mxu0 0.0
  %650 = vmatpush1.msra.mxu0 0.0
  %651 = vmatprep.subr.mxu0 0.0
  %652 = vmatpush1.msra.mxu0 0.0
  %653 = vmatprep.subr.mxu0 0.0
  %654 = vmatpush1.msra.mxu0 0.0
  %655 = vmatprep.subr.mxu0 0.0
  %656 = vmatpush1.msra.mxu0 0.0
  %657 = vmatprep.subr.mxu0 0.0
  %658 = vmatpush1.msra.mxu0 0.0
  %659 = vmatprep.mubr.f32.mxu0 0.0
  %660 = vmatmul.mubr.f32.gmra.mrb[0].mxu0 %v590
  %v661 = vpop.f32.mrb[0].mxu0
  %v662 = vadd.f32 0.0, %v661
  %v663 = vpop.f32.mrb[0].mxu0
  %664 = vmatprep.mubr.f32.mxu0 0.0
  %665 = vmatmul.mubr.f32.gmra.mrb[0].mxu0 %v593
  %v666 = vpop.f32.mrb[0].mxu0
  %v667 = vadd.f32 0.0, %v666
  %v668 = vpop.f32.mrb[0].mxu0
  %669 = vdwg.mxu0
  %v670 = vlaneseq
  %v671 = vshrl.u32 %v670, 7
  %v672 = vsub.s32 3, %v671
  %v673 = vrot.slane %v228, %v672
  %v674 = vmul.f32 %v662, %v673
  %v675 = vmul.f32 %v667, %v673
  %v676 = vadd.f32 %v575, %v674
  %v677 = vadd.f32 %v576, %v675
  %v678 = vadd.s32 %v260, 1
  %v679 = vadd.s32 %v261, 1
  %v680 = vadd.s32 %v256, 1
  %v681 = vadd.s32 %v257, 1
  %vm682 = vcmp.eq.s32.totalorder %v259, %v680
  %vm683 = vcmp.eq.s32.totalorder %v259, %v681
  %vm684 = vcmp.ge.s32.totalorder %v678, 0
  %vm685 = vcmp.ge.s32.totalorder %v679, 0
  %vm686 = vmand %vm682, %vm684
  %vm687 = vmand %vm683, %vm685
  %vm688 = vcmp.lt.s32.totalorder %v678, 8
  %vm689 = vcmp.lt.s32.totalorder %v679, 8
  %vm690 = vmand %vm686, %vm688
  %vm691 = vmand %vm687, %vm689
  %v692 = vsel %vm690, 1.0, 0.0
  %v693 = vsel %vm691, 1.0, 0.0
  %v695 = vsel %vm102, %v692, 0
  %v698 = vsel %vm102, %v693, 0
  %700 = vmatprep.subr.mxu0 0.0
  %701 = vmatpush1.msra.mxu0 %v226
  %702 = vmatprep.subr.mxu0 0.0
  %703 = vmatpush1.msra.mxu0 %v227
  %704 = vmatprep.subr.mxu0 0.0
  %705 = vmatpush1.msra.mxu0 0.0
  %706 = vmatprep.subr.mxu0 0.0
  %707 = vmatpush1.msra.mxu0 0.0
  %708 = vmatprep.subr.mxu0 0.0
  %709 = vmatpush1.msra.mxu0 0.0
  %710 = vmatprep.subr.mxu0 0.0
  %711 = vmatpush1.msra.mxu0 0.0
  %712 = vmatprep.subr.mxu0 0.0
  %713 = vmatpush1.msra.mxu0 0.0
  %714 = vmatprep.subr.mxu0 0.0
  %715 = vmatpush1.msra.mxu0 0.0
  %716 = vmatprep.subr.mxu0 0.0
  %717 = vmatpush1.msra.mxu0 0.0
  %718 = vmatprep.subr.mxu0 0.0
  %719 = vmatpush1.msra.mxu0 0.0
  %720 = vmatprep.subr.mxu0 0.0
  %721 = vmatpush1.msra.mxu0 0.0
  %722 = vmatprep.subr.mxu0 0.0
  %723 = vmatpush1.msra.mxu0 0.0
  %724 = vmatprep.subr.mxu0 0.0
  %725 = vmatpush1.msra.mxu0 0.0
  %726 = vmatprep.subr.mxu0 0.0
  %727 = vmatpush1.msra.mxu0 0.0
  %728 = vmatprep.subr.mxu0 0.0
  %729 = vmatpush1.msra.mxu0 0.0
  %730 = vmatprep.subr.mxu0 0.0
  %731 = vmatpush1.msra.mxu0 0.0
  %732 = vmatprep.subr.mxu0 0.0
  %733 = vmatpush1.msra.mxu0 0.0
  %734 = vmatprep.subr.mxu0 0.0
  %735 = vmatpush1.msra.mxu0 0.0
  %736 = vmatprep.subr.mxu0 0.0
  %737 = vmatpush1.msra.mxu0 0.0
  %738 = vmatprep.subr.mxu0 0.0
  %739 = vmatpush1.msra.mxu0 0.0
  %740 = vmatprep.subr.mxu0 0.0
  %741 = vmatpush1.msra.mxu0 0.0
  %742 = vmatprep.subr.mxu0 0.0
  %743 = vmatpush1.msra.mxu0 0.0
  %744 = vmatprep.subr.mxu0 0.0
  %745 = vmatpush1.msra.mxu0 0.0
  %746 = vmatprep.subr.mxu0 0.0
  %747 = vmatpush1.msra.mxu0 0.0
  %748 = vmatprep.subr.mxu0 0.0
  %749 = vmatpush1.msra.mxu0 0.0
  %750 = vmatprep.subr.mxu0 0.0
  %751 = vmatpush1.msra.mxu0 0.0
  %752 = vmatprep.subr.mxu0 0.0
  %753 = vmatpush1.msra.mxu0 0.0
  %754 = vmatprep.subr.mxu0 0.0
  %755 = vmatpush1.msra.mxu0 0.0
  %756 = vmatprep.subr.mxu0 0.0
  %757 = vmatpush1.msra.mxu0 0.0
  %758 = vmatprep.subr.mxu0 0.0
  %759 = vmatpush1.msra.mxu0 0.0
  %760 = vmatprep.subr.mxu0 0.0
  %761 = vmatpush1.msra.mxu0 0.0
  %762 = vmatprep.subr.mxu0 0.0
  %763 = vmatpush1.msra.mxu0 0.0
  %764 = vmatprep.mubr.f32.mxu0 0.0
  %765 = vmatmul.mubr.f32.gmra.mrb[0].mxu0 %v695
  %v766 = vpop.f32.mrb[0].mxu0
  %v767 = vadd.f32 0.0, %v766
  %v768 = vpop.f32.mrb[0].mxu0
  %769 = vmatprep.mubr.f32.mxu0 0.0
  %770 = vmatmul.mubr.f32.gmra.mrb[0].mxu0 %v698
  %v771 = vpop.f32.mrb[0].mxu0
  %v772 = vadd.f32 0.0, %v771
  %v773 = vpop.f32.mrb[0].mxu0
  %774 = vdwg.mxu0
  %v775 = vlaneseq
  %v776 = vshrl.u32 %v775, 7
  %v777 = vsub.s32 4, %v776
  %v778 = vrot.slane %v228, %v777
  %v779 = vmul.f32 %v767, %v778
  %v780 = vmul.f32 %v772, %v778
  %v781 = vadd.f32 %v676, %v779
  %v782 = vadd.f32 %v677, %v780
  %v783 = vadd.s32 %v260, 2
  %v784 = vadd.s32 %v261, 2
  %v785 = vadd.s32 %v256, 2
  %v786 = vadd.s32 %v257, 2
  %vm787 = vcmp.eq.s32.totalorder %v259, %v785
  %vm788 = vcmp.eq.s32.totalorder %v259, %v786
  %vm789 = vcmp.ge.s32.totalorder %v783, 0
  %vm790 = vcmp.ge.s32.totalorder %v784, 0
  %vm791 = vmand %vm787, %vm789
  %vm792 = vmand %vm788, %vm790
  %vm793 = vcmp.lt.s32.totalorder %v783, 8
  %vm794 = vcmp.lt.s32.totalorder %v784, 8
  %vm795 = vmand %vm791, %vm793
  %vm796 = vmand %vm792, %vm794
  %v797 = vsel %vm795, 1.0, 0.0
  %v798 = vsel %vm796, 1.0, 0.0
  %v800 = vsel %vm102, %v797, 0
  %v803 = vsel %vm102, %v798, 0
  %805 = vmatprep.subr.mxu0 0.0
  %806 = vmatpush1.msra.mxu0 %v226
  %807 = vmatprep.subr.mxu0 0.0
  %808 = vmatpush1.msra.mxu0 %v227
  %809 = vmatprep.subr.mxu0 0.0
  %810 = vmatpush1.msra.mxu0 0.0
  %811 = vmatprep.subr.mxu0 0.0
  %812 = vmatpush1.msra.mxu0 0.0
  %813 = vmatprep.subr.mxu0 0.0
  %814 = vmatpush1.msra.mxu0 0.0
  %815 = vmatprep.subr.mxu0 0.0
  %816 = vmatpush1.msra.mxu0 0.0
  %817 = vmatprep.subr.mxu0 0.0
  %818 = vmatpush1.msra.mxu0 0.0
  %819 = vmatprep.subr.mxu0 0.0
  %820 = vmatpush1.msra.mxu0 0.0
  %821 = vmatprep.subr.mxu0 0.0
  %822 = vmatpush1.msra.mxu0 0.0
  %823 = vmatprep.subr.mxu0 0.0
  %824 = vmatpush1.msra.mxu0 0.0
  %825 = vmatprep.subr.mxu0 0.0
  %826 = vmatpush1.msra.mxu0 0.0
  %827 = vmatprep.subr.mxu0 0.0
  %828 = vmatpush1.msra.mxu0 0.0
  %829 = vmatprep.subr.mxu0 0.0
  %830 = vmatpush1.msra.mxu0 0.0
  %831 = vmatprep.subr.mxu0 0.0
  %832 = vmatpush1.msra.mxu0 0.0
  %833 = vmatprep.subr.mxu0 0.0
  %834 = vmatpush1.msra.mxu0 0.0
  %835 = vmatprep.subr.mxu0 0.0
  %836 = vmatpush1.msra.mxu0 0.0
  %837 = vmatprep.subr.mxu0 0.0
  %838 = vmatpush1.msra.mxu0 0.0
  %839 = vmatprep.subr.mxu0 0.0
  %840 = vmatpush1.msra.mxu0 0.0
  %841 = vmatprep.subr.mxu0 0.0
  %842 = vmatpush1.msra.mxu0 0.0
  %843 = vmatprep.subr.mxu0 0.0
  %844 = vmatpush1.msra.mxu0 0.0
  %845 = vmatprep.subr.mxu0 0.0
  %846 = vmatpush1.msra.mxu0 0.0
  %847 = vmatprep.subr.mxu0 0.0
  %848 = vmatpush1.msra.mxu0 0.0
  %849 = vmatprep.subr.mxu0 0.0
  %850 = vmatpush1.msra.mxu0 0.0
  %851 = vmatprep.subr.mxu0 0.0
  %852 = vmatpush1.msra.mxu0 0.0
  %853 = vmatprep.subr.mxu0 0.0
  %854 = vmatpush1.msra.mxu0 0.0
  %855 = vmatprep.subr.mxu0 0.0
  %856 = vmatpush1.msra.mxu0 0.0
  %857 = vmatprep.subr.mxu0 0.0
  %858 = vmatpush1.msra.mxu0 0.0
  %859 = vmatprep.subr.mxu0 0.0
  %860 = vmatpush1.msra.mxu0 0.0
  %861 = vmatprep.subr.mxu0 0.0
  %862 = vmatpush1.msra.mxu0 0.0
  %863 = vmatprep.subr.mxu0 0.0
  %864 = vmatpush1.msra.mxu0 0.0
  %865 = vmatprep.subr.mxu0 0.0
  %866 = vmatpush1.msra.mxu0 0.0
  %867 = vmatprep.subr.mxu0 0.0
  %868 = vmatpush1.msra.mxu0 0.0
  %869 = vmatprep.mubr.f32.mxu0 0.0
  %870 = vmatmul.mubr.f32.gmra.mrb[0].mxu0 %v800
  %v871 = vpop.f32.mrb[0].mxu0
  %v872 = vadd.f32 0.0, %v871
  %v873 = vpop.f32.mrb[0].mxu0
  %874 = vmatprep.mubr.f32.mxu0 0.0
  %875 = vmatmul.mubr.f32.gmra.mrb[0].mxu0 %v803
  %v876 = vpop.f32.mrb[0].mxu0
  %v877 = vadd.f32 0.0, %v876
  %v878 = vpop.f32.mrb[0].mxu0
  %879 = vdwg.mxu0
  %v880 = vlaneseq
  %v881 = vshrl.u32 %v880, 7
  %v882 = vsub.s32 5, %v881
  %v883 = vrot.slane %v228, %v882
  %v884 = vmul.f32 %v872, %v883
  %v885 = vmul.f32 %v877, %v883
  %v886 = vadd.f32 %v781, %v884
  %v887 = vadd.f32 %v782, %v885
  %v888 = vadd.s32 %v260, 3
  %v889 = vadd.s32 %v261, 3
  %v890 = vadd.s32 %v256, 3
  %v891 = vadd.s32 %v257, 3
  %vm892 = vcmp.eq.s32.totalorder %v259, %v890
  %vm893 = vcmp.eq.s32.totalorder %v259, %v891
  %vm894 = vcmp.ge.s32.totalorder %v888, 0
  %vm895 = vcmp.ge.s32.totalorder %v889, 0
  %vm896 = vmand %vm892, %vm894
  %vm897 = vmand %vm893, %vm895
  %vm898 = vcmp.lt.s32.totalorder %v888, 8
  %vm899 = vcmp.lt.s32.totalorder %v889, 8
  %vm900 = vmand %vm896, %vm898
  %vm901 = vmand %vm897, %vm899
  %v902 = vsel %vm900, 1.0, 0.0
  %v903 = vsel %vm901, 1.0, 0.0
  %v905 = vsel %vm102, %v902, 0
  %v908 = vsel %vm102, %v903, 0
  %910 = vmatprep.subr.mxu0 0.0
  %911 = vmatpush1.msra.mxu0 %v226
  %912 = vmatprep.subr.mxu0 0.0
  %913 = vmatpush1.msra.mxu0 %v227
  %914 = vmatprep.subr.mxu0 0.0
  %915 = vmatpush1.msra.mxu0 0.0
  %916 = vmatprep.subr.mxu0 0.0
  %917 = vmatpush1.msra.mxu0 0.0
  %918 = vmatprep.subr.mxu0 0.0
  %919 = vmatpush1.msra.mxu0 0.0
  %920 = vmatprep.subr.mxu0 0.0
  %921 = vmatpush1.msra.mxu0 0.0
  %922 = vmatprep.subr.mxu0 0.0
  %923 = vmatpush1.msra.mxu0 0.0
  %924 = vmatprep.subr.mxu0 0.0
  %925 = vmatpush1.msra.mxu0 0.0
  %926 = vmatprep.subr.mxu0 0.0
  %927 = vmatpush1.msra.mxu0 0.0
  %928 = vmatprep.subr.mxu0 0.0
  %929 = vmatpush1.msra.mxu0 0.0
  %930 = vmatprep.subr.mxu0 0.0
  %931 = vmatpush1.msra.mxu0 0.0
  %932 = vmatprep.subr.mxu0 0.0
  %933 = vmatpush1.msra.mxu0 0.0
  %934 = vmatprep.subr.mxu0 0.0
  %935 = vmatpush1.msra.mxu0 0.0
  %936 = vmatprep.subr.mxu0 0.0
  %937 = vmatpush1.msra.mxu0 0.0
  %938 = vmatprep.subr.mxu0 0.0
  %939 = vmatpush1.msra.mxu0 0.0
  %940 = vmatprep.subr.mxu0 0.0
  %941 = vmatpush1.msra.mxu0 0.0
  %942 = vmatprep.subr.mxu0 0.0
  %943 = vmatpush1.msra.mxu0 0.0
  %944 = vmatprep.subr.mxu0 0.0
  %945 = vmatpush1.msra.mxu0 0.0
  %946 = vmatprep.subr.mxu0 0.0
  %947 = vmatpush1.msra.mxu0 0.0
  %948 = vmatprep.subr.mxu0 0.0
  %949 = vmatpush1.msra.mxu0 0.0
  %950 = vmatprep.subr.mxu0 0.0
  %951 = vmatpush1.msra.mxu0 0.0
  %952 = vmatprep.subr.mxu0 0.0
  %953 = vmatpush1.msra.mxu0 0.0
  %954 = vmatprep.subr.mxu0 0.0
  %955 = vmatpush1.msra.mxu0 0.0
  %956 = vmatprep.subr.mxu0 0.0
  %957 = vmatpush1.msra.mxu0 0.0
  %958 = vmatprep.subr.mxu0 0.0
  %959 = vmatpush1.msra.mxu0 0.0
  %960 = vmatprep.subr.mxu0 0.0
  %961 = vmatpush1.msra.mxu0 0.0
  %962 = vmatprep.subr.mxu0 0.0
  %963 = vmatpush1.msra.mxu0 0.0
  %964 = vmatprep.subr.mxu0 0.0
  %965 = vmatpush1.msra.mxu0 0.0
  %966 = vmatprep.subr.mxu0 0.0
  %967 = vmatpush1.msra.mxu0 0.0
  %968 = vmatprep.subr.mxu0 0.0
  %969 = vmatpush1.msra.mxu0 0.0
  %970 = vmatprep.subr.mxu0 0.0
  %971 = vmatpush1.msra.mxu0 0.0
  %972 = vmatprep.subr.mxu0 0.0
  %973 = vmatpush1.msra.mxu0 0.0
  %974 = vmatprep.mubr.f32.mxu0 0.0
  %975 = vmatmul.mubr.f32.gmra.mrb[0].mxu0 %v905
  %v976 = vpop.f32.mrb[0].mxu0
  %v977 = vadd.f32 0.0, %v976
  %v978 = vpop.f32.mrb[0].mxu0
  %979 = vmatprep.mubr.f32.mxu0 0.0
  %980 = vmatmul.mubr.f32.gmra.mrb[0].mxu0 %v908
  %v981 = vpop.f32.mrb[0].mxu0
  %v982 = vadd.f32 0.0, %v981
  %v983 = vpop.f32.mrb[0].mxu0
  %984 = vdwg.mxu0
  %v985 = vlaneseq
  %v986 = vshrl.u32 %v985, 7
  %v987 = vsub.s32 6, %v986
  %v988 = vrot.slane %v228, %v987
  %v989 = vmul.f32 %v977, %v988
  %v990 = vmul.f32 %v982, %v988
  %v991 = vadd.f32 %v886, %v989
  %v992 = vadd.f32 %v887, %v990
  %v994 = vlaneseq
  %v995 = vshrl.u32 %v994, 7
  %v996 = vsub.s32 0, %v995
  %v997 = vrot.slane %v229, %v996
  %v999 = vadd.f32 %v991, %v997
  %v1000 = vadd.f32 %v992, %v997
  %v1001 = vsel %vm184, %v999, 0.0
  %1002 = vadd.xlane.f32.xlu0 %v1001
  %v1003 = vpop.xlane.xlu0 %1002
  %v1004 = vsel %vm184, %v1000, 0.0
  %1005 = vadd.xlane.f32.xlu0 %v1004
  %v1006 = vpop.xlane.xlu0 %1005
  %v1007 = vmul.f32 %v1003, %v191
  %v1008 = vmul.f32 %v1006, %v191
  %v1009 = vsub.f32 %v999, %v1007
  %v1010 = vsub.f32 %v1000, %v1008
  %v1011 = vmul.f32 %v1009, %v1009
  %v1012 = vmul.f32 %v1010, %v1010
  %v1013 = vsel %vm184, %v1011, 0.0
  %1014 = vadd.xlane.f32.xlu0 %v1013
  %v1015 = vpop.xlane.xlu0 %1014
  %v1016 = vsel %vm184, %v1012, 0.0
  %1017 = vadd.xlane.f32.xlu0 %v1016
  %v1018 = vpop.xlane.xlu0 %1017
  %v1019 = vmul.f32 %v1015, %v191
  %v1020 = vmul.f32 %v1018, %v191
  %v1021 = vadd.f32 %v1019, 1e-06
  %v1022 = vadd.f32 %v1020, 1e-06
  %v1023 = vrsqrt.pop %v1021
  %v1024 = vrsqrt.pop %v1022
  %v1025 = vmul.f32 %v1009, %v1023
  %v1026 = vmul.f32 %v1010, %v1024
  %v1028 = vlaneseq
  %v1029 = vshrl.u32 %v1028, 7
  %v1030 = vsub.s32 0, %v1029
  %v1031 = vrot.slane %v230, %v1030
  %v1033 = vmul.f32 %v1025, %v1031
  %v1034 = vmul.f32 %v1026, %v1031
  %v1036 = vlaneseq
  %v1037 = vshrl.u32 %v1036, 7
  %v1038 = vsub.s32 0, %v1037
  %v1039 = vrot.slane %v231, %v1038
  %v1041 = vadd.f32 %v1033, %v1039
  %v1042 = vadd.f32 %v1034, %v1039
  %v1044 = vlaneseq
  %v1045 = vshrl.u32 %v1044, 7
  %v1046 = vsub.s32 0, %v1045
  %v1047 = vrot.slane %v236, %v1046
  %v1050 = vsel %vm184, %v1041, 0
  %v1053 = vsel %vm184, %v1042, 0
  %1055 = vmatprep.subr.mxu0 0.0
  %1056 = vmatpush1.msra.mxu0 %v232
  %1057 = vmatprep.subr.mxu0 0.0
  %1058 = vmatpush1.msra.mxu0 %v233
  %1059 = vmatprep.subr.mxu0 0.0
  %1060 = vmatpush1.msra.mxu0 %v234
  %1061 = vmatprep.subr.mxu0 0.0
  %1062 = vmatpush1.msra.mxu0 %v235
  %1063 = vmatprep.subr.mxu0 0.0
  %1064 = vmatpush1.msra.mxu0 0.0
  %1065 = vmatprep.subr.mxu0 0.0
  %1066 = vmatpush1.msra.mxu0 0.0
  %1067 = vmatprep.subr.mxu0 0.0
  %1068 = vmatpush1.msra.mxu0 0.0
  %1069 = vmatprep.subr.mxu0 0.0
  %1070 = vmatpush1.msra.mxu0 0.0
  %1071 = vmatprep.subr.mxu0 0.0
  %1072 = vmatpush1.msra.mxu0 0.0
  %1073 = vmatprep.subr.mxu0 0.0
  %1074 = vmatpush1.msra.mxu0 0.0
  %1075 = vmatprep.subr.mxu0 0.0
  %1076 = vmatpush1.msra.mxu0 0.0
  %1077 = vmatprep.subr.mxu0 0.0
  %1078 = vmatpush1.msra.mxu0 0.0
  %1079 = vmatprep.subr.mxu0 0.0
  %1080 = vmatpush1.msra.mxu0 0.0
  %1081 = vmatprep.subr.mxu0 0.0
  %1082 = vmatpush1.msra.mxu0 0.0
  %1083 = vmatprep.subr.mxu0 0.0
  %1084 = vmatpush1.msra.mxu0 0.0
  %1085 = vmatprep.subr.mxu0 0.0
  %1086 = vmatpush1.msra.mxu0 0.0
  %1087 = vmatprep.subr.mxu0 0.0
  %1088 = vmatpush1.msra.mxu0 0.0
  %1089 = vmatprep.subr.mxu0 0.0
  %1090 = vmatpush1.msra.mxu0 0.0
  %1091 = vmatprep.subr.mxu0 0.0
  %1092 = vmatpush1.msra.mxu0 0.0
  %1093 = vmatprep.subr.mxu0 0.0
  %1094 = vmatpush1.msra.mxu0 0.0
  %1095 = vmatprep.subr.mxu0 0.0
  %1096 = vmatpush1.msra.mxu0 0.0
  %1097 = vmatprep.subr.mxu0 0.0
  %1098 = vmatpush1.msra.mxu0 0.0
  %1099 = vmatprep.subr.mxu0 0.0
  %1100 = vmatpush1.msra.mxu0 0.0
  %1101 = vmatprep.subr.mxu0 0.0
  %1102 = vmatpush1.msra.mxu0 0.0
  %1103 = vmatprep.subr.mxu0 0.0
  %1104 = vmatpush1.msra.mxu0 0.0
  %1105 = vmatprep.subr.mxu0 0.0
  %1106 = vmatpush1.msra.mxu0 0.0
  %1107 = vmatprep.subr.mxu0 0.0
  %1108 = vmatpush1.msra.mxu0 0.0
  %1109 = vmatprep.subr.mxu0 0.0
  %1110 = vmatpush1.msra.mxu0 0.0
  %1111 = vmatprep.subr.mxu0 0.0
  %1112 = vmatpush1.msra.mxu0 0.0
  %1113 = vmatprep.subr.mxu0 0.0
  %1114 = vmatpush1.msra.mxu0 0.0
  %1115 = vmatprep.subr.mxu0 0.0
  %1116 = vmatpush1.msra.mxu0 0.0
  %1117 = vmatprep.subr.mxu0 0.0
  %1118 = vmatpush1.msra.mxu0 0.0
  %1119 = vmatprep.mubr.f32.mxu0 0.0
  %1120 = vmatmul.mubr.f32.gmra.mrb[0].mxu0 %v1050
  %v1121 = vpop.f32.mrb[0].mxu0
  %v1122 = vadd.f32 %v1047, %v1121
  %v1123 = vpop.f32.mrb[0].mxu0
  %1124 = vmatprep.mubr.f32.mxu0 0.0
  %1125 = vmatmul.mubr.f32.gmra.mrb[0].mxu0 %v1053
  %v1126 = vpop.f32.mrb[0].mxu0
  %v1127 = vadd.f32 %v1047, %v1126
  %v1128 = vpop.f32.mrb[0].mxu0
  %1129 = vdwg.mxu0
  %v1130 = vmul.f32 %v1122, 0.5
  %v1131 = vmul.f32 %v1127, 0.5
  %v1132 = vmul.f32 %v1122, 0.70710677
  %v1133 = vmul.f32 %v1127, 0.70710677
  %v1134 = vand.u32 2147483647, %v1132
  %v1135 = vand.u32 2147483647, %v1133
  %v1136 = vmul.f32 %v1134, 0.3275911
  %v1137 = vmul.f32 %v1135, 0.3275911
  %v1138 = vadd.f32 %v1136, 1.0
  %v1139 = vadd.f32 %v1137, 1.0
  %v1140 = vrcp.pop %v1138
  %v1141 = vmul.f32 1.0, %v1140
  %v1142 = vrcp.pop %v1139
  %v1143 = vmul.f32 1.0, %v1142
  %v1144 = vmul.f32 %v1141, 1.0614054
  %v1145 = vmul.f32 %v1143, 1.0614054
  %v1146 = vadd.f32 %v1144, -1.4531521
  %v1147 = vadd.f32 %v1145, -1.4531521
  %v1148 = vmul.f32 %v1141, %v1146
  %v1149 = vmul.f32 %v1143, %v1147
  %v1150 = vadd.f32 %v1148, 1.4214138
  %v1151 = vadd.f32 %v1149, 1.4214138
  %v1152 = vmul.f32 %v1141, %v1150
  %v1153 = vmul.f32 %v1143, %v1151
  %v1154 = vadd.f32 %v1152, -0.28449672
  %v1155 = vadd.f32 %v1153, -0.28449672
  %v1156 = vmul.f32 %v1141, %v1154
  %v1157 = vmul.f32 %v1143, %v1155
  %v1158 = vadd.f32 %v1156, 0.2548296
  %v1159 = vadd.f32 %v1157, 0.2548296
  %v1160 = vmul.f32 %v1141, %v1158
  %v1161 = vmul.f32 %v1143, %v1159
  %v1162 = vsub.f32 0.0, %v1132
  %v1163 = vsub.f32 0.0, %v1133
  %v1164 = vmul.f32 %v1162, %v1132
  %v1165 = vmul.f32 %v1163, %v1133
  %v1166 = vmul.f32 %v1164, 1.442695
  %v1167 = vpow.pop %v1166
  %v1168 = vmul.f32 %v1165, 1.442695
  %v1169 = vpow.pop %v1168
  %v1170 = vmul.f32 %v1160, %v1167
  %v1171 = vmul.f32 %v1161, %v1169
  %v1172 = vsub.f32 1.0, %v1170
  %v1173 = vsub.f32 1.0, %v1171
  %vm1174 = vcmp.ge.f32.partialorder %v1132, 0.0
  %vm1175 = vcmp.ge.f32.partialorder %v1133, 0.0
  %v1176 = vsub.f32 0.0, %v1172
  %v1177 = vsub.f32 0.0, %v1173
  %v1178 = vsel %vm1174, %v1172, %v1176
  %v1179 = vsel %vm1175, %v1173, %v1177
  %v1180 = vadd.f32 %v1178, 1.0
  %v1181 = vadd.f32 %v1179, 1.0
  %v1182 = vmul.f32 %v1130, %v1180
  %v1183 = vmul.f32 %v1131, %v1181
  %v1185 = vlaneseq
  %v1186 = vshrl.u32 %v1185, 7
  %v1187 = vsub.s32 0, %v1186
  %v1188 = vrot.slane %v253, %v1187
  %1190 = vmatprep.subr.mxu0 0.0
  %1191 = vmatpush1.msra.mxu0 %v237
  %1192 = vmatprep.subr.mxu0 0.0
  %1193 = vmatpush1.msra.mxu0 %v238
  %1194 = vmatprep.subr.mxu0 0.0
  %1195 = vmatpush1.msra.mxu0 %v239
  %1196 = vmatprep.subr.mxu0 0.0
  %1197 = vmatpush1.msra.mxu0 %v240
  %1198 = vmatprep.subr.mxu0 0.0
  %1199 = vmatpush1.msra.mxu0 %v241
  %1200 = vmatprep.subr.mxu0 0.0
  %1201 = vmatpush1.msra.mxu0 %v242
  %1202 = vmatprep.subr.mxu0 0.0
  %1203 = vmatpush1.msra.mxu0 %v243
  %1204 = vmatprep.subr.mxu0 0.0
  %1205 = vmatpush1.msra.mxu0 %v244
  %1206 = vmatprep.subr.mxu0 0.0
  %1207 = vmatpush1.msra.mxu0 %v245
  %1208 = vmatprep.subr.mxu0 0.0
  %1209 = vmatpush1.msra.mxu0 %v246
  %1210 = vmatprep.subr.mxu0 0.0
  %1211 = vmatpush1.msra.mxu0 %v247
  %1212 = vmatprep.subr.mxu0 0.0
  %1213 = vmatpush1.msra.mxu0 %v248
  %1214 = vmatprep.subr.mxu0 0.0
  %1215 = vmatpush1.msra.mxu0 %v249
  %1216 = vmatprep.subr.mxu0 0.0
  %1217 = vmatpush1.msra.mxu0 %v250
  %1218 = vmatprep.subr.mxu0 0.0
  %1219 = vmatpush1.msra.mxu0 %v251
  %1220 = vmatprep.subr.mxu0 0.0
  %1221 = vmatpush1.msra.mxu0 %v252
  %1222 = vmatprep.subr.mxu0 0.0
  %1223 = vmatpush1.msra.mxu0 0.0
  %1224 = vmatprep.subr.mxu0 0.0
  %1225 = vmatpush1.msra.mxu0 0.0
  %1226 = vmatprep.subr.mxu0 0.0
  %1227 = vmatpush1.msra.mxu0 0.0
  %1228 = vmatprep.subr.mxu0 0.0
  %1229 = vmatpush1.msra.mxu0 0.0
  %1230 = vmatprep.subr.mxu0 0.0
  %1231 = vmatpush1.msra.mxu0 0.0
  %1232 = vmatprep.subr.mxu0 0.0
  %1233 = vmatpush1.msra.mxu0 0.0
  %1234 = vmatprep.subr.mxu0 0.0
  %1235 = vmatpush1.msra.mxu0 0.0
  %1236 = vmatprep.subr.mxu0 0.0
  %1237 = vmatpush1.msra.mxu0 0.0
  %1238 = vmatprep.subr.mxu0 0.0
  %1239 = vmatpush1.msra.mxu0 0.0
  %1240 = vmatprep.subr.mxu0 0.0
  %1241 = vmatpush1.msra.mxu0 0.0
  %1242 = vmatprep.subr.mxu0 0.0
  %1243 = vmatpush1.msra.mxu0 0.0
  %1244 = vmatprep.subr.mxu0 0.0
  %1245 = vmatpush1.msra.mxu0 0.0
  %1246 = vmatprep.subr.mxu0 0.0
  %1247 = vmatpush1.msra.mxu0 0.0
  %1248 = vmatprep.subr.mxu0 0.0
  %1249 = vmatpush1.msra.mxu0 0.0
  %1250 = vmatprep.subr.mxu0 0.0
  %1251 = vmatpush1.msra.mxu0 0.0
  %1252 = vmatprep.subr.mxu0 0.0
  %1253 = vmatpush1.msra.mxu0 0.0
  %1254 = vmatprep.mubr.f32.mxu0 0.0
  %1255 = vmatmul.mubr.f32.gmra.mrb[0].mxu0 %v1182
  %v1256 = vpop.f32.mrb[0].mxu0
  %v1257 = vadd.f32 %v1188, %v1256
  %v1258 = vpop.f32.mrb[0].mxu0
  %1259 = vmatprep.mubr.f32.mxu0 0.0
  %1260 = vmatmul.mubr.f32.gmra.mrb[0].mxu0 %v1183
  %v1261 = vpop.f32.mrb[0].mxu0
  %v1262 = vadd.f32 %v1188, %v1261
  %v1263 = vpop.f32.mrb[0].mxu0
  %1264 = vdwg.mxu0
  %v1266 = vlaneseq
  %v1267 = vshrl.u32 %v1266, 7
  %v1268 = vsub.s32 0, %v1267
  %v1269 = vrot.slane %v254, %v1268
  %v1271 = vmul.f32 %v1269, %v1257
  %v1272 = vmul.f32 %v1269, %v1262
  %v1273 = vadd.f32 %v226, %v1271
  %v1274 = vadd.f32 %v227, %v1272
  %v1275 = vld [vmem:[%s14] sm:$0x1]
  %v1276 = vld [vmem:[%s15] sm:$0x1]
  %v1277 = vld [vmem:[%s16] sm:$0xff]
  %v1278 = vld [vmem:[%s16 + $0x8] sm:$0xff]
  %v1279 = vld [vmem:[%s16 + $0x10] sm:$0xff]
  %v1280 = vld [vmem:[%s16 + $0x18] sm:$0xff]
  %v1281 = vld [vmem:[%s17] sm:$0xff]
  %v1282 = vld [vmem:[%s17 + $0x8] sm:$0xff]
  %v1283 = vld [vmem:[%s17 + $0x10] sm:$0xff]
  %v1284 = vld [vmem:[%s17 + $0x18] sm:$0xff]
  %v1285 = vld [vmem:[%s18] sm:$0x1]
  %v1286 = vsel %vm184, %v1273, 0.0
  %1287 = vadd.xlane.f32.xlu0 %v1286
  %v1288 = vpop.xlane.xlu0 %1287
  %v1289 = vsel %vm184, %v1274, 0.0
  %1290 = vadd.xlane.f32.xlu0 %v1289
  %v1291 = vpop.xlane.xlu0 %1290
  %v1292 = vmul.f32 %v1288, %v191
  %v1293 = vmul.f32 %v1291, %v191
  %v1294 = vsub.f32 %v1273, %v1292
  %v1295 = vsub.f32 %v1274, %v1293
  %v1296 = vmul.f32 %v1294, %v1294
  %v1297 = vmul.f32 %v1295, %v1295
  %v1298 = vsel %vm184, %v1296, 0.0
  %1299 = vadd.xlane.f32.xlu0 %v1298
  %v1300 = vpop.xlane.xlu0 %1299
  %v1301 = vsel %vm184, %v1297, 0.0
  %1302 = vadd.xlane.f32.xlu0 %v1301
  %v1303 = vpop.xlane.xlu0 %1302
  %v1304 = vmul.f32 %v1300, %v191
  %v1305 = vmul.f32 %v1303, %v191
  %v1306 = vadd.f32 %v1304, 1e-06
  %v1307 = vadd.f32 %v1305, 1e-06
  %v1308 = vrsqrt.pop %v1306
  %v1309 = vrsqrt.pop %v1307
  %v1310 = vmul.f32 %v1294, %v1308
  %v1311 = vmul.f32 %v1295, %v1309
  %v1313 = vlaneseq
  %v1314 = vshrl.u32 %v1313, 7
  %v1315 = vsub.s32 0, %v1314
  %v1316 = vrot.slane %v1275, %v1315
  %v1318 = vmul.f32 %v1310, %v1316
  %v1319 = vmul.f32 %v1311, %v1316
  %v1321 = vlaneseq
  %v1322 = vshrl.u32 %v1321, 7
  %v1323 = vsub.s32 0, %v1322
  %v1324 = vrot.slane %v1276, %v1323
  %v1326 = vadd.f32 %v1318, %v1324
  %v1327 = vadd.f32 %v1319, %v1324
  %v1328 = vmul.u32 %v256, 2
  %vm1329 = vcmp.eq.s32.totalorder %v259, %v1328
  %v1330 = vsel %vm1329, 1.0, 0.0
  %v1332 = vsel %vm102, %v1330, 0
  %1334 = vmatprep.subr.mxu0 0.0
  %1335 = vmatpush1.msra.mxu0 %v1326
  %1336 = vmatprep.subr.mxu0 0.0
  %1337 = vmatpush1.msra.mxu0 %v1327
  %1338 = vmatprep.subr.mxu0 0.0
  %1339 = vmatpush1.msra.mxu0 0.0
  %1340 = vmatprep.subr.mxu0 0.0
  %1341 = vmatpush1.msra.mxu0 0.0
  %1342 = vmatprep.subr.mxu0 0.0
  %1343 = vmatpush1.msra.mxu0 0.0
  %1344 = vmatprep.subr.mxu0 0.0
  %1345 = vmatpush1.msra.mxu0 0.0
  %1346 = vmatprep.subr.mxu0 0.0
  %1347 = vmatpush1.msra.mxu0 0.0
  %1348 = vmatprep.subr.mxu0 0.0
  %1349 = vmatpush1.msra.mxu0 0.0
  %1350 = vmatprep.subr.mxu0 0.0
  %1351 = vmatpush1.msra.mxu0 0.0
  %1352 = vmatprep.subr.mxu0 0.0
  %1353 = vmatpush1.msra.mxu0 0.0
  %1354 = vmatprep.subr.mxu0 0.0
  %1355 = vmatpush1.msra.mxu0 0.0
  %1356 = vmatprep.subr.mxu0 0.0
  %1357 = vmatpush1.msra.mxu0 0.0
  %1358 = vmatprep.subr.mxu0 0.0
  %1359 = vmatpush1.msra.mxu0 0.0
  %1360 = vmatprep.subr.mxu0 0.0
  %1361 = vmatpush1.msra.mxu0 0.0
  %1362 = vmatprep.subr.mxu0 0.0
  %1363 = vmatpush1.msra.mxu0 0.0
  %1364 = vmatprep.subr.mxu0 0.0
  %1365 = vmatpush1.msra.mxu0 0.0
  %1366 = vmatprep.subr.mxu0 0.0
  %1367 = vmatpush1.msra.mxu0 0.0
  %1368 = vmatprep.subr.mxu0 0.0
  %1369 = vmatpush1.msra.mxu0 0.0
  %1370 = vmatprep.subr.mxu0 0.0
  %1371 = vmatpush1.msra.mxu0 0.0
  %1372 = vmatprep.subr.mxu0 0.0
  %1373 = vmatpush1.msra.mxu0 0.0
  %1374 = vmatprep.subr.mxu0 0.0
  %1375 = vmatpush1.msra.mxu0 0.0
  %1376 = vmatprep.subr.mxu0 0.0
  %1377 = vmatpush1.msra.mxu0 0.0
  %1378 = vmatprep.subr.mxu0 0.0
  %1379 = vmatpush1.msra.mxu0 0.0
  %1380 = vmatprep.subr.mxu0 0.0
  %1381 = vmatpush1.msra.mxu0 0.0
  %1382 = vmatprep.subr.mxu0 0.0
  %1383 = vmatpush1.msra.mxu0 0.0
  %1384 = vmatprep.subr.mxu0 0.0
  %1385 = vmatpush1.msra.mxu0 0.0
  %1386 = vmatprep.subr.mxu0 0.0
  %1387 = vmatpush1.msra.mxu0 0.0
  %1388 = vmatprep.subr.mxu0 0.0
  %1389 = vmatpush1.msra.mxu0 0.0
  %1390 = vmatprep.subr.mxu0 0.0
  %1391 = vmatpush1.msra.mxu0 0.0
  %1392 = vmatprep.subr.mxu0 0.0
  %1393 = vmatpush1.msra.mxu0 0.0
  %1394 = vmatprep.subr.mxu0 0.0
  %1395 = vmatpush1.msra.mxu0 0.0
  %1396 = vmatprep.subr.mxu0 0.0
  %1397 = vmatpush1.msra.mxu0 0.0
  %1398 = vmatprep.mubr.f32.mxu0 0.0
  %1399 = vmatmul.mubr.f32.gmra.mrb[0].mxu0 %v1332
  %v1400 = vpop.f32.mrb[0].mxu0
  %v1401 = vadd.f32 0.0, %v1400
  %v1402 = vpop.f32.mrb[0].mxu0
  %1403 = vdwg.mxu0
  %v1404 = vadd.s32 %v1328, 1
  %vm1405 = vcmp.eq.s32.totalorder %v259, %v1404
  %v1406 = vsel %vm1405, 1.0, 0.0
  %v1408 = vsel %vm102, %v1406, 0
  %1410 = vmatprep.subr.mxu0 0.0
  %1411 = vmatpush1.msra.mxu0 %v1326
  %1412 = vmatprep.subr.mxu0 0.0
  %1413 = vmatpush1.msra.mxu0 %v1327
  %1414 = vmatprep.subr.mxu0 0.0
  %1415 = vmatpush1.msra.mxu0 0.0
  %1416 = vmatprep.subr.mxu0 0.0
  %1417 = vmatpush1.msra.mxu0 0.0
  %1418 = vmatprep.subr.mxu0 0.0
  %1419 = vmatpush1.msra.mxu0 0.0
  %1420 = vmatprep.subr.mxu0 0.0
  %1421 = vmatpush1.msra.mxu0 0.0
  %1422 = vmatprep.subr.mxu0 0.0
  %1423 = vmatpush1.msra.mxu0 0.0
  %1424 = vmatprep.subr.mxu0 0.0
  %1425 = vmatpush1.msra.mxu0 0.0
  %1426 = vmatprep.subr.mxu0 0.0
  %1427 = vmatpush1.msra.mxu0 0.0
  %1428 = vmatprep.subr.mxu0 0.0
  %1429 = vmatpush1.msra.mxu0 0.0
  %1430 = vmatprep.subr.mxu0 0.0
  %1431 = vmatpush1.msra.mxu0 0.0
  %1432 = vmatprep.subr.mxu0 0.0
  %1433 = vmatpush1.msra.mxu0 0.0
  %1434 = vmatprep.subr.mxu0 0.0
  %1435 = vmatpush1.msra.mxu0 0.0
  %1436 = vmatprep.subr.mxu0 0.0
  %1437 = vmatpush1.msra.mxu0 0.0
  %1438 = vmatprep.subr.mxu0 0.0
  %1439 = vmatpush1.msra.mxu0 0.0
  %1440 = vmatprep.subr.mxu0 0.0
  %1441 = vmatpush1.msra.mxu0 0.0
  %1442 = vmatprep.subr.mxu0 0.0
  %1443 = vmatpush1.msra.mxu0 0.0
  %1444 = vmatprep.subr.mxu0 0.0
  %1445 = vmatpush1.msra.mxu0 0.0
  %1446 = vmatprep.subr.mxu0 0.0
  %1447 = vmatpush1.msra.mxu0 0.0
  %1448 = vmatprep.subr.mxu0 0.0
  %1449 = vmatpush1.msra.mxu0 0.0
  %1450 = vmatprep.subr.mxu0 0.0
  %1451 = vmatpush1.msra.mxu0 0.0
  %1452 = vmatprep.subr.mxu0 0.0
  %1453 = vmatpush1.msra.mxu0 0.0
  %1454 = vmatprep.subr.mxu0 0.0
  %1455 = vmatpush1.msra.mxu0 0.0
  %1456 = vmatprep.subr.mxu0 0.0
  %1457 = vmatpush1.msra.mxu0 0.0
  %1458 = vmatprep.subr.mxu0 0.0
  %1459 = vmatpush1.msra.mxu0 0.0
  %1460 = vmatprep.subr.mxu0 0.0
  %1461 = vmatpush1.msra.mxu0 0.0
  %1462 = vmatprep.subr.mxu0 0.0
  %1463 = vmatpush1.msra.mxu0 0.0
  %1464 = vmatprep.subr.mxu0 0.0
  %1465 = vmatpush1.msra.mxu0 0.0
  %1466 = vmatprep.subr.mxu0 0.0
  %1467 = vmatpush1.msra.mxu0 0.0
  %1468 = vmatprep.subr.mxu0 0.0
  %1469 = vmatpush1.msra.mxu0 0.0
  %1470 = vmatprep.subr.mxu0 0.0
  %1471 = vmatpush1.msra.mxu0 0.0
  %1472 = vmatprep.subr.mxu0 0.0
  %1473 = vmatpush1.msra.mxu0 0.0
  %1474 = vmatprep.mubr.f32.mxu0 0.0
  %1475 = vmatmul.mubr.f32.gmra.mrb[0].mxu0 %v1408
  %v1476 = vpop.f32.mrb[0].mxu0
  %v1477 = vadd.f32 0.0, %v1476
  %v1478 = vpop.f32.mrb[0].mxu0
  %1479 = vdwg.mxu0
  %v1481 = vsel %vm184, %v1477, 0
  %1483 = vmatprep.subr.mxu0 0.0
  %1484 = vmatpush1.msra.mxu0 %v1281
  %1485 = vmatprep.subr.mxu0 0.0
  %1486 = vmatpush1.msra.mxu0 %v1282
  %1487 = vmatprep.subr.mxu0 0.0
  %1488 = vmatpush1.msra.mxu0 %v1283
  %1489 = vmatprep.subr.mxu0 0.0
  %1490 = vmatpush1.msra.mxu0 %v1284
  %1491 = vmatprep.subr.mxu0 0.0
  %1492 = vmatpush1.msra.mxu0 0.0
  %1493 = vmatprep.subr.mxu0 0.0
  %1494 = vmatpush1.msra.mxu0 0.0
  %1495 = vmatprep.subr.mxu0 0.0
  %1496 = vmatpush1.msra.mxu0 0.0
  %1497 = vmatprep.subr.mxu0 0.0
  %1498 = vmatpush1.msra.mxu0 0.0
  %1499 = vmatprep.subr.mxu0 0.0
  %1500 = vmatpush1.msra.mxu0 0.0
  %1501 = vmatprep.subr.mxu0 0.0
  %1502 = vmatpush1.msra.mxu0 0.0
  %1503 = vmatprep.subr.mxu0 0.0
  %1504 = vmatpush1.msra.mxu0 0.0
  %1505 = vmatprep.subr.mxu0 0.0
  %1506 = vmatpush1.msra.mxu0 0.0
  %1507 = vmatprep.subr.mxu0 0.0
  %1508 = vmatpush1.msra.mxu0 0.0
  %1509 = vmatprep.subr.mxu0 0.0
  %1510 = vmatpush1.msra.mxu0 0.0
  %1511 = vmatprep.subr.mxu0 0.0
  %1512 = vmatpush1.msra.mxu0 0.0
  %1513 = vmatprep.subr.mxu0 0.0
  %1514 = vmatpush1.msra.mxu0 0.0
  %1515 = vmatprep.subr.mxu0 0.0
  %1516 = vmatpush1.msra.mxu0 0.0
  %1517 = vmatprep.subr.mxu0 0.0
  %1518 = vmatpush1.msra.mxu0 0.0
  %1519 = vmatprep.subr.mxu0 0.0
  %1520 = vmatpush1.msra.mxu0 0.0
  %1521 = vmatprep.subr.mxu0 0.0
  %1522 = vmatpush1.msra.mxu0 0.0
  %1523 = vmatprep.subr.mxu0 0.0
  %1524 = vmatpush1.msra.mxu0 0.0
  %1525 = vmatprep.subr.mxu0 0.0
  %1526 = vmatpush1.msra.mxu0 0.0
  %1527 = vmatprep.subr.mxu0 0.0
  %1528 = vmatpush1.msra.mxu0 0.0
  %1529 = vmatprep.subr.mxu0 0.0
  %1530 = vmatpush1.msra.mxu0 0.0
  %1531 = vmatprep.subr.mxu0 0.0
  %1532 = vmatpush1.msra.mxu0 0.0
  %1533 = vmatprep.subr.mxu0 0.0
  %1534 = vmatpush1.msra.mxu0 0.0
  %1535 = vmatprep.subr.mxu0 0.0
  %1536 = vmatpush1.msra.mxu0 0.0
  %1537 = vmatprep.subr.mxu0 0.0
  %1538 = vmatpush1.msra.mxu0 0.0
  %1539 = vmatprep.subr.mxu0 0.0
  %1540 = vmatpush1.msra.mxu0 0.0
  %1541 = vmatprep.subr.mxu0 0.0
  %1542 = vmatpush1.msra.mxu0 0.0
  %1543 = vmatprep.subr.mxu0 0.0
  %1544 = vmatpush1.msra.mxu0 0.0
  %1545 = vmatprep.subr.mxu0 0.0
  %1546 = vmatpush1.msra.mxu0 0.0
  %1547 = vmatprep.mubr.f32.mxu0 0.0
  %1548 = vmatmul.mubr.f32.gmra.mrb[0].mxu0 %v1481
  %v1549 = vpop.f32.mrb[0].mxu0
  %v1550 = vadd.f32 0.0, %v1549
  %v1551 = vpop.f32.mrb[0].mxu0
  %1552 = vdwg.mxu0
  %v1554 = vsel %vm184, %v1401, 0
  %1556 = vmatprep.subr.mxu0 0.0
  %1557 = vmatpush1.msra.mxu0 %v1277
  %1558 = vmatprep.subr.mxu0 0.0
  %1559 = vmatpush1.msra.mxu0 %v1278
  %1560 = vmatprep.subr.mxu0 0.0
  %1561 = vmatpush1.msra.mxu0 %v1279
  %1562 = vmatprep.subr.mxu0 0.0
  %1563 = vmatpush1.msra.mxu0 %v1280
  %1564 = vmatprep.subr.mxu0 0.0
  %1565 = vmatpush1.msra.mxu0 0.0
  %1566 = vmatprep.subr.mxu0 0.0
  %1567 = vmatpush1.msra.mxu0 0.0
  %1568 = vmatprep.subr.mxu0 0.0
  %1569 = vmatpush1.msra.mxu0 0.0
  %1570 = vmatprep.subr.mxu0 0.0
  %1571 = vmatpush1.msra.mxu0 0.0
  %1572 = vmatprep.subr.mxu0 0.0
  %1573 = vmatpush1.msra.mxu0 0.0
  %1574 = vmatprep.subr.mxu0 0.0
  %1575 = vmatpush1.msra.mxu0 0.0
  %1576 = vmatprep.subr.mxu0 0.0
  %1577 = vmatpush1.msra.mxu0 0.0
  %1578 = vmatprep.subr.mxu0 0.0
  %1579 = vmatpush1.msra.mxu0 0.0
  %1580 = vmatprep.subr.mxu0 0.0
  %1581 = vmatpush1.msra.mxu0 0.0
  %1582 = vmatprep.subr.mxu0 0.0
  %1583 = vmatpush1.msra.mxu0 0.0
  %1584 = vmatprep.subr.mxu0 0.0
  %1585 = vmatpush1.msra.mxu0 0.0
  %1586 = vmatprep.subr.mxu0 0.0
  %1587 = vmatpush1.msra.mxu0 0.0
  %1588 = vmatprep.subr.mxu0 0.0
  %1589 = vmatpush1.msra.mxu0 0.0
  %1590 = vmatprep.subr.mxu0 0.0
  %1591 = vmatpush1.msra.mxu0 0.0
  %1592 = vmatprep.subr.mxu0 0.0
  %1593 = vmatpush1.msra.mxu0 0.0
  %1594 = vmatprep.subr.mxu0 0.0
  %1595 = vmatpush1.msra.mxu0 0.0
  %1596 = vmatprep.subr.mxu0 0.0
  %1597 = vmatpush1.msra.mxu0 0.0
  %1598 = vmatprep.subr.mxu0 0.0
  %1599 = vmatpush1.msra.mxu0 0.0
  %1600 = vmatprep.subr.mxu0 0.0
  %1601 = vmatpush1.msra.mxu0 0.0
  %1602 = vmatprep.subr.mxu0 0.0
  %1603 = vmatpush1.msra.mxu0 0.0
  %1604 = vmatprep.subr.mxu0 0.0
  %1605 = vmatpush1.msra.mxu0 0.0
  %1606 = vmatprep.subr.mxu0 0.0
  %1607 = vmatpush1.msra.mxu0 0.0
  %1608 = vmatprep.subr.mxu0 0.0
  %1609 = vmatpush1.msra.mxu0 0.0
  %1610 = vmatprep.subr.mxu0 0.0
  %1611 = vmatpush1.msra.mxu0 0.0
  %1612 = vmatprep.subr.mxu0 0.0
  %1613 = vmatpush1.msra.mxu0 0.0
  %1614 = vmatprep.subr.mxu0 0.0
  %1615 = vmatpush1.msra.mxu0 0.0
  %1616 = vmatprep.subr.mxu0 0.0
  %1617 = vmatpush1.msra.mxu0 0.0
  %1618 = vmatprep.subr.mxu0 0.0
  %1619 = vmatpush1.msra.mxu0 0.0
  %1620 = vmatprep.mubr.f32.mxu0 0.0
  %1621 = vmatmul.mubr.f32.gmra.mrb[0].mxu0 %v1554
  %v1622 = vpop.f32.mrb[0].mxu0
  %v1623 = vadd.f32 %v1550, %v1622
  %v1624 = vpop.f32.mrb[0].mxu0
  %1625 = vdwg.mxu0
  %v1627 = vlaneseq
  %v1628 = vshrl.u32 %v1627, 7
  %v1629 = vsub.s32 0, %v1628
  %v1630 = vrot.slane %v1285, %v1629
  %v1632 = vadd.f32 %v1623, %v1630
  %v1633 = vld [vmem:[%s19] sm:$0x7f]
  %v1634 = vld [vmem:[%s20] sm:$0x1]
  %v1635 = vld [vmem:[%s21] sm:$0x1]
  %v1636 = vld [vmem:[%s22] sm:$0x1]
  %v1637 = vld [vmem:[%s23] sm:$0xff]
  %v1638 = vld [vmem:[%s23 + $0x8] sm:$0xff]
  %v1639 = vld [vmem:[%s23 + $0x10] sm:$0xff]
  %v1640 = vld [vmem:[%s23 + $0x18] sm:$0xff]
  %v1641 = vld [vmem:[%s23 + $0x20] sm:$0xff]
  %v1642 = vld [vmem:[%s23 + $0x28] sm:$0xff]
  %v1643 = vld [vmem:[%s23 + $0x30] sm:$0xff]
  %v1644 = vld [vmem:[%s23 + $0x38] sm:$0xff]
  %v1645 = vld [vmem:[%s23 + $0x40] sm:$0xff]
  %v1646 = vld [vmem:[%s23 + $0x48] sm:$0xff]
  %v1647 = vld [vmem:[%s23 + $0x50] sm:$0xff]
  %v1648 = vld [vmem:[%s23 + $0x58] sm:$0xff]
  %v1649 = vld [vmem:[%s23 + $0x60] sm:$0xff]
  %v1650 = vld [vmem:[%s23 + $0x68] sm:$0xff]
  %v1651 = vld [vmem:[%s23 + $0x70] sm:$0xff]
  %v1652 = vld [vmem:[%s23 + $0x78] sm:$0xff]
  %v1653 = vld [vmem:[%s24] sm:$0x3]
  %v1654 = vld [vmem:[%s25] sm:$0xff]
  %v1655 = vld [vmem:[%s25 + $0x8] sm:$0xff]
  %v1656 = vld [vmem:[%s25 + $0x10] sm:$0xff]
  %v1657 = vld [vmem:[%s25 + $0x18] sm:$0xff]
  %v1658 = vld [vmem:[%s25 + $0x20] sm:$0xff]
  %v1659 = vld [vmem:[%s25 + $0x28] sm:$0xff]
  %v1660 = vld [vmem:[%s25 + $0x30] sm:$0xff]
  %v1661 = vld [vmem:[%s25 + $0x38] sm:$0xff]
  %v1662 = vld [vmem:[%s25 + $0x40] sm:$0xff]
  %v1663 = vld [vmem:[%s25 + $0x48] sm:$0xff]
  %v1664 = vld [vmem:[%s25 + $0x50] sm:$0xff]
  %v1665 = vld [vmem:[%s25 + $0x58] sm:$0xff]
  %v1666 = vld [vmem:[%s25 + $0x60] sm:$0xff]
  %v1667 = vld [vmem:[%s25 + $0x68] sm:$0xff]
  %v1668 = vld [vmem:[%s25 + $0x70] sm:$0xff]
  %v1669 = vld [vmem:[%s25 + $0x78] sm:$0xff]
  %v1670 = vld [vmem:[%s25 + $0x80] sm:$0xff]
  %v1671 = vld [vmem:[%s25 + $0x88] sm:$0xff]
  %v1672 = vld [vmem:[%s25 + $0x90] sm:$0xff]
  %v1673 = vld [vmem:[%s25 + $0x98] sm:$0xff]
  %v1674 = vld [vmem:[%s25 + $0xa0] sm:$0xff]
  %v1675 = vld [vmem:[%s25 + $0xa8] sm:$0xff]
  %v1676 = vld [vmem:[%s25 + $0xb0] sm:$0xff]
  %v1677 = vld [vmem:[%s25 + $0xb8] sm:$0xff]
  %v1678 = vld [vmem:[%s25 + $0xc0] sm:$0xff]
  %v1679 = vld [vmem:[%s25 + $0xc8] sm:$0xff]
  %v1680 = vld [vmem:[%s25 + $0xd0] sm:$0xff]
  %v1681 = vld [vmem:[%s25 + $0xd8] sm:$0xff]
  %v1682 = vld [vmem:[%s25 + $0xe0] sm:$0xff]
  %v1683 = vld [vmem:[%s25 + $0xe8] sm:$0xff]
  %v1684 = vld [vmem:[%s25 + $0xf0] sm:$0xff]
  %v1685 = vld [vmem:[%s25 + $0xf8] sm:$0xff]
  %v1686 = vld [vmem:[%s26] sm:$0x1]
  %v1687 = vld [vmem:[%s27] sm:$0x1]
  %v1688 = vand.u32 %v256, 3
  %v1689 = vadd.s32 %v1688, 4294967293
  %vm1690 = vcmp.ge.s32.totalorder %v1689, 0
  %vm1691 = vmand %vm266, %vm1690
  %vm1692 = vcmp.lt.s32.totalorder %v1689, 4
  %vm1693 = vmand %vm1691, %vm1692
  %v1694 = vsel %vm1693, 1.0, 0.0
  %vm1695 = vcmask 64512
  %v1697 = vsel %vm1695, %v1694, 0
  %1699 = vmatprep.subr.mxu0 0.0
  %1700 = vmatpush1.msra.mxu0 %v1632
  %1701 = vmatprep.subr.mxu0 0.0
  %1702 = vmatpush1.msra.mxu0 0.0
  %1703 = vmatprep.subr.mxu0 0.0
  %1704 = vmatpush1.msra.mxu0 0.0
  %1705 = vmatprep.subr.mxu0 0.0
  %1706 = vmatpush1.msra.mxu0 0.0
  %1707 = vmatprep.subr.mxu0 0.0
  %1708 = vmatpush1.msra.mxu0 0.0
  %1709 = vmatprep.subr.mxu0 0.0
  %1710 = vmatpush1.msra.mxu0 0.0
  %1711 = vmatprep.subr.mxu0 0.0
  %1712 = vmatpush1.msra.mxu0 0.0
  %1713 = vmatprep.subr.mxu0 0.0
  %1714 = vmatpush1.msra.mxu0 0.0
  %1715 = vmatprep.subr.mxu0 0.0
  %1716 = vmatpush1.msra.mxu0 0.0
  %1717 = vmatprep.subr.mxu0 0.0
  %1718 = vmatpush1.msra.mxu0 0.0
  %1719 = vmatprep.subr.mxu0 0.0
  %1720 = vmatpush1.msra.mxu0 0.0
  %1721 = vmatprep.subr.mxu0 0.0
  %1722 = vmatpush1.msra.mxu0 0.0
  %1723 = vmatprep.subr.mxu0 0.0
  %1724 = vmatpush1.msra.mxu0 0.0
  %1725 = vmatprep.subr.mxu0 0.0
  %1726 = vmatpush1.msra.mxu0 0.0
  %1727 = vmatprep.subr.mxu0 0.0
  %1728 = vmatpush1.msra.mxu0 0.0
  %1729 = vmatprep.subr.mxu0 0.0
  %1730 = vmatpush1.msra.mxu0 0.0
  %1731 = vmatprep.subr.mxu0 0.0
  %1732 = vmatpush1.msra.mxu0 0.0
  %1733 = vmatprep.subr.mxu0 0.0
  %1734 = vmatpush1.msra.mxu0 0.0
  %1735 = vmatprep.subr.mxu0 0.0
  %1736 = vmatpush1.msra.mxu0 0.0
  %1737 = vmatprep.subr.mxu0 0.0
  %1738 = vmatpush1.msra.mxu0 0.0
  %1739 = vmatprep.subr.mxu0 0.0
  %1740 = vmatpush1.msra.mxu0 0.0
  %1741 = vmatprep.subr.mxu0 0.0
  %1742 = vmatpush1.msra.mxu0 0.0
  %1743 = vmatprep.subr.mxu0 0.0
  %1744 = vmatpush1.msra.mxu0 0.0
  %1745 = vmatprep.subr.mxu0 0.0
  %1746 = vmatpush1.msra.mxu0 0.0
  %1747 = vmatprep.subr.mxu0 0.0
  %1748 = vmatpush1.msra.mxu0 0.0
  %1749 = vmatprep.subr.mxu0 0.0
  %1750 = vmatpush1.msra.mxu0 0.0
  %1751 = vmatprep.subr.mxu0 0.0
  %1752 = vmatpush1.msra.mxu0 0.0
  %1753 = vmatprep.subr.mxu0 0.0
  %1754 = vmatpush1.msra.mxu0 0.0
  %1755 = vmatprep.subr.mxu0 0.0
  %1756 = vmatpush1.msra.mxu0 0.0
  %1757 = vmatprep.subr.mxu0 0.0
  %1758 = vmatpush1.msra.mxu0 0.0
  %1759 = vmatprep.subr.mxu0 0.0
  %1760 = vmatpush1.msra.mxu0 0.0
  %1761 = vmatprep.subr.mxu0 0.0
  %1762 = vmatpush1.msra.mxu0 0.0
  %1763 = vmatprep.mubr.f32.mxu0 0.0
  %1764 = vmatmul.mubr.f32.gmra.mrb[0].mxu0 %v1697
  %v1765 = vpop.f32.mrb[0].mxu0
  %v1766 = vadd.f32 0.0, %v1765
  %v1767 = vpop.f32.mrb[0].mxu0
  %1768 = vdwg.mxu0
  %v1769 = vlaneseq
  %v1770 = vshrl.u32 %v1769, 7
  %v1771 = vsub.s32 0, %v1770
  %v1772 = vrot.slane %v1633, %v1771
  %v1773 = vmul.f32 %v1766, %v1772
  %v1774 = vadd.f32 %v1773, 0.0
  %v1775 = vadd.s32 %v1688, 4294967294
  %vm1776 = vcmp.ge.s32.totalorder %v1775, 0
  %vm1777 = vmand %vm371, %vm1776
  %vm1778 = vcmp.lt.s32.totalorder %v1775, 4
  %vm1779 = vmand %vm1777, %vm1778
  %v1780 = vsel %vm1779, 1.0, 0.0
  %v1782 = vsel %vm1695, %v1780, 0
  %1784 = vmatprep.subr.mxu0 0.0
  %1785 = vmatpush1.msra.mxu0 %v1632
  %1786 = vmatprep.subr.mxu0 0.0
  %1787 = vmatpush1.msra.mxu0 0.0
  %1788 = vmatprep.subr.mxu0 0.0
  %1789 = vmatpush1.msra.mxu0 0.0
  %1790 = vmatprep.subr.mxu0 0.0
  %1791 = vmatpush1.msra.mxu0 0.0
  %1792 = vmatprep.subr.mxu0 0.0
  %1793 = vmatpush1.msra.mxu0 0.0
  %1794 = vmatprep.subr.mxu0 0.0
  %1795 = vmatpush1.msra.mxu0 0.0
  %1796 = vmatprep.subr.mxu0 0.0
  %1797 = vmatpush1.msra.mxu0 0.0
  %1798 = vmatprep.subr.mxu0 0.0
  %1799 = vmatpush1.msra.mxu0 0.0
  %1800 = vmatprep.subr.mxu0 0.0
  %1801 = vmatpush1.msra.mxu0 0.0
  %1802 = vmatprep.subr.mxu0 0.0
  %1803 = vmatpush1.msra.mxu0 0.0
  %1804 = vmatprep.subr.mxu0 0.0
  %1805 = vmatpush1.msra.mxu0 0.0
  %1806 = vmatprep.subr.mxu0 0.0
  %1807 = vmatpush1.msra.mxu0 0.0
  %1808 = vmatprep.subr.mxu0 0.0
  %1809 = vmatpush1.msra.mxu0 0.0
  %1810 = vmatprep.subr.mxu0 0.0
  %1811 = vmatpush1.msra.mxu0 0.0
  %1812 = vmatprep.subr.mxu0 0.0
  %1813 = vmatpush1.msra.mxu0 0.0
  %1814 = vmatprep.subr.mxu0 0.0
  %1815 = vmatpush1.msra.mxu0 0.0
  %1816 = vmatprep.subr.mxu0 0.0
  %1817 = vmatpush1.msra.mxu0 0.0
  %1818 = vmatprep.subr.mxu0 0.0
  %1819 = vmatpush1.msra.mxu0 0.0
  %1820 = vmatprep.subr.mxu0 0.0
  %1821 = vmatpush1.msra.mxu0 0.0
  %1822 = vmatprep.subr.mxu0 0.0
  %1823 = vmatpush1.msra.mxu0 0.0
  %1824 = vmatprep.subr.mxu0 0.0
  %1825 = vmatpush1.msra.mxu0 0.0
  %1826 = vmatprep.subr.mxu0 0.0
  %1827 = vmatpush1.msra.mxu0 0.0
  %1828 = vmatprep.subr.mxu0 0.0
  %1829 = vmatpush1.msra.mxu0 0.0
  %1830 = vmatprep.subr.mxu0 0.0
  %1831 = vmatpush1.msra.mxu0 0.0
  %1832 = vmatprep.subr.mxu0 0.0
  %1833 = vmatpush1.msra.mxu0 0.0
  %1834 = vmatprep.subr.mxu0 0.0
  %1835 = vmatpush1.msra.mxu0 0.0
  %1836 = vmatprep.subr.mxu0 0.0
  %1837 = vmatpush1.msra.mxu0 0.0
  %1838 = vmatprep.subr.mxu0 0.0
  %1839 = vmatpush1.msra.mxu0 0.0
  %1840 = vmatprep.subr.mxu0 0.0
  %1841 = vmatpush1.msra.mxu0 0.0
  %1842 = vmatprep.subr.mxu0 0.0
  %1843 = vmatpush1.msra.mxu0 0.0
  %1844 = vmatprep.subr.mxu0 0.0
  %1845 = vmatpush1.msra.mxu0 0.0
  %1846 = vmatprep.subr.mxu0 0.0
  %1847 = vmatpush1.msra.mxu0 0.0
  %1848 = vmatprep.mubr.f32.mxu0 0.0
  %1849 = vmatmul.mubr.f32.gmra.mrb[0].mxu0 %v1782
  %v1850 = vpop.f32.mrb[0].mxu0
  %v1851 = vadd.f32 0.0, %v1850
  %v1852 = vpop.f32.mrb[0].mxu0
  %1853 = vdwg.mxu0
  %v1854 = vlaneseq
  %v1855 = vshrl.u32 %v1854, 7
  %v1856 = vsub.s32 1, %v1855
  %v1857 = vrot.slane %v1633, %v1856
  %v1858 = vmul.f32 %v1851, %v1857
  %v1859 = vadd.f32 %v1774, %v1858
  %v1860 = vadd.s32 %v1688, 4294967295
  %vm1861 = vcmp.ge.s32.totalorder %v1860, 0
  %vm1862 = vmand %vm476, %vm1861
  %vm1863 = vcmp.lt.s32.totalorder %v1860, 4
  %vm1864 = vmand %vm1862, %vm1863
  %v1865 = vsel %vm1864, 1.0, 0.0
  %v1867 = vsel %vm1695, %v1865, 0
  %1869 = vmatprep.subr.mxu0 0.0
  %1870 = vmatpush1.msra.mxu0 %v1632
  %1871 = vmatprep.subr.mxu0 0.0
  %1872 = vmatpush1.msra.mxu0 0.0
  %1873 = vmatprep.subr.mxu0 0.0
  %1874 = vmatpush1.msra.mxu0 0.0
  %1875 = vmatprep.subr.mxu0 0.0
  %1876 = vmatpush1.msra.mxu0 0.0
  %1877 = vmatprep.subr.mxu0 0.0
  %1878 = vmatpush1.msra.mxu0 0.0
  %1879 = vmatprep.subr.mxu0 0.0
  %1880 = vmatpush1.msra.mxu0 0.0
  %1881 = vmatprep.subr.mxu0 0.0
  %1882 = vmatpush1.msra.mxu0 0.0
  %1883 = vmatprep.subr.mxu0 0.0
  %1884 = vmatpush1.msra.mxu0 0.0
  %1885 = vmatprep.subr.mxu0 0.0
  %1886 = vmatpush1.msra.mxu0 0.0
  %1887 = vmatprep.subr.mxu0 0.0
  %1888 = vmatpush1.msra.mxu0 0.0
  %1889 = vmatprep.subr.mxu0 0.0
  %1890 = vmatpush1.msra.mxu0 0.0
  %1891 = vmatprep.subr.mxu0 0.0
  %1892 = vmatpush1.msra.mxu0 0.0
  %1893 = vmatprep.subr.mxu0 0.0
  %1894 = vmatpush1.msra.mxu0 0.0
  %1895 = vmatprep.subr.mxu0 0.0
  %1896 = vmatpush1.msra.mxu0 0.0
  %1897 = vmatprep.subr.mxu0 0.0
  %1898 = vmatpush1.msra.mxu0 0.0
  %1899 = vmatprep.subr.mxu0 0.0
  %1900 = vmatpush1.msra.mxu0 0.0
  %1901 = vmatprep.subr.mxu0 0.0
  %1902 = vmatpush1.msra.mxu0 0.0
  %1903 = vmatprep.subr.mxu0 0.0
  %1904 = vmatpush1.msra.mxu0 0.0
  %1905 = vmatprep.subr.mxu0 0.0
  %1906 = vmatpush1.msra.mxu0 0.0
  %1907 = vmatprep.subr.mxu0 0.0
  %1908 = vmatpush1.msra.mxu0 0.0
  %1909 = vmatprep.subr.mxu0 0.0
  %1910 = vmatpush1.msra.mxu0 0.0
  %1911 = vmatprep.subr.mxu0 0.0
  %1912 = vmatpush1.msra.mxu0 0.0
  %1913 = vmatprep.subr.mxu0 0.0
  %1914 = vmatpush1.msra.mxu0 0.0
  %1915 = vmatprep.subr.mxu0 0.0
  %1916 = vmatpush1.msra.mxu0 0.0
  %1917 = vmatprep.subr.mxu0 0.0
  %1918 = vmatpush1.msra.mxu0 0.0
  %1919 = vmatprep.subr.mxu0 0.0
  %1920 = vmatpush1.msra.mxu0 0.0
  %1921 = vmatprep.subr.mxu0 0.0
  %1922 = vmatpush1.msra.mxu0 0.0
  %1923 = vmatprep.subr.mxu0 0.0
  %1924 = vmatpush1.msra.mxu0 0.0
  %1925 = vmatprep.subr.mxu0 0.0
  %1926 = vmatpush1.msra.mxu0 0.0
  %1927 = vmatprep.subr.mxu0 0.0
  %1928 = vmatpush1.msra.mxu0 0.0
  %1929 = vmatprep.subr.mxu0 0.0
  %1930 = vmatpush1.msra.mxu0 0.0
  %1931 = vmatprep.subr.mxu0 0.0
  %1932 = vmatpush1.msra.mxu0 0.0
  %1933 = vmatprep.mubr.f32.mxu0 0.0
  %1934 = vmatmul.mubr.f32.gmra.mrb[0].mxu0 %v1867
  %v1935 = vpop.f32.mrb[0].mxu0
  %v1936 = vadd.f32 0.0, %v1935
  %v1937 = vpop.f32.mrb[0].mxu0
  %1938 = vdwg.mxu0
  %v1939 = vlaneseq
  %v1940 = vshrl.u32 %v1939, 7
  %v1941 = vsub.s32 2, %v1940
  %v1942 = vrot.slane %v1633, %v1941
  %v1943 = vmul.f32 %v1936, %v1942
  %v1944 = vadd.f32 %v1859, %v1943
  %vm1945 = vcmp.ge.s32.totalorder %v1688, 0
  %vm1946 = vmand %vm577, %vm1945
  %vm1947 = vcmp.lt.s32.totalorder %v1688, 4
  %vm1948 = vmand %vm1946, %vm1947
  %v1949 = vsel %vm1948, 1.0, 0.0
  %v1951 = vsel %vm1695, %v1949, 0
  %1953 = vmatprep.subr.mxu0 0.0
  %1954 = vmatpush1.msra.mxu0 %v1632
  %1955 = vmatprep.subr.mxu0 0.0
  %1956 = vmatpush1.msra.mxu0 0.0
  %1957 = vmatprep.subr.mxu0 0.0
  %1958 = vmatpush1.msra.mxu0 0.0
  %1959 = vmatprep.subr.mxu0 0.0
  %1960 = vmatpush1.msra.mxu0 0.0
  %1961 = vmatprep.subr.mxu0 0.0
  %1962 = vmatpush1.msra.mxu0 0.0
  %1963 = vmatprep.subr.mxu0 0.0
  %1964 = vmatpush1.msra.mxu0 0.0
  %1965 = vmatprep.subr.mxu0 0.0
  %1966 = vmatpush1.msra.mxu0 0.0
  %1967 = vmatprep.subr.mxu0 0.0
  %1968 = vmatpush1.msra.mxu0 0.0
  %1969 = vmatprep.subr.mxu0 0.0
  %1970 = vmatpush1.msra.mxu0 0.0
  %1971 = vmatprep.subr.mxu0 0.0
  %1972 = vmatpush1.msra.mxu0 0.0
  %1973 = vmatprep.subr.mxu0 0.0
  %1974 = vmatpush1.msra.mxu0 0.0
  %1975 = vmatprep.subr.mxu0 0.0
  %1976 = vmatpush1.msra.mxu0 0.0
  %1977 = vmatprep.subr.mxu0 0.0
  %1978 = vmatpush1.msra.mxu0 0.0
  %1979 = vmatprep.subr.mxu0 0.0
  %1980 = vmatpush1.msra.mxu0 0.0
  %1981 = vmatprep.subr.mxu0 0.0
  %1982 = vmatpush1.msra.mxu0 0.0
  %1983 = vmatprep.subr.mxu0 0.0
  %1984 = vmatpush1.msra.mxu0 0.0
  %1985 = vmatprep.subr.mxu0 0.0
  %1986 = vmatpush1.msra.mxu0 0.0
  %1987 = vmatprep.subr.mxu0 0.0
  %1988 = vmatpush1.msra.mxu0 0.0
  %1989 = vmatprep.subr.mxu0 0.0
  %1990 = vmatpush1.msra.mxu0 0.0
  %1991 = vmatprep.subr.mxu0 0.0
  %1992 = vmatpush1.msra.mxu0 0.0
  %1993 = vmatprep.subr.mxu0 0.0
  %1994 = vmatpush1.msra.mxu0 0.0
  %1995 = vmatprep.subr.mxu0 0.0
  %1996 = vmatpush1.msra.mxu0 0.0
  %1997 = vmatprep.subr.mxu0 0.0
  %1998 = vmatpush1.msra.mxu0 0.0
  %1999 = vmatprep.subr.mxu0 0.0
  %2000 = vmatpush1.msra.mxu0 0.0
  %2001 = vmatprep.subr.mxu0 0.0
  %2002 = vmatpush1.msra.mxu0 0.0
  %2003 = vmatprep.subr.mxu0 0.0
  %2004 = vmatpush1.msra.mxu0 0.0
  %2005 = vmatprep.subr.mxu0 0.0
  %2006 = vmatpush1.msra.mxu0 0.0
  %2007 = vmatprep.subr.mxu0 0.0
  %2008 = vmatpush1.msra.mxu0 0.0
  %2009 = vmatprep.subr.mxu0 0.0
  %2010 = vmatpush1.msra.mxu0 0.0
  %2011 = vmatprep.subr.mxu0 0.0
  %2012 = vmatpush1.msra.mxu0 0.0
  %2013 = vmatprep.subr.mxu0 0.0
  %2014 = vmatpush1.msra.mxu0 0.0
  %2015 = vmatprep.subr.mxu0 0.0
  %2016 = vmatpush1.msra.mxu0 0.0
  %2017 = vmatprep.mubr.f32.mxu0 0.0
  %2018 = vmatmul.mubr.f32.gmra.mrb[0].mxu0 %v1951
  %v2019 = vpop.f32.mrb[0].mxu0
  %v2020 = vadd.f32 0.0, %v2019
  %v2021 = vpop.f32.mrb[0].mxu0
  %2022 = vdwg.mxu0
  %v2023 = vlaneseq
  %v2024 = vshrl.u32 %v2023, 7
  %v2025 = vsub.s32 3, %v2024
  %v2026 = vrot.slane %v1633, %v2025
  %v2027 = vmul.f32 %v2020, %v2026
  %v2028 = vadd.f32 %v1944, %v2027
  %v2029 = vadd.s32 %v1688, 1
  %vm2030 = vcmp.ge.s32.totalorder %v2029, 0
  %vm2031 = vmand %vm682, %vm2030
  %vm2032 = vcmp.lt.s32.totalorder %v2029, 4
  %vm2033 = vmand %vm2031, %vm2032
  %v2034 = vsel %vm2033, 1.0, 0.0
  %v2036 = vsel %vm1695, %v2034, 0
  %2038 = vmatprep.subr.mxu0 0.0
  %2039 = vmatpush1.msra.mxu0 %v1632
  %2040 = vmatprep.subr.mxu0 0.0
  %2041 = vmatpush1.msra.mxu0 0.0
  %2042 = vmatprep.subr.mxu0 0.0
  %2043 = vmatpush1.msra.mxu0 0.0
  %2044 = vmatprep.subr.mxu0 0.0
  %2045 = vmatpush1.msra.mxu0 0.0
  %2046 = vmatprep.subr.mxu0 0.0
  %2047 = vmatpush1.msra.mxu0 0.0
  %2048 = vmatprep.subr.mxu0 0.0
  %2049 = vmatpush1.msra.mxu0 0.0
  %2050 = vmatprep.subr.mxu0 0.0
  %2051 = vmatpush1.msra.mxu0 0.0
  %2052 = vmatprep.subr.mxu0 0.0
  %2053 = vmatpush1.msra.mxu0 0.0
  %2054 = vmatprep.subr.mxu0 0.0
  %2055 = vmatpush1.msra.mxu0 0.0
  %2056 = vmatprep.subr.mxu0 0.0
  %2057 = vmatpush1.msra.mxu0 0.0
  %2058 = vmatprep.subr.mxu0 0.0
  %2059 = vmatpush1.msra.mxu0 0.0
  %2060 = vmatprep.subr.mxu0 0.0
  %2061 = vmatpush1.msra.mxu0 0.0
  %2062 = vmatprep.subr.mxu0 0.0
  %2063 = vmatpush1.msra.mxu0 0.0
  %2064 = vmatprep.subr.mxu0 0.0
  %2065 = vmatpush1.msra.mxu0 0.0
  %2066 = vmatprep.subr.mxu0 0.0
  %2067 = vmatpush1.msra.mxu0 0.0
  %2068 = vmatprep.subr.mxu0 0.0
  %2069 = vmatpush1.msra.mxu0 0.0
  %2070 = vmatprep.subr.mxu0 0.0
  %2071 = vmatpush1.msra.mxu0 0.0
  %2072 = vmatprep.subr.mxu0 0.0
  %2073 = vmatpush1.msra.mxu0 0.0
  %2074 = vmatprep.subr.mxu0 0.0
  %2075 = vmatpush1.msra.mxu0 0.0
  %2076 = vmatprep.subr.mxu0 0.0
  %2077 = vmatpush1.msra.mxu0 0.0
  %2078 = vmatprep.subr.mxu0 0.0
  %2079 = vmatpush1.msra.mxu0 0.0
  %2080 = vmatprep.subr.mxu0 0.0
  %2081 = vmatpush1.msra.mxu0 0.0
  %2082 = vmatprep.subr.mxu0 0.0
  %2083 = vmatpush1.msra.mxu0 0.0
  %2084 = vmatprep.subr.mxu0 0.0
  %2085 = vmatpush1.msra.mxu0 0.0
  %2086 = vmatprep.subr.mxu0 0.0
  %2087 = vmatpush1.msra.mxu0 0.0
  %2088 = vmatprep.subr.mxu0 0.0
  %2089 = vmatpush1.msra.mxu0 0.0
  %2090 = vmatprep.subr.mxu0 0.0
  %2091 = vmatpush1.msra.mxu0 0.0
  %2092 = vmatprep.subr.mxu0 0.0
  %2093 = vmatpush1.msra.mxu0 0.0
  %2094 = vmatprep.subr.mxu0 0.0
  %2095 = vmatpush1.msra.mxu0 0.0
  %2096 = vmatprep.subr.mxu0 0.0
  %2097 = vmatpush1.msra.mxu0 0.0
  %2098 = vmatprep.subr.mxu0 0.0
  %2099 = vmatpush1.msra.mxu0 0.0
  %2100 = vmatprep.subr.mxu0 0.0
  %2101 = vmatpush1.msra.mxu0 0.0
  %2102 = vmatprep.mubr.f32.mxu0 0.0
  %2103 = vmatmul.mubr.f32.gmra.mrb[0].mxu0 %v2036
  %v2104 = vpop.f32.mrb[0].mxu0
  %v2105 = vadd.f32 0.0, %v2104
  %v2106 = vpop.f32.mrb[0].mxu0
  %2107 = vdwg.mxu0
  %v2108 = vlaneseq
  %v2109 = vshrl.u32 %v2108, 7
  %v2110 = vsub.s32 4, %v2109
  %v2111 = vrot.slane %v1633, %v2110
  %v2112 = vmul.f32 %v2105, %v2111
  %v2113 = vadd.f32 %v2028, %v2112
  %v2114 = vadd.s32 %v1688, 2
  %vm2115 = vcmp.ge.s32.totalorder %v2114, 0
  %vm2116 = vmand %vm787, %vm2115
  %vm2117 = vcmp.lt.s32.totalorder %v2114, 4
  %vm2118 = vmand %vm2116, %vm2117
  %v2119 = vsel %vm2118, 1.0, 0.0
  %v2121 = vsel %vm1695, %v2119, 0
  %2123 = vmatprep.subr.mxu0 0.0
  %2124 = vmatpush1.msra.mxu0 %v1632
  %2125 = vmatprep.subr.mxu0 0.0
  %2126 = vmatpush1.msra.mxu0 0.0
  %2127 = vmatprep.subr.mxu0 0.0
  %2128 = vmatpush1.msra.mxu0 0.0
  %2129 = vmatprep.subr.mxu0 0.0
  %2130 = vmatpush1.msra.mxu0 0.0
  %2131 = vmatprep.subr.mxu0 0.0
  %2132 = vmatpush1.msra.mxu0 0.0
  %2133 = vmatprep.subr.mxu0 0.0
  %2134 = vmatpush1.msra.mxu0 0.0
  %2135 = vmatprep.subr.mxu0 0.0
  %2136 = vmatpush1.msra.mxu0 0.0
  %2137 = vmatprep.subr.mxu0 0.0
  %2138 = vmatpush1.msra.mxu0 0.0
  %2139 = vmatprep.subr.mxu0 0.0
  %2140 = vmatpush1.msra.mxu0 0.0
  %2141 = vmatprep.subr.mxu0 0.0
  %2142 = vmatpush1.msra.mxu0 0.0
  %2143 = vmatprep.subr.mxu0 0.0
  %2144 = vmatpush1.msra.mxu0 0.0
  %2145 = vmatprep.subr.mxu0 0.0
  %2146 = vmatpush1.msra.mxu0 0.0
  %2147 = vmatprep.subr.mxu0 0.0
  %2148 = vmatpush1.msra.mxu0 0.0
  %2149 = vmatprep.subr.mxu0 0.0
  %2150 = vmatpush1.msra.mxu0 0.0
  %2151 = vmatprep.subr.mxu0 0.0
  %2152 = vmatpush1.msra.mxu0 0.0
  %2153 = vmatprep.subr.mxu0 0.0
  %2154 = vmatpush1.msra.mxu0 0.0
  %2155 = vmatprep.subr.mxu0 0.0
  %2156 = vmatpush1.msra.mxu0 0.0
  %2157 = vmatprep.subr.mxu0 0.0
  %2158 = vmatpush1.msra.mxu0 0.0
  %2159 = vmatprep.subr.mxu0 0.0
  %2160 = vmatpush1.msra.mxu0 0.0
  %2161 = vmatprep.subr.mxu0 0.0
  %2162 = vmatpush1.msra.mxu0 0.0
  %2163 = vmatprep.subr.mxu0 0.0
  %2164 = vmatpush1.msra.mxu0 0.0
  %2165 = vmatprep.subr.mxu0 0.0
  %2166 = vmatpush1.msra.mxu0 0.0
  %2167 = vmatprep.subr.mxu0 0.0
  %2168 = vmatpush1.msra.mxu0 0.0
  %2169 = vmatprep.subr.mxu0 0.0
  %2170 = vmatpush1.msra.mxu0 0.0
  %2171 = vmatprep.subr.mxu0 0.0
  %2172 = vmatpush1.msra.mxu0 0.0
  %2173 = vmatprep.subr.mxu0 0.0
  %2174 = vmatpush1.msra.mxu0 0.0
  %2175 = vmatprep.subr.mxu0 0.0
  %2176 = vmatpush1.msra.mxu0 0.0
  %2177 = vmatprep.subr.mxu0 0.0
  %2178 = vmatpush1.msra.mxu0 0.0
  %2179 = vmatprep.subr.mxu0 0.0
  %2180 = vmatpush1.msra.mxu0 0.0
  %2181 = vmatprep.subr.mxu0 0.0
  %2182 = vmatpush1.msra.mxu0 0.0
  %2183 = vmatprep.subr.mxu0 0.0
  %2184 = vmatpush1.msra.mxu0 0.0
  %2185 = vmatprep.subr.mxu0 0.0
  %2186 = vmatpush1.msra.mxu0 0.0
  %2187 = vmatprep.mubr.f32.mxu0 0.0
  %2188 = vmatmul.mubr.f32.gmra.mrb[0].mxu0 %v2121
  %v2189 = vpop.f32.mrb[0].mxu0
  %v2190 = vadd.f32 0.0, %v2189
  %v2191 = vpop.f32.mrb[0].mxu0
  %2192 = vdwg.mxu0
  %v2193 = vlaneseq
  %v2194 = vshrl.u32 %v2193, 7
  %v2195 = vsub.s32 5, %v2194
  %v2196 = vrot.slane %v1633, %v2195
  %v2197 = vmul.f32 %v2190, %v2196
  %v2198 = vadd.f32 %v2113, %v2197
  %v2199 = vadd.s32 %v1688, 3
  %vm2200 = vcmp.ge.s32.totalorder %v2199, 0
  %vm2201 = vmand %vm892, %vm2200
  %vm2202 = vcmp.lt.s32.totalorder %v2199, 4
  %vm2203 = vmand %vm2201, %vm2202
  %v2204 = vsel %vm2203, 1.0, 0.0
  %v2206 = vsel %vm1695, %v2204, 0
  %2208 = vmatprep.subr.mxu0 0.0
  %2209 = vmatpush1.msra.mxu0 %v1632
  %2210 = vmatprep.subr.mxu0 0.0
  %2211 = vmatpush1.msra.mxu0 0.0
  %2212 = vmatprep.subr.mxu0 0.0
  %2213 = vmatpush1.msra.mxu0 0.0
  %2214 = vmatprep.subr.mxu0 0.0
  %2215 = vmatpush1.msra.mxu0 0.0
  %2216 = vmatprep.subr.mxu0 0.0
  %2217 = vmatpush1.msra.mxu0 0.0
  %2218 = vmatprep.subr.mxu0 0.0
  %2219 = vmatpush1.msra.mxu0 0.0
  %2220 = vmatprep.subr.mxu0 0.0
  %2221 = vmatpush1.msra.mxu0 0.0
  %2222 = vmatprep.subr.mxu0 0.0
  %2223 = vmatpush1.msra.mxu0 0.0
  %2224 = vmatprep.subr.mxu0 0.0
  %2225 = vmatpush1.msra.mxu0 0.0
  %2226 = vmatprep.subr.mxu0 0.0
  %2227 = vmatpush1.msra.mxu0 0.0
  %2228 = vmatprep.subr.mxu0 0.0
  %2229 = vmatpush1.msra.mxu0 0.0
  %2230 = vmatprep.subr.mxu0 0.0
  %2231 = vmatpush1.msra.mxu0 0.0
  %2232 = vmatprep.subr.mxu0 0.0
  %2233 = vmatpush1.msra.mxu0 0.0
  %2234 = vmatprep.subr.mxu0 0.0
  %2235 = vmatpush1.msra.mxu0 0.0
  %2236 = vmatprep.subr.mxu0 0.0
  %2237 = vmatpush1.msra.mxu0 0.0
  %2238 = vmatprep.subr.mxu0 0.0
  %2239 = vmatpush1.msra.mxu0 0.0
  %2240 = vmatprep.subr.mxu0 0.0
  %2241 = vmatpush1.msra.mxu0 0.0
  %2242 = vmatprep.subr.mxu0 0.0
  %2243 = vmatpush1.msra.mxu0 0.0
  %2244 = vmatprep.subr.mxu0 0.0
  %2245 = vmatpush1.msra.mxu0 0.0
  %2246 = vmatprep.subr.mxu0 0.0
  %2247 = vmatpush1.msra.mxu0 0.0
  %2248 = vmatprep.subr.mxu0 0.0
  %2249 = vmatpush1.msra.mxu0 0.0
  %2250 = vmatprep.subr.mxu0 0.0
  %2251 = vmatpush1.msra.mxu0 0.0
  %2252 = vmatprep.subr.mxu0 0.0
  %2253 = vmatpush1.msra.mxu0 0.0
  %2254 = vmatprep.subr.mxu0 0.0
  %2255 = vmatpush1.msra.mxu0 0.0
  %2256 = vmatprep.subr.mxu0 0.0
  %2257 = vmatpush1.msra.mxu0 0.0
  %2258 = vmatprep.subr.mxu0 0.0
  %2259 = vmatpush1.msra.mxu0 0.0
  %2260 = vmatprep.subr.mxu0 0.0
  %2261 = vmatpush1.msra.mxu0 0.0
  %2262 = vmatprep.subr.mxu0 0.0
  %2263 = vmatpush1.msra.mxu0 0.0
  %2264 = vmatprep.subr.mxu0 0.0
  %2265 = vmatpush1.msra.mxu0 0.0
  %2266 = vmatprep.subr.mxu0 0.0
  %2267 = vmatpush1.msra.mxu0 0.0
  %2268 = vmatprep.subr.mxu0 0.0
  %2269 = vmatpush1.msra.mxu0 0.0
  %2270 = vmatprep.subr.mxu0 0.0
  %2271 = vmatpush1.msra.mxu0 0.0
  %2272 = vmatprep.mubr.f32.mxu0 0.0
  %2273 = vmatmul.mubr.f32.gmra.mrb[0].mxu0 %v2206
  %v2274 = vpop.f32.mrb[0].mxu0
  %v2275 = vadd.f32 0.0, %v2274
  %v2276 = vpop.f32.mrb[0].mxu0
  %2277 = vdwg.mxu0
  %v2278 = vlaneseq
  %v2279 = vshrl.u32 %v2278, 7
  %v2280 = vsub.s32 6, %v2279
  %v2281 = vrot.slane %v1633, %v2280
  %v2282 = vmul.f32 %v2275, %v2281
  %v2283 = vadd.f32 %v2198, %v2282
  %v2285 = vlaneseq
  %v2286 = vshrl.u32 %v2285, 7
  %v2287 = vsub.s32 0, %v2286
  %v2288 = vrot.slane %v1634, %v2287
  %v2290 = vadd.f32 %v2283, %v2288
  %vm2291 = vcmask 523264
  %v2292 = vsel %vm2291, %v2290, 0.0
  %2293 = vadd.xlane.f32.xlu0 %v2292
  %v2294 = vpop.xlane.xlu0 %2293
  %v2295 = vrcp.pop 64.0
  %v2296 = vmul.f32 %v2294, %v2295
  %v2297 = vsub.f32 %v2290, %v2296
  %v2298 = vmul.f32 %v2297, %v2297
  %v2299 = vsel %vm2291, %v2298, 0.0
  %2300 = vadd.xlane.f32.xlu0 %v2299
  %v2301 = vpop.xlane.xlu0 %2300
  %v2302 = vmul.f32 %v2301, %v2295
  %v2303 = vadd.f32 %v2302, 1e-06
  %v2304 = vrsqrt.pop %v2303
  %v2305 = vmul.f32 %v2297, %v2304
  %v2307 = vlaneseq
  %v2308 = vshrl.u32 %v2307, 7
  %v2309 = vsub.s32 0, %v2308
  %v2310 = vrot.slane %v1635, %v2309
  %v2312 = vmul.f32 %v2305, %v2310
  %v2314 = vlaneseq
  %v2315 = vshrl.u32 %v2314, 7
  %v2316 = vsub.s32 0, %v2315
  %v2317 = vrot.slane %v1636, %v2316
  %v2319 = vadd.f32 %v2312, %v2317
  %v2321 = vlaneseq
  %v2322 = vshrl.u32 %v2321, 7
  %v2323 = vsub.s32 0, %v2322
  %v2324 = vrot.slane %v1653, %v2323
  %v2325 = vlaneseq
  %v2326 = vshrl.u32 %v2325, 7
  %v2327 = vsub.s32 1, %v2326
  %v2328 = vrot.slane %v1653, %v2327
  %v2332 = vsel %vm2291, %v2319, 0
  %2334 = vmatprep.subr.mxu0 %v1638
  %2335 = vmatpush1.msra.mxu0 %v1637
  %2336 = vmatprep.subr.mxu0 %v1640
  %2337 = vmatpush1.msra.mxu0 %v1639
  %2338 = vmatprep.subr.mxu0 %v1642
  %2339 = vmatpush1.msra.mxu0 %v1641
  %2340 = vmatprep.subr.mxu0 %v1644
  %2341 = vmatpush1.msra.mxu0 %v1643
  %2342 = vmatprep.subr.mxu0 %v1646
  %2343 = vmatpush1.msra.mxu0 %v1645
  %2344 = vmatprep.subr.mxu0 %v1648
  %2345 = vmatpush1.msra.mxu0 %v1647
  %2346 = vmatprep.subr.mxu0 %v1650
  %2347 = vmatpush1.msra.mxu0 %v1649
  %2348 = vmatprep.subr.mxu0 %v1652
  %2349 = vmatpush1.msra.mxu0 %v1651
  %2350 = vmatprep.subr.mxu0 0.0
  %2351 = vmatpush1.msra.mxu0 0.0
  %2352 = vmatprep.subr.mxu0 0.0
  %2353 = vmatpush1.msra.mxu0 0.0
  %2354 = vmatprep.subr.mxu0 0.0
  %2355 = vmatpush1.msra.mxu0 0.0
  %2356 = vmatprep.subr.mxu0 0.0
  %2357 = vmatpush1.msra.mxu0 0.0
  %2358 = vmatprep.subr.mxu0 0.0
  %2359 = vmatpush1.msra.mxu0 0.0
  %2360 = vmatprep.subr.mxu0 0.0
  %2361 = vmatpush1.msra.mxu0 0.0
  %2362 = vmatprep.subr.mxu0 0.0
  %2363 = vmatpush1.msra.mxu0 0.0
  %2364 = vmatprep.subr.mxu0 0.0
  %2365 = vmatpush1.msra.mxu0 0.0
  %2366 = vmatprep.subr.mxu0 0.0
  %2367 = vmatpush1.msra.mxu0 0.0
  %2368 = vmatprep.subr.mxu0 0.0
  %2369 = vmatpush1.msra.mxu0 0.0
  %2370 = vmatprep.subr.mxu0 0.0
  %2371 = vmatpush1.msra.mxu0 0.0
  %2372 = vmatprep.subr.mxu0 0.0
  %2373 = vmatpush1.msra.mxu0 0.0
  %2374 = vmatprep.subr.mxu0 0.0
  %2375 = vmatpush1.msra.mxu0 0.0
  %2376 = vmatprep.subr.mxu0 0.0
  %2377 = vmatpush1.msra.mxu0 0.0
  %2378 = vmatprep.subr.mxu0 0.0
  %2379 = vmatpush1.msra.mxu0 0.0
  %2380 = vmatprep.subr.mxu0 0.0
  %2381 = vmatpush1.msra.mxu0 0.0
  %2382 = vmatprep.subr.mxu0 0.0
  %2383 = vmatpush1.msra.mxu0 0.0
  %2384 = vmatprep.subr.mxu0 0.0
  %2385 = vmatpush1.msra.mxu0 0.0
  %2386 = vmatprep.subr.mxu0 0.0
  %2387 = vmatpush1.msra.mxu0 0.0
  %2388 = vmatprep.subr.mxu0 0.0
  %2389 = vmatpush1.msra.mxu0 0.0
  %2390 = vmatprep.subr.mxu0 0.0
  %2391 = vmatpush1.msra.mxu0 0.0
  %2392 = vmatprep.subr.mxu0 0.0
  %2393 = vmatpush1.msra.mxu0 0.0
  %2394 = vmatprep.subr.mxu0 0.0
  %2395 = vmatpush1.msra.mxu0 0.0
  %2396 = vmatprep.subr.mxu0 0.0
  %2397 = vmatpush1.msra.mxu0 0.0
  %2398 = vmatprep.mubr.f32.mxu0 0.0
  %2399 = vmatmul.mubr.f32.gmra.mrb[0].mxu0 %v2332
  %v2400 = vpop.f32.mrb[0].mxu0
  %v2401 = vadd.f32 %v2324, %v2400
  %v2402 = vpop.f32.mrb[0].mxu0
  %v2403 = vadd.f32 %v2328, %v2402
  %2404 = vdwg.mxu0
  %v2405 = vmul.f32 %v2401, 0.5
  %v2406 = vmul.f32 %v2403, 0.5
  %v2407 = vmul.f32 %v2401, 0.70710677
  %v2408 = vmul.f32 %v2403, 0.70710677
  %v2409 = vand.u32 2147483647, %v2407
  %v2410 = vand.u32 2147483647, %v2408
  %v2411 = vmul.f32 %v2409, 0.3275911
  %v2412 = vmul.f32 %v2410, 0.3275911
  %v2413 = vadd.f32 %v2411, 1.0
  %v2414 = vadd.f32 %v2412, 1.0
  %v2415 = vrcp.pop %v2413
  %v2416 = vmul.f32 1.0, %v2415
  %v2417 = vrcp.pop %v2414
  %v2418 = vmul.f32 1.0, %v2417
  %v2419 = vmul.f32 %v2416, 1.0614054
  %v2420 = vmul.f32 %v2418, 1.0614054
  %v2421 = vadd.f32 %v2419, -1.4531521
  %v2422 = vadd.f32 %v2420, -1.4531521
  %v2423 = vmul.f32 %v2416, %v2421
  %v2424 = vmul.f32 %v2418, %v2422
  %v2425 = vadd.f32 %v2423, 1.4214138
  %v2426 = vadd.f32 %v2424, 1.4214138
  %v2427 = vmul.f32 %v2416, %v2425
  %v2428 = vmul.f32 %v2418, %v2426
  %v2429 = vadd.f32 %v2427, -0.28449672
  %v2430 = vadd.f32 %v2428, -0.28449672
  %v2431 = vmul.f32 %v2416, %v2429
  %v2432 = vmul.f32 %v2418, %v2430
  %v2433 = vadd.f32 %v2431, 0.2548296
  %v2434 = vadd.f32 %v2432, 0.2548296
  %v2435 = vmul.f32 %v2416, %v2433
  %v2436 = vmul.f32 %v2418, %v2434
  %v2437 = vsub.f32 0.0, %v2407
  %v2438 = vsub.f32 0.0, %v2408
  %v2439 = vmul.f32 %v2437, %v2407
  %v2440 = vmul.f32 %v2438, %v2408
  %v2441 = vmul.f32 %v2439, 1.442695
  %v2442 = vpow.pop %v2441
  %v2443 = vmul.f32 %v2440, 1.442695
  %v2444 = vpow.pop %v2443
  %v2445 = vmul.f32 %v2435, %v2442
  %v2446 = vmul.f32 %v2436, %v2444
  %v2447 = vsub.f32 1.0, %v2445
  %v2448 = vsub.f32 1.0, %v2446
  %vm2449 = vcmp.ge.f32.partialorder %v2407, 0.0
  %vm2450 = vcmp.ge.f32.partialorder %v2408, 0.0
  %v2451 = vsub.f32 0.0, %v2447
  %v2452 = vsub.f32 0.0, %v2448
  %v2453 = vsel %vm2449, %v2447, %v2451
  %v2454 = vsel %vm2450, %v2448, %v2452
  %v2455 = vadd.f32 %v2453, 1.0
  %v2456 = vadd.f32 %v2454, 1.0
  %v2457 = vmul.f32 %v2405, %v2455
  %v2458 = vmul.f32 %v2406, %v2456
  %v2460 = vlaneseq
  %v2461 = vshrl.u32 %v2460, 7
  %v2462 = vsub.s32 0, %v2461
  %v2463 = vrot.slane %v1686, %v2462
  %2465 = vmatprep.subr.mxu0 0.0
  %2466 = vmatpush1.msra.mxu0 %v1654
  %2467 = vmatprep.subr.mxu0 0.0
  %2468 = vmatpush1.msra.mxu0 %v1655
  %2469 = vmatprep.subr.mxu0 0.0
  %2470 = vmatpush1.msra.mxu0 %v1656
  %2471 = vmatprep.subr.mxu0 0.0
  %2472 = vmatpush1.msra.mxu0 %v1657
  %2473 = vmatprep.subr.mxu0 0.0
  %2474 = vmatpush1.msra.mxu0 %v1658
  %2475 = vmatprep.subr.mxu0 0.0
  %2476 = vmatpush1.msra.mxu0 %v1659
  %2477 = vmatprep.subr.mxu0 0.0
  %2478 = vmatpush1.msra.mxu0 %v1660
  %2479 = vmatprep.subr.mxu0 0.0
  %2480 = vmatpush1.msra.mxu0 %v1661
  %2481 = vmatprep.subr.mxu0 0.0
  %2482 = vmatpush1.msra.mxu0 %v1662
  %2483 = vmatprep.subr.mxu0 0.0
  %2484 = vmatpush1.msra.mxu0 %v1663
  %2485 = vmatprep.subr.mxu0 0.0
  %2486 = vmatpush1.msra.mxu0 %v1664
  %2487 = vmatprep.subr.mxu0 0.0
  %2488 = vmatpush1.msra.mxu0 %v1665
  %2489 = vmatprep.subr.mxu0 0.0
  %2490 = vmatpush1.msra.mxu0 %v1666
  %2491 = vmatprep.subr.mxu0 0.0
  %2492 = vmatpush1.msra.mxu0 %v1667
  %2493 = vmatprep.subr.mxu0 0.0
  %2494 = vmatpush1.msra.mxu0 %v1668
  %2495 = vmatprep.subr.mxu0 0.0
  %2496 = vmatpush1.msra.mxu0 %v1669
  %2497 = vmatprep.subr.mxu0 0.0
  %2498 = vmatpush1.msra.mxu0 %v1670
  %2499 = vmatprep.subr.mxu0 0.0
  %2500 = vmatpush1.msra.mxu0 %v1671
  %2501 = vmatprep.subr.mxu0 0.0
  %2502 = vmatpush1.msra.mxu0 %v1672
  %2503 = vmatprep.subr.mxu0 0.0
  %2504 = vmatpush1.msra.mxu0 %v1673
  %2505 = vmatprep.subr.mxu0 0.0
  %2506 = vmatpush1.msra.mxu0 %v1674
  %2507 = vmatprep.subr.mxu0 0.0
  %2508 = vmatpush1.msra.mxu0 %v1675
  %2509 = vmatprep.subr.mxu0 0.0
  %2510 = vmatpush1.msra.mxu0 %v1676
  %2511 = vmatprep.subr.mxu0 0.0
  %2512 = vmatpush1.msra.mxu0 %v1677
  %2513 = vmatprep.subr.mxu0 0.0
  %2514 = vmatpush1.msra.mxu0 %v1678
  %2515 = vmatprep.subr.mxu0 0.0
  %2516 = vmatpush1.msra.mxu0 %v1679
  %2517 = vmatprep.subr.mxu0 0.0
  %2518 = vmatpush1.msra.mxu0 %v1680
  %2519 = vmatprep.subr.mxu0 0.0
  %2520 = vmatpush1.msra.mxu0 %v1681
  %2521 = vmatprep.subr.mxu0 0.0
  %2522 = vmatpush1.msra.mxu0 %v1682
  %2523 = vmatprep.subr.mxu0 0.0
  %2524 = vmatpush1.msra.mxu0 %v1683
  %2525 = vmatprep.subr.mxu0 0.0
  %2526 = vmatpush1.msra.mxu0 %v1684
  %2527 = vmatprep.subr.mxu0 0.0
  %2528 = vmatpush1.msra.mxu0 %v1685
  %2529 = vmatprep.mubr.f32.mxu0 %v2458
  %2530 = vmatmul.mubr.f32.gmra.mrb[0].mxu0 %v2457
  %v2531 = vpop.f32.mrb[0].mxu0
  %v2532 = vadd.f32 %v2463, %v2531
  %v2533 = vpop.f32.mrb[0].mxu0
  %2534 = vdwg.mxu0
  %v2536 = vlaneseq
  %v2537 = vshrl.u32 %v2536, 7
  %v2538 = vsub.s32 0, %v2537
  %v2539 = vrot.slane %v1687, %v2538
  %v2541 = vmul.f32 %v2539, %v2532
  %v2542 = vadd.f32 %v1632, %v2541
  %v2543 = vsel %vm2291, %v2542, 0.0
  %2544 = vadd.xlane.f32.xlu0 %v2543
  %v2545 = vpop.xlane.xlu0 %2544
  %v2546 = vmul.f32 %v2545, %v2295
  %vm2547 = vcmask 7168
  %2548 = vst.msk [vmem:[%s28] sm:$0xff] %vm2547, %v2546
  // Predicated region
  $region114: #{hscmae_forward.1} parent=0 // pred_check
    _
  $region115: #{hscmae_forward.1} parent=0 // pred_check_branch
    %2550 = sbr.rel (0) target = $region117
  $region116: #{hscmae_forward.1} parent=0 // pred_region
    _
  $region117: #{hscmae_forward.1} parent=0 // pred_fallthru
    _
  // Predicated region
  $region118: #{hscmae_forward.1} parent=0 // pred_check
    _
  $region119: #{hscmae_forward.1} parent=0 // pred_check_branch
    %2552 = sbr.rel (0) target = $region121
  $region120: #{hscmae_forward.1} parent=0 // pred_region
    _
  $region121: #{hscmae_forward.1} parent=0 // pred_fallthru
    _

</llo_original>
